<compile_context>
chip_gen: v7x
topology: tpu7x:2x2x1
jax: 0.10.0
libtpu: 0.0.40
codegen_flags: <defaults>
</compile_context>

<pallas_src>
import functools

import jax
import jax.numpy as jnp
from jax import lax
from jax.experimental import pallas as pl
from jax.experimental.pallas import tpu as pltpu


def _round_up(x, m):
    return (x + m - 1) // m * m


# ----------------------------------------------------------------------------
# Fused conv + folded-BN (+ residual) (+ ReLU) kernel
# ----------------------------------------------------------------------------
def _fused_conv_kernel(*refs, taps, cin, ho, wo, relu, out_halo,
                       has_residual, res_off):
    if has_residual:
        x_ref, w_ref, b_ref, r_ref, o_ref = refs
    else:
        x_ref, w_ref, b_ref, o_ref = refs

    # Accumulate the k*k conv taps as unrolled MXU matmuls (f32 accumulation).
    acc = None
    for widx, hoff, woff, coff in taps:
        xw = x_ref[:, hoff:hoff + ho, woff:woff + wo, coff:coff + cin]
        xw = xw.reshape(ho * wo, cin)
        part = jnp.dot(xw, w_ref[widx], preferred_element_type=jnp.float32)
        acc = part if acc is None else acc + part

    # Folded BN bias (+ residual) (+ ReLU) epilogue, all fused in-kernel.
    y = acc + b_ref[...]                                  # (1, tn) broadcast
    if has_residual:
        res = r_ref[:, res_off:res_off + ho, res_off:res_off + wo, :]
        y = y + res.reshape(ho * wo, -1).astype(jnp.float32)
    if relu:
        y = jnp.maximum(y, 0.0)
    y = y.astype(o_ref.dtype)

    tn = o_ref.shape[-1]
    if out_halo:
        # Emit a zero spatial halo so the next conv consumes this output
        # directly (no XLA pad pass between conv1 and conv2).
        o_ref[...] = jnp.zeros(o_ref.shape, o_ref.dtype)
        o_ref[:, 1:1 + ho, 1:1 + wo, :] = y.reshape(1, ho, wo, tn)
    else:
        o_ref[...] = y.reshape(o_ref.shape)


# ----------------------------------------------------------------------------
# pallas_call wrapper
# ----------------------------------------------------------------------------
def _make_taps(ksize, stride, delta, cin_pad):
    """Static (weight_idx, h_off, w_off, chan_off) per tap, for a stride-phase
    input layout.  `delta = pad_of_shared_input - pad_of_this_conv`."""
    taps = []
    for kh in range(ksize):
        for kw in range(ksize):
            rh, rw = kh + delta, kw + delta
            phase = (rh % stride) * stride + (rw % stride)
            taps.append((kh * ksize + kw, rh // stride, rw // stride,
                         phase * cin_pad))
    return tuple(taps)


def _cout_tile(cout_pad, n_batch):
    tn = cout_pad
    if tn > 512:                               # single Cout tile up to 512
        tn = 256 if cout_pad % 256 == 0 else 128
    # v7x megacore: ensure >=2 "parallel" grid tiles even when N == 1.
    if n_batch == 1 and cout_pad // tn == 1 and cout_pad % 256 == 0:
        tn //= 2
    return tn


def _fused_conv(x_in, w, b, *, ksize, stride, delta, cin_pad, ho, wo,
                residual=None, res_off=0, relu, out_dtype, out_halo):
    """out = relu?( conv_{ksize,stride}(x) [BN folded into w,b] [+ residual] )."""
    n, hs, ws, ceff = x_in.shape
    cout_pad = w.shape[-1]
    tn = _cout_tile(cout_pad, n)
    taps = _make_taps(ksize, stride, delta, cin_pad)
    oh = ho + 2 if out_halo else ho
    ow = wo + 2 if out_halo else wo

    in_specs = [
        # Whole padded image per batch element; stays resident while the Cout
        # grid axis (innermost) iterates, so it is DMA'd from HBM exactly once.
        pl.BlockSpec((1, hs, ws, ceff), lambda i, j: (i, 0, 0, 0)),
        pl.BlockSpec((ksize * ksize, cin_pad, tn), lambda i, j: (0, 0, j)),
        pl.BlockSpec((1, tn), lambda i, j: (0, j)),
    ]
    args = [x_in, w, b]
    r_bytes = 0
    if residual is not None:
        hr, wr = residual.shape[1], residual.shape[2]
        in_specs.append(pl.BlockSpec((1, hr, wr, tn),
                                     lambda i, j: (i, 0, 0, j)))
        args.append(residual)
        r_bytes = hr * wr * tn * residual.dtype.itemsize

    out_itemsize = jnp.dtype(out_dtype).itemsize
    x_bytes = hs * ws * ceff * 2
    w_bytes = ksize * ksize * cin_pad * tn * 2
    o_bytes = oh * ow * tn * out_itemsize
    tmp_bytes = ho * wo * (tn * 4 + cin_pad * 2)       # acc + one tap window
    need = 2 * (x_bytes + w_bytes + tn * 4 + r_bytes + o_bytes) + 2 * tmp_bytes
    # ~2x the computed need (review item), floor 16 MiB, capped for v7x (64 MiB).
    vmem_limit = int(min(max(2 * need, 16 * 1024 * 1024), 64 * 1024 * 1024))

    flops = 2 * n * ho * wo * ksize * ksize * cin_pad * cout_pad
    bytes_accessed = (x_in.size * 2 + w.size * 2 + b.size * 4
                      + (residual.size * 2 if residual is not None else 0)
                      + n * oh * ow * cout_pad * out_itemsize)

    kernel = functools.partial(
        _fused_conv_kernel, taps=taps, cin=cin_pad, ho=ho, wo=wo, relu=relu,
        out_halo=out_halo, has_residual=residual is not None, res_off=res_off)

    return pl.pallas_call(
        kernel,
        out_shape=jax.ShapeDtypeStruct((n, oh, ow, cout_pad), out_dtype),
        grid_spec=pltpu.PrefetchScalarGridSpec(
            num_scalar_prefetch=0,
            grid=(n, cout_pad // tn),
            in_specs=in_specs,
            out_specs=pl.BlockSpec((1, oh, ow, tn), lambda i, j: (i, 0, 0, j)),
        ),
        compiler_params=pltpu.CompilerParams(
            dimension_semantics=("parallel", "parallel"),
            vmem_limit_bytes=vmem_limit,
        ),
        cost_estimate=pl.CostEstimate(
            flops=flops, transcendentals=0, bytes_accessed=bytes_accessed),
    )(*args)


# ----------------------------------------------------------------------------
# Host/XLA-side glue: layout, padding, phase split, BN folding
# ----------------------------------------------------------------------------
def _phase_split(xp, stride):
    """(N,Hp,Wp,C) zero-padded NHWC -> stride-phase-major layout so every conv
    tap becomes an UNstrided static slice in the kernel.  Identity for s==1."""
    if stride == 1:
        return xp
    n, hp, wp, c = xp.shape
    hp2, wp2 = _round_up(hp, stride), _round_up(wp, stride)
    xp = jnp.pad(xp, ((0, 0), (0, hp2 - hp), (0, wp2 - wp), (0, 0)))
    x = xp.reshape(n, hp2 // stride, stride, wp2 // stride, stride, c)
    x = jnp.transpose(x, (0, 1, 3, 2, 4, 5))
    return x.reshape(n, hp2 // stride, wp2 // stride, stride * stride * c)


def _fold_bn(gamma, beta, mean, var, eps=1e-5):
    scale = gamma / jnp.sqrt(var + eps)
    return scale, beta - mean * scale


def _prep_weight(w_oihw, bn_scale, cin_pad, cout_pad):
    # (Cout,Cin,KH,KW) -> (KH*KW, Cin_pad, Cout_pad) bf16 with BN scale folded.
    cout, cin, kh, kw = w_oihw.shape
    w = w_oihw * bn_scale[:, None, None, None]
    w = jnp.transpose(w, (2, 3, 1, 0)).reshape(kh * kw, cin, cout)
    w = jnp.pad(w, ((0, 0), (0, cin_pad - cin), (0, cout_pad - cout)))
    return w.astype(jnp.bfloat16)


def _prep_bias(bias, cout_pad):
    c = bias.shape[0]
    return jnp.pad(bias.reshape(1, c).astype(jnp.float32),
                   ((0, 0), (0, cout_pad - c)))


# ----------------------------------------------------------------------------
# BasicBlock forward (Pallas-backed)
# ----------------------------------------------------------------------------
def basic_block_forward(x_nchw, params, *, stride):
    n, cin, h, w = x_nchw.shape
    planes = params["w1"].shape[0]
    conv_k = params["w1"].shape[2]
    pad = conv_k // 2
    cin_pad = _round_up(cin, 128)
    cpl = _round_up(planes, 128)

    ho = (h + 2 * pad - conv_k) // stride + 1
    wo = (w + 2 * pad - conv_k) // stride + 1

    s1, b1 = _fold_bn(*params["bn1"])
    s2, b2 = _fold_bn(*params["bn2"])

    # Entry layout pass (NCHW->NHWC, bf16 cast, channel pad to 128, spatial
    # zero pad, phase-split for stride>1) fuses into one XLA pass over the
    # *smallest* tensor of the block and is shared by conv1 and the shortcut.
    # TODO(synk): keep the whole network NHWC/channel-padded to drop this pass.
    x = jnp.transpose(x_nchw, (0, 2, 3, 1)).astype(jnp.bfloat16)
    xp = jnp.pad(x, ((0, 0), (pad, pad), (pad, pad), (0, cin_pad - cin)))
    x_in = _phase_split(xp, stride)

    # conv1 + BN1 + ReLU -> bf16, emitted WITH a zero spatial halo so conv2
    # reads it directly from HBM (no pad pass, channel padding kept end-to-end).
    out1p = _fused_conv(
        x_in, _prep_weight(params["w1"], s1, cin_pad, cpl),
        _prep_bias(b1, cpl),
        ksize=conv_k, stride=stride, delta=0, cin_pad=cin_pad, ho=ho, wo=wo,
        relu=True, out_dtype=jnp.bfloat16, out_halo=True)

    # Shortcut: projection conv (1x1, stride) + BN, or identity.  Carried bf16.
    if "w_sc" in params:
        s_sc, b_sc = _fold_bn(*params["bn_sc"])
        sck = params["w_sc"].shape[2]
        assert pad - sck // 2 >= 0, "shortcut kernel larger than conv kernel"
        res = _fused_conv(
            x_in, _prep_weight(params["w_sc"], s_sc, cin_pad, cpl),
            _prep_bias(b_sc, cpl),
            ksize=sck, stride=stride, delta=pad - sck // 2, cin_pad=cin_pad,
            ho=ho, wo=wo, relu=False, out_dtype=jnp.bfloat16, out_halo=False)
        res_off = 0
    else:
        # Identity shortcut: reuse the already padded bf16 block input; the
        # kernel slices its interior (offset = pad).
        res, res_off = xp, pad

    # conv2 + BN2 + residual add + final ReLU -> f32 block output.
    out = _fused_conv(
        out1p, _prep_weight(params["w2"], s2, cpl, cpl), _prep_bias(b2, cpl),
        ksize=conv_k, stride=1, delta=0, cin_pad=cpl, ho=ho, wo=wo,
        residual=res, res_off=res_off, relu=True,
        out_dtype=x_nchw.dtype, out_halo=False)

    # Dropout: eval mode -> identity (see TODO at top of file).
    # Exit pass: strip channel padding + NHWC->NCHW (one fused XLA pass).
    return jnp.transpose(out[..., :planes], (0, 3, 1, 2))


# ----------------------------------------------------------------------------
# Pure-JAX reference (correctness check only)
# ----------------------------------------------------------------------------
def _ref_conv(x_nhwc, w_oihw, stride):
    w = jnp.transpose(w_oihw, (2, 3, 1, 0))  # HWIO
    pad = w_oihw.shape[2] // 2
    return lax.conv_general_dilated(
        x_nhwc, w, (stride, stride), ((pad, pad), (pad, pad)),
        dimension_numbers=("NHWC", "HWIO", "NHWC"),
        precision=lax.Precision.HIGHEST)


def ref_basic_block(x_nchw, params, *, stride):
    x = jnp.transpose(x_nchw, (0, 2, 3, 1))
    s1, b1 = _fold_bn(*params["bn1"])
    s2, b2 = _fold_bn(*params["bn2"])
    out = jnp.maximum(_ref_conv(x, params["w1"], stride) * s1 + b1, 0.0)
    out = _ref_conv(out, params["w2"], 1) * s2 + b2
    if "w_sc" in params:
        s_sc, b_sc = _fold_bn(*params["bn_sc"])
        sc = _ref_conv(x, params["w_sc"], stride) * s_sc + b_sc
    else:
        sc = x
    return jnp.transpose(jnp.maximum(out + sc, 0.0), (0, 3, 1, 2))


# ----------------------------------------------------------------------------
# Deterministic parameter init + run
# ----------------------------------------------------------------------------
def init_params(key, in_planes, planes, stride, conv_k=3, shortcut_k=1):
    ks = jax.random.split(key, 8)

    def bn_params(k, c):
        k1, k2, k3, k4 = jax.random.split(k, 4)
        gamma = 1.0 + 0.1 * jax.random.normal(k1, (c,), jnp.float32)
        beta = 0.1 * jax.random.normal(k2, (c,), jnp.float32)
        mean = 0.1 * jax.random.normal(k3, (c,), jnp.float32)
        var = jax.random.uniform(k4, (c,), jnp.float32, 0.5, 1.5)
        return (gamma, beta, mean, var)

    params = {
        "w1": 0.1 * jax.random.normal(
            ks[0], (planes, in_planes, conv_k, conv_k), jnp.float32),
        "bn1": bn_params(ks[1], planes),
        "w2": 0.1 * jax.random.normal(
            ks[2], (planes, planes, conv_k, conv_k), jnp.float32),
        "bn2": bn_params(ks[3], planes),
    }
    if stride != 1 or in_planes != planes:
        params["w_sc"] = 0.1 * jax.random.normal(
            ks[4], (planes, in_planes, shortcut_k, shortcut_k), jnp.float32)
        params["bn_sc"] = bn_params(ks[5], planes)
    return params


if __name__ == "__main__":
    key = jax.random.PRNGKey(0)
    k_x, k_p = jax.random.split(key)

    N, in_planes, planes, H, W, stride = 2, 4, 8, 16, 16, 2
    x = jax.random.normal(k_x, (N, in_planes, H, W), jnp.float32)
    params = init_params(k_p, in_planes, planes, stride)

    fwd = jax.jit(functools.partial(basic_block_forward, stride=stride))
    out = jax.block_until_ready(fwd(x, params))

    ref = jax.block_until_ready(ref_basic_block(x, params, stride=stride))

    assert out.shape == (N, planes, H // stride, W // stride), out.shape
    # bf16 MXU inputs vs. f32 HIGHEST-precision reference -> relaxed tolerance
    # (intentional precision tradeoff, see header note).
    assert jnp.allclose(out, ref, atol=5e-2, rtol=5e-2), (
        float(jnp.max(jnp.abs(out - ref))))

    print("KERNEL_OK")
</pallas_src>

<mosaic_0001>
module attributes {stable_mosaic.version = 11 : i64} {
  func.func @_fused_conv_kernel(%arg0: i32, %arg1: i32, %arg2: memref<1x9x9x512xbf16, #tpu.memory_space<vmem>>, %arg3: memref<9x128x128xbf16, #tpu.memory_space<vmem>>, %arg4: memref<1x128xf32, #tpu.memory_space<vmem>>, %arg5: memref<1x10x10x128xbf16, #tpu.memory_space<vmem>>) attributes {dimension_semantics = [#tpu.dimension_semantics<parallel>, #tpu.dimension_semantics<parallel>], iteration_bounds = array<i64: 2, 1>, scalar_prefetch = 0 : i64, scratch_operands = 0 : i64, tpu.core_type = #tpu.core_type<tc>, window_params = [{transform_indices = @transform_0, window_bounds = array<i64: 1, 9, 9, 512>}, {transform_indices = @transform_1, window_bounds = array<i64: 9, 128, 128>}, {transform_indices = @transform_2, window_bounds = array<i64: 1, 128>}, {transform_indices = @transform_3, window_bounds = array<i64: 1, 10, 10, 128>}]} {
    %c0 = arith.constant 0 : index
    %c0_0 = arith.constant 0 : index
    %c0_1 = arith.constant 0 : index
    %c0_2 = arith.constant 0 : index
    %0 = vector.load %arg2[%c0, %c0_0, %c0_1, %c0_2] : memref<1x9x9x512xbf16, #tpu.memory_space<vmem>>, vector<1x8x8x128xbf16>
    %1 = vector.shape_cast %0 : vector<1x8x8x128xbf16> to vector<64x128xbf16>
    %c0_3 = arith.constant 0 : index
    %c0_4 = arith.constant 0 : index
    %c0_5 = arith.constant 0 : index
    %2 = vector.load %arg3[%c0_3, %c0_4, %c0_5] : memref<9x128x128xbf16, #tpu.memory_space<vmem>>, vector<1x128x128xbf16>
    %3 = vector.shape_cast %2 : vector<1x128x128xbf16> to vector<128x128xbf16>
    %cst = arith.constant dense<0.000000e+00> : vector<64x128xf32>
    %4 = tpu.matmul %1, %3, %cst {dimension_numbers = #tpu.dot_dimension_numbers<[1], [0], [0], [1], [0, 0, 1, 1], [], []>} : vector<64x128xbf16>, vector<128x128xbf16>, vector<64x128xf32> -> vector<64x128xf32>
    %c0_6 = arith.constant 0 : index
    %c0_7 = arith.constant 0 : index
    %c0_8 = arith.constant 0 : index
    %c128 = arith.constant 128 : index
    %5 = vector.load %arg2[%c0_6, %c0_7, %c0_8, %c128] : memref<1x9x9x512xbf16, #tpu.memory_space<vmem>>, vector<1x8x8x128xbf16>
    %6 = vector.shape_cast %5 : vector<1x8x8x128xbf16> to vector<64x128xbf16>
    %c1 = arith.constant 1 : index
    %c0_9 = arith.constant 0 : index
    %c0_10 = arith.constant 0 : index
    %7 = vector.load %arg3[%c1, %c0_9, %c0_10] : memref<9x128x128xbf16, #tpu.memory_space<vmem>>, vector<1x128x128xbf16>
    %8 = vector.shape_cast %7 : vector<1x128x128xbf16> to vector<128x128xbf16>
    %cst_11 = arith.constant dense<0.000000e+00> : vector<64x128xf32>
    %9 = tpu.matmul %6, %8, %cst_11 {dimension_numbers = #tpu.dot_dimension_numbers<[1], [0], [0], [1], [0, 0, 1, 1], [], []>} : vector<64x128xbf16>, vector<128x128xbf16>, vector<64x128xf32> -> vector<64x128xf32>
    %10 = arith.addf %4, %9 : vector<64x128xf32>
    %c0_12 = arith.constant 0 : index
    %c0_13 = arith.constant 0 : index
    %c1_14 = arith.constant 1 : index
    %c0_15 = arith.constant 0 : index
    %11 = vector.load %arg2[%c0_12, %c0_13, %c1_14, %c0_15] : memref<1x9x9x512xbf16, #tpu.memory_space<vmem>>, vector<1x8x8x128xbf16>
    %12 = vector.shape_cast %11 : vector<1x8x8x128xbf16> to vector<64x128xbf16>
    %c2 = arith.constant 2 : index
    %c0_16 = arith.constant 0 : index
    %c0_17 = arith.constant 0 : index
    %13 = vector.load %arg3[%c2, %c0_16, %c0_17] : memref<9x128x128xbf16, #tpu.memory_space<vmem>>, vector<1x128x128xbf16>
    %14 = vector.shape_cast %13 : vector<1x128x128xbf16> to vector<128x128xbf16>
    %cst_18 = arith.constant dense<0.000000e+00> : vector<64x128xf32>
    %15 = tpu.matmul %12, %14, %cst_18 {dimension_numbers = #tpu.dot_dimension_numbers<[1], [0], [0], [1], [0, 0, 1, 1], [], []>} : vector<64x128xbf16>, vector<128x128xbf16>, vector<64x128xf32> -> vector<64x128xf32>
    %16 = arith.addf %10, %15 : vector<64x128xf32>
    %c0_19 = arith.constant 0 : index
    %c0_20 = arith.constant 0 : index
    %c0_21 = arith.constant 0 : index
    %c256 = arith.constant 256 : index
    %17 = vector.load %arg2[%c0_19, %c0_20, %c0_21, %c256] : memref<1x9x9x512xbf16, #tpu.memory_space<vmem>>, vector<1x8x8x128xbf16>
    %18 = vector.shape_cast %17 : vector<1x8x8x128xbf16> to vector<64x128xbf16>
    %c3 = arith.constant 3 : index
    %c0_22 = arith.constant 0 : index
    %c0_23 = arith.constant 0 : index
    %19 = vector.load %arg3[%c3, %c0_22, %c0_23] : memref<9x128x128xbf16, #tpu.memory_space<vmem>>, vector<1x128x128xbf16>
    %20 = vector.shape_cast %19 : vector<1x128x128xbf16> to vector<128x128xbf16>
    %cst_24 = arith.constant dense<0.000000e+00> : vector<64x128xf32>
    %21 = tpu.matmul %18, %20, %cst_24 {dimension_numbers = #tpu.dot_dimension_numbers<[1], [0], [0], [1], [0, 0, 1, 1], [], []>} : vector<64x128xbf16>, vector<128x128xbf16>, vector<64x128xf32> -> vector<64x128xf32>
    %22 = arith.addf %16, %21 : vector<64x128xf32>
    %c0_25 = arith.constant 0 : index
    %c0_26 = arith.constant 0 : index
    %c0_27 = arith.constant 0 : index
    %c384 = arith.constant 384 : index
    %23 = vector.load %arg2[%c0_25, %c0_26, %c0_27, %c384] : memref<1x9x9x512xbf16, #tpu.memory_space<vmem>>, vector<1x8x8x128xbf16>
    %24 = vector.shape_cast %23 : vector<1x8x8x128xbf16> to vector<64x128xbf16>
    %c4 = arith.constant 4 : index
    %c0_28 = arith.constant 0 : index
    %c0_29 = arith.constant 0 : index
    %25 = vector.load %arg3[%c4, %c0_28, %c0_29] : memref<9x128x128xbf16, #tpu.memory_space<vmem>>, vector<1x128x128xbf16>
    %26 = vector.shape_cast %25 : vector<1x128x128xbf16> to vector<128x128xbf16>
    %cst_30 = arith.constant dense<0.000000e+00> : vector<64x128xf32>
    %27 = tpu.matmul %24, %26, %cst_30 {dimension_numbers = #tpu.dot_dimension_numbers<[1], [0], [0], [1], [0, 0, 1, 1], [], []>} : vector<64x128xbf16>, vector<128x128xbf16>, vector<64x128xf32> -> vector<64x128xf32>
    %28 = arith.addf %22, %27 : vector<64x128xf32>
    %c0_31 = arith.constant 0 : index
    %c0_32 = arith.constant 0 : index
    %c1_33 = arith.constant 1 : index
    %c256_34 = arith.constant 256 : index
    %29 = vector.load %arg2[%c0_31, %c0_32, %c1_33, %c256_34] : memref<1x9x9x512xbf16, #tpu.memory_space<vmem>>, vector<1x8x8x128xbf16>
    %30 = vector.shape_cast %29 : vector<1x8x8x128xbf16> to vector<64x128xbf16>
    %c5 = arith.constant 5 : index
    %c0_35 = arith.constant 0 : index
    %c0_36 = arith.constant 0 : index
    %31 = vector.load %arg3[%c5, %c0_35, %c0_36] : memref<9x128x128xbf16, #tpu.memory_space<vmem>>, vector<1x128x128xbf16>
    %32 = vector.shape_cast %31 : vector<1x128x128xbf16> to vector<128x128xbf16>
    %cst_37 = arith.constant dense<0.000000e+00> : vector<64x128xf32>
    %33 = tpu.matmul %30, %32, %cst_37 {dimension_numbers = #tpu.dot_dimension_numbers<[1], [0], [0], [1], [0, 0, 1, 1], [], []>} : vector<64x128xbf16>, vector<128x128xbf16>, vector<64x128xf32> -> vector<64x128xf32>
    %34 = arith.addf %28, %33 : vector<64x128xf32>
    %c0_38 = arith.constant 0 : index
    %c1_39 = arith.constant 1 : index
    %c0_40 = arith.constant 0 : index
    %c0_41 = arith.constant 0 : index
    %35 = vector.load %arg2[%c0_38, %c1_39, %c0_40, %c0_41] : memref<1x9x9x512xbf16, #tpu.memory_space<vmem>>, vector<1x8x8x128xbf16>
    %36 = vector.shape_cast %35 : vector<1x8x8x128xbf16> to vector<64x128xbf16>
    %c6 = arith.constant 6 : index
    %c0_42 = arith.constant 0 : index
    %c0_43 = arith.constant 0 : index
    %37 = vector.load %arg3[%c6, %c0_42, %c0_43] : memref<9x128x128xbf16, #tpu.memory_space<vmem>>, vector<1x128x128xbf16>
    %38 = vector.shape_cast %37 : vector<1x128x128xbf16> to vector<128x128xbf16>
    %cst_44 = arith.constant dense<0.000000e+00> : vector<64x128xf32>
    %39 = tpu.matmul %36, %38, %cst_44 {dimension_numbers = #tpu.dot_dimension_numbers<[1], [0], [0], [1], [0, 0, 1, 1], [], []>} : vector<64x128xbf16>, vector<128x128xbf16>, vector<64x128xf32> -> vector<64x128xf32>
    %40 = arith.addf %34, %39 : vector<64x128xf32>
    %c0_45 = arith.constant 0 : index
    %c1_46 = arith.constant 1 : index
    %c0_47 = arith.constant 0 : index
    %c128_48 = arith.constant 128 : index
    %41 = vector.load %arg2[%c0_45, %c1_46, %c0_47, %c128_48] : memref<1x9x9x512xbf16, #tpu.memory_space<vmem>>, vector<1x8x8x128xbf16>
    %42 = vector.shape_cast %41 : vector<1x8x8x128xbf16> to vector<64x128xbf16>
    %c7 = arith.constant 7 : index
    %c0_49 = arith.constant 0 : index
    %c0_50 = arith.constant 0 : index
    %43 = vector.load %arg3[%c7, %c0_49, %c0_50] : memref<9x128x128xbf16, #tpu.memory_space<vmem>>, vector<1x128x128xbf16>
    %44 = vector.shape_cast %43 : vector<1x128x128xbf16> to vector<128x128xbf16>
    %cst_51 = arith.constant dense<0.000000e+00> : vector<64x128xf32>
    %45 = tpu.matmul %42, %44, %cst_51 {dimension_numbers = #tpu.dot_dimension_numbers<[1], [0], [0], [1], [0, 0, 1, 1], [], []>} : vector<64x128xbf16>, vector<128x128xbf16>, vector<64x128xf32> -> vector<64x128xf32>
    %46 = arith.addf %40, %45 : vector<64x128xf32>
    %c0_52 = arith.constant 0 : index
    %c1_53 = arith.constant 1 : index
    %c1_54 = arith.constant 1 : index
    %c0_55 = arith.constant 0 : index
    %47 = vector.load %arg2[%c0_52, %c1_53, %c1_54, %c0_55] : memref<1x9x9x512xbf16, #tpu.memory_space<vmem>>, vector<1x8x8x128xbf16>
    %48 = vector.shape_cast %47 : vector<1x8x8x128xbf16> to vector<64x128xbf16>
    %c8 = arith.constant 8 : index
    %c0_56 = arith.constant 0 : index
    %c0_57 = arith.constant 0 : index
    %49 = vector.load %arg3[%c8, %c0_56, %c0_57] : memref<9x128x128xbf16, #tpu.memory_space<vmem>>, vector<1x128x128xbf16>
    %50 = vector.shape_cast %49 : vector<1x128x128xbf16> to vector<128x128xbf16>
    %cst_58 = arith.constant dense<0.000000e+00> : vector<64x128xf32>
    %51 = tpu.matmul %48, %50, %cst_58 {dimension_numbers = #tpu.dot_dimension_numbers<[1], [0], [0], [1], [0, 0, 1, 1], [], []>} : vector<64x128xbf16>, vector<128x128xbf16>, vector<64x128xf32> -> vector<64x128xf32>
    %52 = arith.addf %46, %51 : vector<64x128xf32>
    %c0_59 = arith.constant 0 : index
    %c0_60 = arith.constant 0 : index
    %53 = vector.load %arg4[%c0_59, %c0_60] : memref<1x128xf32, #tpu.memory_space<vmem>>, vector<1x128xf32>
    %54 = vector.broadcast %53 : vector<1x128xf32> to vector<64x128xf32>
    %55 = arith.addf %52, %54 : vector<64x128xf32>
    %cst_61 = arith.constant 0.000000e+00 : f32
    %56 = vector.broadcast %cst_61 : f32 to vector<64x128xf32>
    %57 = arith.maximumf %55, %56 : vector<64x128xf32>
    %58 = arith.truncf %57 : vector<64x128xf32> to vector<64x128xbf16>
    %cst_62 = arith.constant 0.000000e+00 : bf16
    %59 = vector.broadcast %cst_62 : bf16 to vector<1x10x10x128xbf16>
    %c0_63 = arith.constant 0 : index
    %c0_64 = arith.constant 0 : index
    %c0_65 = arith.constant 0 : index
    %c0_66 = arith.constant 0 : index
    %60 = vector.load %arg5[%c0_63, %c0_64, %c0_65, %c0_66] : memref<1x10x10x128xbf16, #tpu.memory_space<vmem>>, vector<1x10x10x128xbf16>
    tpu.vector_store %arg5[%c0_63, %c0_64, %c0_65, %c0_66], %59 {strides = array<i32>} : memref<1x10x10x128xbf16, #tpu.memory_space<vmem>>, vector<1x10x10x128xbf16>,
    %61 = vector.shape_cast %58 : vector<64x128xbf16> to vector<1x8x8x128xbf16>
    %c0_67 = arith.constant 0 : index
    %c1_68 = arith.constant 1 : index
    %c1_69 = arith.constant 1 : index
    %c0_70 = arith.constant 0 : index
    %62 = vector.load %arg5[%c0_67, %c1_68, %c1_69, %c0_70] : memref<1x10x10x128xbf16, #tpu.memory_space<vmem>>, vector<1x8x8x128xbf16>
    tpu.vector_store %arg5[%c0_67, %c1_68, %c1_69, %c0_70], %61 {strides = array<i32>} : memref<1x10x10x128xbf16, #tpu.memory_space<vmem>>, vector<1x8x8x128xbf16>,
    return
  }
  func.func @transform_0(%arg0: i32, %arg1: i32) -> (i32, i32, i32, i32) {
    %c0_i32 = arith.constant 0 : i32
    %c0_i32_0 = arith.constant 0 : i32
    %c0_i32_1 = arith.constant 0 : i32
    %c0_i32_2 = arith.constant 0 : i32
    return %arg0, %c0_i32, %c0_i32_0, %c0_i32_1 : i32, i32, i32, i32
  }
  func.func @transform_1(%arg0: i32, %arg1: i32) -> (i32, i32, i32) {
    %c0_i32 = arith.constant 0 : i32
    %c0_i32_0 = arith.constant 0 : i32
    %c0_i32_1 = arith.constant 0 : i32
    return %c0_i32, %c0_i32_0, %arg1 : i32, i32, i32
  }
  func.func @transform_2(%arg0: i32, %arg1: i32) -> (i32, i32) {
    %c0_i32 = arith.constant 0 : i32
    %c0_i32_0 = arith.constant 0 : i32
    return %c0_i32, %arg1 : i32, i32
  }
  func.func @transform_3(%arg0: i32, %arg1: i32) -> (i32, i32, i32, i32) {
    %c0_i32 = arith.constant 0 : i32
    %c0_i32_0 = arith.constant 0 : i32
    %c0_i32_1 = arith.constant 0 : i32
    return %arg0, %c0_i32, %c0_i32_0, %arg1 : i32, i32, i32, i32
  }
}

module attributes {stable_mosaic.version = 11 : i64} {
  func.func @_fused_conv_kernel(%arg0: i32, %arg1: i32, %arg2: memref<1x9x9x512xbf16, #tpu.memory_space<vmem>>, %arg3: memref<1x128x128xbf16, #tpu.memory_space<vmem>>, %arg4: memref<1x128xf32, #tpu.memory_space<vmem>>, %arg5: memref<1x8x8x128xbf16, #tpu.memory_space<vmem>>) attributes {dimension_semantics = [#tpu.dimension_semantics<parallel>, #tpu.dimension_semantics<parallel>], iteration_bounds = array<i64: 2, 1>, scalar_prefetch = 0 : i64, scratch_operands = 0 : i64, tpu.core_type = #tpu.core_type<tc>, window_params = [{transform_indices = @transform_0, window_bounds = array<i64: 1, 9, 9, 512>}, {transform_indices = @transform_1, window_bounds = array<i64: 1, 128, 128>}, {transform_indices = @transform_2, window_bounds = array<i64: 1, 128>}, {transform_indices = @transform_3, window_bounds = array<i64: 1, 8, 8, 128>}]} {
    %c0 = arith.constant 0 : index
    %c0_0 = arith.constant 0 : index
    %c0_1 = arith.constant 0 : index
    %c384 = arith.constant 384 : index
    %0 = vector.load %arg2[%c0, %c0_0, %c0_1, %c384] : memref<1x9x9x512xbf16, #tpu.memory_space<vmem>>, vector<1x8x8x128xbf16>
    %1 = vector.shape_cast %0 : vector<1x8x8x128xbf16> to vector<64x128xbf16>
    %c0_2 = arith.constant 0 : index
    %c0_3 = arith.constant 0 : index
    %c0_4 = arith.constant 0 : index
    %2 = vector.load %arg3[%c0_2, %c0_3, %c0_4] : memref<1x128x128xbf16, #tpu.memory_space<vmem>>, vector<1x128x128xbf16>
    %3 = vector.shape_cast %2 : vector<1x128x128xbf16> to vector<128x128xbf16>
    %cst = arith.constant dense<0.000000e+00> : vector<64x128xf32>
    %4 = tpu.matmul %1, %3, %cst {dimension_numbers = #tpu.dot_dimension_numbers<[1], [0], [0], [1], [0, 0, 1, 1], [], []>} : vector<64x128xbf16>, vector<128x128xbf16>, vector<64x128xf32> -> vector<64x128xf32>
    %c0_5 = arith.constant 0 : index
    %c0_6 = arith.constant 0 : index
    %5 = vector.load %arg4[%c0_5, %c0_6] : memref<1x128xf32, #tpu.memory_space<vmem>>, vector<1x128xf32>
    %6 = vector.broadcast %5 : vector<1x128xf32> to vector<64x128xf32>
    %7 = arith.addf %4, %6 : vector<64x128xf32>
    %8 = arith.truncf %7 : vector<64x128xf32> to vector<64x128xbf16>
    %9 = vector.shape_cast %8 : vector<64x128xbf16> to vector<1x8x8x128xbf16>
    %c0_7 = arith.constant 0 : index
    %c0_8 = arith.constant 0 : index
    %c0_9 = arith.constant 0 : index
    %c0_10 = arith.constant 0 : index
    %10 = vector.load %arg5[%c0_7, %c0_8, %c0_9, %c0_10] : memref<1x8x8x128xbf16, #tpu.memory_space<vmem>>, vector<1x8x8x128xbf16>
    tpu.vector_store %arg5[%c0_7, %c0_8, %c0_9, %c0_10], %9 {strides = array<i32>} : memref<1x8x8x128xbf16, #tpu.memory_space<vmem>>, vector<1x8x8x128xbf16>,
    return
  }
  func.func @transform_0(%arg0: i32, %arg1: i32) -> (i32, i32, i32, i32) {
    %c0_i32 = arith.constant 0 : i32
    %c0_i32_0 = arith.constant 0 : i32
    %c0_i32_1 = arith.constant 0 : i32
    %c0_i32_2 = arith.constant 0 : i32
    return %arg0, %c0_i32, %c0_i32_0, %c0_i32_1 : i32, i32, i32, i32
  }
  func.func @transform_1(%arg0: i32, %arg1: i32) -> (i32, i32, i32) {
    %c0_i32 = arith.constant 0 : i32
    %c0_i32_0 = arith.constant 0 : i32
    %c0_i32_1 = arith.constant 0 : i32
    return %c0_i32, %c0_i32_0, %arg1 : i32, i32, i32
  }
  func.func @transform_2(%arg0: i32, %arg1: i32) -> (i32, i32) {
    %c0_i32 = arith.constant 0 : i32
    %c0_i32_0 = arith.constant 0 : i32
    return %c0_i32, %arg1 : i32, i32
  }
  func.func @transform_3(%arg0: i32, %arg1: i32) -> (i32, i32, i32, i32) {
    %c0_i32 = arith.constant 0 : i32
    %c0_i32_0 = arith.constant 0 : i32
    %c0_i32_1 = arith.constant 0 : i32
    return %arg0, %c0_i32, %c0_i32_0, %arg1 : i32, i32, i32, i32
  }
}

module attributes {stable_mosaic.version = 11 : i64} {
  func.func @_fused_conv_kernel(%arg0: i32, %arg1: i32, %arg2: memref<1x10x10x128xbf16, #tpu.memory_space<vmem>>, %arg3: memref<9x128x128xbf16, #tpu.memory_space<vmem>>, %arg4: memref<1x128xf32, #tpu.memory_space<vmem>>, %arg5: memref<1x8x8x128xbf16, #tpu.memory_space<vmem>>, %arg6: memref<1x8x8x128xf32, #tpu.memory_space<vmem>>) attributes {dimension_semantics = [#tpu.dimension_semantics<parallel>, #tpu.dimension_semantics<parallel>], iteration_bounds = array<i64: 2, 1>, scalar_prefetch = 0 : i64, scratch_operands = 0 : i64, tpu.core_type = #tpu.core_type<tc>, window_params = [{transform_indices = @transform_0, window_bounds = array<i64: 1, 10, 10, 128>}, {transform_indices = @transform_1, window_bounds = array<i64: 9, 128, 128>}, {transform_indices = @transform_2, window_bounds = array<i64: 1, 128>}, {transform_indices = @transform_3, window_bounds = array<i64: 1, 8, 8, 128>}, {transform_indices = @transform_4, window_bounds = array<i64: 1, 8, 8, 128>}]} {
    %c0 = arith.constant 0 : index
    %c0_0 = arith.constant 0 : index
    %c0_1 = arith.constant 0 : index
    %c0_2 = arith.constant 0 : index
    %0 = vector.load %arg2[%c0, %c0_0, %c0_1, %c0_2] : memref<1x10x10x128xbf16, #tpu.memory_space<vmem>>, vector<1x8x8x128xbf16>
    %1 = vector.shape_cast %0 : vector<1x8x8x128xbf16> to vector<64x128xbf16>
    %c0_3 = arith.constant 0 : index
    %c0_4 = arith.constant 0 : index
    %c0_5 = arith.constant 0 : index
    %2 = vector.load %arg3[%c0_3, %c0_4, %c0_5] : memref<9x128x128xbf16, #tpu.memory_space<vmem>>, vector<1x128x128xbf16>
    %3 = vector.shape_cast %2 : vector<1x128x128xbf16> to vector<128x128xbf16>
    %cst = arith.constant dense<0.000000e+00> : vector<64x128xf32>
    %4 = tpu.matmul %1, %3, %cst {dimension_numbers = #tpu.dot_dimension_numbers<[1], [0], [0], [1], [0, 0, 1, 1], [], []>} : vector<64x128xbf16>, vector<128x128xbf16>, vector<64x128xf32> -> vector<64x128xf32>
    %c0_6 = arith.constant 0 : index
    %c0_7 = arith.constant 0 : index
    %c1 = arith.constant 1 : index
    %c0_8 = arith.constant 0 : index
    %5 = vector.load %arg2[%c0_6, %c0_7, %c1, %c0_8] : memref<1x10x10x128xbf16, #tpu.memory_space<vmem>>, vector<1x8x8x128xbf16>
    %6 = vector.shape_cast %5 : vector<1x8x8x128xbf16> to vector<64x128xbf16>
    %c1_9 = arith.constant 1 : index
    %c0_10 = arith.constant 0 : index
    %c0_11 = arith.constant 0 : index
    %7 = vector.load %arg3[%c1_9, %c0_10, %c0_11] : memref<9x128x128xbf16, #tpu.memory_space<vmem>>, vector<1x128x128xbf16>
    %8 = vector.shape_cast %7 : vector<1x128x128xbf16> to vector<128x128xbf16>
    %cst_12 = arith.constant dense<0.000000e+00> : vector<64x128xf32>
    %9 = tpu.matmul %6, %8, %cst_12 {dimension_numbers = #tpu.dot_dimension_numbers<[1], [0], [0], [1], [0, 0, 1, 1], [], []>} : vector<64x128xbf16>, vector<128x128xbf16>, vector<64x128xf32> -> vector<64x128xf32>
    %10 = arith.addf %4, %9 : vector<64x128xf32>
    %c0_13 = arith.constant 0 : index
    %c0_14 = arith.constant 0 : index
    %c2 = arith.constant 2 : index
    %c0_15 = arith.constant 0 : index
    %11 = vector.load %arg2[%c0_13, %c0_14, %c2, %c0_15] : memref<1x10x10x128xbf16, #tpu.memory_space<vmem>>, vector<1x8x8x128xbf16>
    %12 = vector.shape_cast %11 : vector<1x8x8x128xbf16> to vector<64x128xbf16>
    %c2_16 = arith.constant 2 : index
    %c0_17 = arith.constant 0 : index
    %c0_18 = arith.constant 0 : index
    %13 = vector.load %arg3[%c2_16, %c0_17, %c0_18] : memref<9x128x128xbf16, #tpu.memory_space<vmem>>, vector<1x128x128xbf16>
    %14 = vector.shape_cast %13 : vector<1x128x128xbf16> to vector<128x128xbf16>
    %cst_19 = arith.constant dense<0.000000e+00> : vector<64x128xf32>
    %15 = tpu.matmul %12, %14, %cst_19 {dimension_numbers = #tpu.dot_dimension_numbers<[1], [0], [0], [1], [0, 0, 1, 1], [], []>} : vector<64x128xbf16>, vector<128x128xbf16>, vector<64x128xf32> -> vector<64x128xf32>
    %16 = arith.addf %10, %15 : vector<64x128xf32>
    %c0_20 = arith.constant 0 : index
    %c1_21 = arith.constant 1 : index
    %c0_22 = arith.constant 0 : index
    %c0_23 = arith.constant 0 : index
    %17 = vector.load %arg2[%c0_20, %c1_21, %c0_22, %c0_23] : memref<1x10x10x128xbf16, #tpu.memory_space<vmem>>, vector<1x8x8x128xbf16>
    %18 = vector.shape_cast %17 : vector<1x8x8x128xbf16> to vector<64x128xbf16>
    %c3 = arith.constant 3 : index
    %c0_24 = arith.constant 0 : index
    %c0_25 = arith.constant 0 : index
    %19 = vector.load %arg3[%c3, %c0_24, %c0_25] : memref<9x128x128xbf16, #tpu.memory_space<vmem>>, vector<1x128x128xbf16>
    %20 = vector.shape_cast %19 : vector<1x128x128xbf16> to vector<128x128xbf16>
    %cst_26 = arith.constant dense<0.000000e+00> : vector<64x128xf32>
    %21 = tpu.matmul %18, %20, %cst_26 {dimension_numbers = #tpu.dot_dimension_numbers<[1], [0], [0], [1], [0, 0, 1, 1], [], []>} : vector<64x128xbf16>, vector<128x128xbf16>, vector<64x128xf32> -> vector<64x128xf32>
    %22 = arith.addf %16, %21 : vector<64x128xf32>
    %c0_27 = arith.constant 0 : index
    %c1_28 = arith.constant 1 : index
    %c1_29 = arith.constant 1 : index
    %c0_30 = arith.constant 0 : index
    %23 = vector.load %arg2[%c0_27, %c1_28, %c1_29, %c0_30] : memref<1x10x10x128xbf16, #tpu.memory_space<vmem>>, vector<1x8x8x128xbf16>
    %24 = vector.shape_cast %23 : vector<1x8x8x128xbf16> to vector<64x128xbf16>
    %c4 = arith.constant 4 : index
    %c0_31 = arith.constant 0 : index
    %c0_32 = arith.constant 0 : index
    %25 = vector.load %arg3[%c4, %c0_31, %c0_32] : memref<9x128x128xbf16, #tpu.memory_space<vmem>>, vector<1x128x128xbf16>
    %26 = vector.shape_cast %25 : vector<1x128x128xbf16> to vector<128x128xbf16>
    %cst_33 = arith.constant dense<0.000000e+00> : vector<64x128xf32>
    %27 = tpu.matmul %24, %26, %cst_33 {dimension_numbers = #tpu.dot_dimension_numbers<[1], [0], [0], [1], [0, 0, 1, 1], [], []>} : vector<64x128xbf16>, vector<128x128xbf16>, vector<64x128xf32> -> vector<64x128xf32>
    %28 = arith.addf %22, %27 : vector<64x128xf32>
    %c0_34 = arith.constant 0 : index
    %c1_35 = arith.constant 1 : index
    %c2_36 = arith.constant 2 : index
    %c0_37 = arith.constant 0 : index
    %29 = vector.load %arg2[%c0_34, %c1_35, %c2_36, %c0_37] : memref<1x10x10x128xbf16, #tpu.memory_space<vmem>>, vector<1x8x8x128xbf16>
    %30 = vector.shape_cast %29 : vector<1x8x8x128xbf16> to vector<64x128xbf16>
    %c5 = arith.constant 5 : index
    %c0_38 = arith.constant 0 : index
    %c0_39 = arith.constant 0 : index
    %31 = vector.load %arg3[%c5, %c0_38, %c0_39] : memref<9x128x128xbf16, #tpu.memory_space<vmem>>, vector<1x128x128xbf16>
    %32 = vector.shape_cast %31 : vector<1x128x128xbf16> to vector<128x128xbf16>
    %cst_40 = arith.constant dense<0.000000e+00> : vector<64x128xf32>
    %33 = tpu.matmul %30, %32, %cst_40 {dimension_numbers = #tpu.dot_dimension_numbers<[1], [0], [0], [1], [0, 0, 1, 1], [], []>} : vector<64x128xbf16>, vector<128x128xbf16>, vector<64x128xf32> -> vector<64x128xf32>
    %34 = arith.addf %28, %33 : vector<64x128xf32>
    %c0_41 = arith.constant 0 : index
    %c2_42 = arith.constant 2 : index
    %c0_43 = arith.constant 0 : index
    %c0_44 = arith.constant 0 : index
    %35 = vector.load %arg2[%c0_41, %c2_42, %c0_43, %c0_44] : memref<1x10x10x128xbf16, #tpu.memory_space<vmem>>, vector<1x8x8x128xbf16>
    %36 = vector.shape_cast %35 : vector<1x8x8x128xbf16> to vector<64x128xbf16>
    %c6 = arith.constant 6 : index
    %c0_45 = arith.constant 0 : index
    %c0_46 = arith.constant 0 : index
    %37 = vector.load %arg3[%c6, %c0_45, %c0_46] : memref<9x128x128xbf16, #tpu.memory_space<vmem>>, vector<1x128x128xbf16>
    %38 = vector.shape_cast %37 : vector<1x128x128xbf16> to vector<128x128xbf16>
    %cst_47 = arith.constant dense<0.000000e+00> : vector<64x128xf32>
    %39 = tpu.matmul %36, %38, %cst_47 {dimension_numbers = #tpu.dot_dimension_numbers<[1], [0], [0], [1], [0, 0, 1, 1], [], []>} : vector<64x128xbf16>, vector<128x128xbf16>, vector<64x128xf32> -> vector<64x128xf32>
    %40 = arith.addf %34, %39 : vector<64x128xf32>
    %c0_48 = arith.constant 0 : index
    %c2_49 = arith.constant 2 : index
    %c1_50 = arith.constant 1 : index
    %c0_51 = arith.constant 0 : index
    %41 = vector.load %arg2[%c0_48, %c2_49, %c1_50, %c0_51] : memref<1x10x10x128xbf16, #tpu.memory_space<vmem>>, vector<1x8x8x128xbf16>
    %42 = vector.shape_cast %41 : vector<1x8x8x128xbf16> to vector<64x128xbf16>
    %c7 = arith.constant 7 : index
    %c0_52 = arith.constant 0 : index
    %c0_53 = arith.constant 0 : index
    %43 = vector.load %arg3[%c7, %c0_52, %c0_53] : memref<9x128x128xbf16, #tpu.memory_space<vmem>>, vector<1x128x128xbf16>
    %44 = vector.shape_cast %43 : vector<1x128x128xbf16> to vector<128x128xbf16>
    %cst_54 = arith.constant dense<0.000000e+00> : vector<64x128xf32>
    %45 = tpu.matmul %42, %44, %cst_54 {dimension_numbers = #tpu.dot_dimension_numbers<[1], [0], [0], [1], [0, 0, 1, 1], [], []>} : vector<64x128xbf16>, vector<128x128xbf16>, vector<64x128xf32> -> vector<64x128xf32>
    %46 = arith.addf %40, %45 : vector<64x128xf32>
    %c0_55 = arith.constant 0 : index
    %c2_56 = arith.constant 2 : index
    %c2_57 = arith.constant 2 : index
    %c0_58 = arith.constant 0 : index
    %47 = vector.load %arg2[%c0_55, %c2_56, %c2_57, %c0_58] : memref<1x10x10x128xbf16, #tpu.memory_space<vmem>>, vector<1x8x8x128xbf16>
    %48 = vector.shape_cast %47 : vector<1x8x8x128xbf16> to vector<64x128xbf16>
    %c8 = arith.constant 8 : index
    %c0_59 = arith.constant 0 : index
    %c0_60 = arith.constant 0 : index
    %49 = vector.load %arg3[%c8, %c0_59, %c0_60] : memref<9x128x128xbf16, #tpu.memory_space<vmem>>, vector<1x128x128xbf16>
    %50 = vector.shape_cast %49 : vector<1x128x128xbf16> to vector<128x128xbf16>
    %cst_61 = arith.constant dense<0.000000e+00> : vector<64x128xf32>
    %51 = tpu.matmul %48, %50, %cst_61 {dimension_numbers = #tpu.dot_dimension_numbers<[1], [0], [0], [1], [0, 0, 1, 1], [], []>} : vector<64x128xbf16>, vector<128x128xbf16>, vector<64x128xf32> -> vector<64x128xf32>
    %52 = arith.addf %46, %51 : vector<64x128xf32>
    %c0_62 = arith.constant 0 : index
    %c0_63 = arith.constant 0 : index
    %53 = vector.load %arg4[%c0_62, %c0_63] : memref<1x128xf32, #tpu.memory_space<vmem>>, vector<1x128xf32>
    %54 = vector.broadcast %53 : vector<1x128xf32> to vector<64x128xf32>
    %55 = arith.addf %52, %54 : vector<64x128xf32>
    %c0_64 = arith.constant 0 : index
    %c0_65 = arith.constant 0 : index
    %c0_66 = arith.constant 0 : index
    %c0_67 = arith.constant 0 : index
    %56 = vector.load %arg5[%c0_64, %c0_65, %c0_66, %c0_67] : memref<1x8x8x128xbf16, #tpu.memory_space<vmem>>, vector<1x8x8x128xbf16>
    %57 = vector.shape_cast %56 : vector<1x8x8x128xbf16> to vector<64x128xbf16>
    %58 = arith.extf %57 : vector<64x128xbf16> to vector<64x128xf32>
    %59 = arith.addf %55, %58 : vector<64x128xf32>
    %cst_68 = arith.constant 0.000000e+00 : f32
    %60 = vector.broadcast %cst_68 : f32 to vector<64x128xf32>
    %61 = arith.maximumf %59, %60 : vector<64x128xf32>
    %62 = vector.shape_cast %61 : vector<64x128xf32> to vector<1x8x8x128xf32>
    %c0_69 = arith.constant 0 : index
    %c0_70 = arith.constant 0 : index
    %c0_71 = arith.constant 0 : index
    %c0_72 = arith.constant 0 : index
    %63 = vector.load %arg6[%c0_69, %c0_70, %c0_71, %c0_72] : memref<1x8x8x128xf32, #tpu.memory_space<vmem>>, vector<1x8x8x128xf32>
    tpu.vector_store %arg6[%c0_69, %c0_70, %c0_71, %c0_72], %62 {strides = array<i32>} : memref<1x8x8x128xf32, #tpu.memory_space<vmem>>, vector<1x8x8x128xf32>,
    return
  }
  func.func @transform_0(%arg0: i32, %arg1: i32) -> (i32, i32, i32, i32) {
    %c0_i32 = arith.constant 0 : i32
    %c0_i32_0 = arith.constant 0 : i32
    %c0_i32_1 = arith.constant 0 : i32
    %c0_i32_2 = arith.constant 0 : i32
    return %arg0, %c0_i32, %c0_i32_0, %c0_i32_1 : i32, i32, i32, i32
  }
  func.func @transform_1(%arg0: i32, %arg1: i32) -> (i32, i32, i32) {
    %c0_i32 = arith.constant 0 : i32
    %c0_i32_0 = arith.constant 0 : i32
    %c0_i32_1 = arith.constant 0 : i32
    return %c0_i32, %c0_i32_0, %arg1 : i32, i32, i32
  }
  func.func @transform_2(%arg0: i32, %arg1: i32) -> (i32, i32) {
    %c0_i32 = arith.constant 0 : i32
    %c0_i32_0 = arith.constant 0 : i32
    return %c0_i32, %arg1 : i32, i32
  }
  func.func @transform_3(%arg0: i32, %arg1: i32) -> (i32, i32, i32, i32) {
    %c0_i32 = arith.constant 0 : i32
    %c0_i32_0 = arith.constant 0 : i32
    %c0_i32_1 = arith.constant 0 : i32
    return %arg0, %c0_i32, %c0_i32_0, %arg1 : i32, i32, i32, i32
  }
  func.func @transform_4(%arg0: i32, %arg1: i32) -> (i32, i32, i32, i32) {
    %c0_i32 = arith.constant 0 : i32
    %c0_i32_0 = arith.constant 0 : i32
    %c0_i32_1 = arith.constant 0 : i32
    return %arg0, %c0_i32, %c0_i32_0, %arg1 : i32, i32, i32, i32
  }
}

</mosaic_0001>

<llo_original>
// kernel: basic_block_forward.4
$region0: #{basic_block_forward.4}
  #allocation0 [shape = 'u32[]', space=smem, size = 0x4, offset = 0x4, fixed_abs, tag = 'smem constant byte address 0x4 - core index']
  #allocation1 [shape = 'u32[144,128]{1,0:T(1,128)}', space=vmem, size = 0x12000, scoped, tag = 'internal scratch']
  %s0 = inlined_call_operand.vmem [shape: bf16[2,9,9,512], index: 0, kind: input, shape index: {}]
  %s1 = inlined_call_operand.vmem [shape: bf16[1,128,128], index: 1, kind: input, shape index: {}]
  %s2 = inlined_call_operand.vmem [shape: f32[1,128], index: 2, kind: input, shape index: {}]
  %s3 = inlined_call_operand.vmem [shape: bf16[2,8,8,128], index: 3, kind: output, shape index: {}]
  %s4 = sld [smem:[#allocation0]]
  $region45: #{basic_block_forward.4} parent=0
    _
  %s6 = ssub.s32 1, %s4
  %s7 = scalar_select 0, %s6, %s4
  loop: start=0, step=1, limit=4
  $region2: #{basic_block_forward.4} parent=0 // loop_pre_header
    _
  $region3: #{basic_block_forward.4} parent=0 // loop_header
    %s9 = sphi 0, %s13
    %p10 = scmp.ge.s32.totalorder %s9, 4
    %s16 = sphi 0, %s28
    %s17 = sphi 0, %s24
    %s18 = sphi 0, %s16
    %s19 = sphi 0, %s17
    %s20 = sphi 0, %s18
    %s21 = sphi 0, %s19
    %s31 = sphi 0, %s33
    %s34 = sphi 0, %s31
    %s35 = sphi 0, %s34
    %s51 = sphi 0, %s35
    %s57 = sphi 0, %s59
    %s60 = sphi 0, %s57
    %s61 = sphi 0, %s60
    %s77 = sphi 0, %s61
    %s83 = sphi 0, %s85
    %s86 = sphi 0, %s83
    %s87 = sphi 0, %s86
    %s103 = sphi 0, %s87
    %s111 = sphi 0, %s113
    %s114 = sphi 0, %s111
    %s115 = sphi 0, %s114
    %s131 = sphi 0, %s115
  $region4: #{basic_block_forward.4} parent=0 // loop_header_branch
    %12 = sbr.rel (%p10) target = $region8
  $region5: #{basic_block_forward.4} parent=0 // loop_body
    %s14 = ssub.s32 %s9, 1
    %s15 = ssub.s32 %s9, 2
    %s22 = sadd.s32 1, %s17
    %p23 = scmp.ge.s32.totalorder %s22, 1
    %s24 = scalar_select %p23, 0, %s22
    %s25 = sadd.s32 1, %s16
    %s26 = scalar_select %p23, %s25, %s16
    %p27 = scmp.ge.s32.totalorder %s26, 2
    %s28 = scalar_select %p27, 0, %s26
    %s29 = ssub.s32 %s16, %s28
    %p30 = scmp.eq.s32.totalorder %s29, 0
    %s32 = sadd.s32 %s31, 1
    %s33 = scalar_select %p30, %s31, %s32
    %p36 = pneg %p30
    %p37 = scmp.eq.s32.totalorder %s9, 1
    %p38 = por %p36, %p37
    %p39 = scmp.ne.s32.totalorder %s31, %s34
    %p40 = scmp.eq.s32.totalorder %s9, 0
    %p41 = por %p39, %p40
    %p42 = scmp.ne.s32.totalorder %s31, %s34
    %p43 = scmp.eq.s32.totalorder %s14, 1
    %p44 = por %p42, %p43
    %p45 = scmp.ne.s32.totalorder %s34, %s35
    %p46 = scmp.eq.s32.totalorder %s14, 0
    %p47 = por %p45, %p46
    %p48 = scmp.ne.s32.totalorder %s34, %s35
    %p49 = scmp.eq.s32.totalorder %s15, 1
    %p50 = por %p48, %p49
    %p52 = scmp.ne.s32.totalorder %s35, %s51
    %p53 = scmp.eq.s32.totalorder %s15, 0
    %p54 = por %p52, %p53
    %s55 = ssub.s32 %s17, %s24
    %p56 = scmp.eq.s32.totalorder %s55, 0
    %s58 = sadd.s32 %s57, 1
    %s59 = scalar_select %p56, %s57, %s58
    %p62 = pneg %p56
    %p63 = scmp.eq.s32.totalorder %s9, 1
    %p64 = por %p62, %p63
    %p65 = scmp.ne.s32.totalorder %s57, %s60
    %p66 = scmp.eq.s32.totalorder %s9, 0
    %p67 = por %p65, %p66
    %p68 = scmp.ne.s32.totalorder %s57, %s60
    %p69 = scmp.eq.s32.totalorder %s14, 1
    %p70 = por %p68, %p69
    %p71 = scmp.ne.s32.totalorder %s60, %s61
    %p72 = scmp.eq.s32.totalorder %s14, 0
    %p73 = por %p71, %p72
    %p74 = scmp.ne.s32.totalorder %s60, %s61
    %p75 = scmp.eq.s32.totalorder %s15, 1
    %p76 = por %p74, %p75
    %p78 = scmp.ne.s32.totalorder %s61, %s77
    %p79 = scmp.eq.s32.totalorder %s15, 0
    %p80 = por %p78, %p79
    %s81 = ssub.s32 %s17, %s24
    %p82 = scmp.eq.s32.totalorder %s81, 0
    %s84 = sadd.s32 %s83, 1
    %s85 = scalar_select %p82, %s83, %s84
    %p88 = pneg %p82
    %p89 = scmp.eq.s32.totalorder %s9, 1
    %p90 = por %p88, %p89
    %p91 = scmp.ne.s32.totalorder %s83, %s86
    %p92 = scmp.eq.s32.totalorder %s9, 0
    %p93 = por %p91, %p92
    %p94 = scmp.ne.s32.totalorder %s83, %s86
    %p95 = scmp.eq.s32.totalorder %s14, 1
    %p96 = por %p94, %p95
    %p97 = scmp.ne.s32.totalorder %s86, %s87
    %p98 = scmp.eq.s32.totalorder %s14, 0
    %p99 = por %p97, %p98
    %p100 = scmp.ne.s32.totalorder %s86, %s87
    %p101 = scmp.eq.s32.totalorder %s15, 1
    %p102 = por %p100, %p101
    %p104 = scmp.ne.s32.totalorder %s87, %s103
    %p105 = scmp.eq.s32.totalorder %s15, 0
    %p106 = por %p104, %p105
    %s107 = ssub.s32 %s16, %s28
    %s108 = ssub.s32 %s17, %s24
    %s109 = sor.u32 %s107, %s108
    %p110 = scmp.eq.s32.totalorder %s109, 0
    %s112 = sadd.s32 %s111, 1
    %s113 = scalar_select %p110, %s111, %s112
    %p116 = pneg %p110
    %p117 = scmp.eq.s32.totalorder %s9, 1
    %p118 = por %p116, %p117
    %p119 = scmp.ne.s32.totalorder %s111, %s114
    %p120 = scmp.eq.s32.totalorder %s9, 0
    %p121 = por %p119, %p120
    %p122 = scmp.ne.s32.totalorder %s111, %s114
    %p123 = scmp.eq.s32.totalorder %s14, 1
    %p124 = por %p122, %p123
    %p125 = scmp.ne.s32.totalorder %s114, %s115
    %p126 = scmp.eq.s32.totalorder %s14, 0
    %p127 = por %p125, %p126
    %p128 = scmp.ne.s32.totalorder %s114, %s115
    %p129 = scmp.eq.s32.totalorder %s15, 1
    %p130 = por %p128, %p129
    %p132 = scmp.ne.s32.totalorder %s115, %s131
    %p133 = scmp.eq.s32.totalorder %s15, 0
    %p134 = por %p132, %p133
    %p135 = scmp.le.s32.totalorder 1, %s9
    %p136 = scmp.lt.s32.totalorder %s9, 3
    %p137 = pnand %p135, %p136
    %p138 = pneg %p137
    // Predicated region
    $region9: #{basic_block_forward.4} parent=5 // pred_check
      _
    $region10: #{basic_block_forward.4} parent=5 // pred_check_branch
      %140 = sbr.rel (%p137) target = $region12
    $region11: #{basic_block_forward.4} parent=5 // pred_region
      %s141 = ssub.s32 %s9, 1
      // Predicated region
      $region13: #{basic_block_forward.4} parent=11 // pred_check
        %p142 = pneg %p73
      $region14: #{basic_block_forward.4} parent=11 // pred_check_branch
        %144 = sbr.rel (%p142) target = $region16
      $region15: #{basic_block_forward.4} parent=11 // pred_region
        %p145 = scmp.lt.s32.totalorder %s19, 0
        %s146 = scalar_select %p145, %s19, 0
        %s147 = smul.addr %s146, 4
        %s148 = scalar_lea.vmem %s1, %s147
      $region16: #{basic_block_forward.4} parent=11 // pred_fallthru
        _
      // Predicated region
      $region17: #{basic_block_forward.4} parent=11 // pred_check
        %p149 = pneg %p99
      $region18: #{basic_block_forward.4} parent=11 // pred_check_branch
        %151 = sbr.rel (%p149) target = $region20
      $region19: #{basic_block_forward.4} parent=11 // pred_region
        %p152 = scmp.lt.s32.totalorder %s19, 0
        %s153 = scalar_select %p152, %s19, 0
        %s154 = scalar_lea.vmem %s2, %s153
      $region20: #{basic_block_forward.4} parent=11 // pred_fallthru
        _
    $region12: #{basic_block_forward.4} parent=5 // pred_fallthru
      _
    %p155 = scmp.lt.s32.totalorder %s9, 2
    // Predicated region
    $region21: #{basic_block_forward.4} parent=5 // pred_check
      %p156 = pneg %p155
    $region22: #{basic_block_forward.4} parent=5 // pred_check_branch
      %158 = sbr.rel (%p156) target = $region24
    $region23: #{basic_block_forward.4} parent=5 // pred_region
      // Predicated region
      $region25: #{basic_block_forward.4} parent=23 // pred_check
        %p159 = pneg %p41
      $region26: #{basic_block_forward.4} parent=23 // pred_check_branch
        %161 = sbr.rel (%p159) target = $region28
      $region27: #{basic_block_forward.4} parent=23 // pred_region
        %p162 = scmp.lt.s32.totalorder %s16, 1
        %s163 = scalar_select %p162, %s16, 1
        %s164 = smul.addr %s163, 72
        %s165 = smul.addr %s164, 4
        %s166 = scalar_lea.vmem %s0, %s165
      $region28: #{basic_block_forward.4} parent=23 // pred_fallthru
        _
    $region24: #{basic_block_forward.4} parent=5 // pred_fallthru
      _
    %p167 = scmp.le.s32.totalorder 1, %s9
    %p168 = scmp.lt.s32.totalorder %s9, 3
    %p169 = pnand %p167, %p168
    %p170 = pneg %p169
    // Predicated region
    $region29: #{basic_block_forward.4} parent=5 // pred_check
      _
    $region30: #{basic_block_forward.4} parent=5 // pred_check_branch
      %172 = sbr.rel (%p169) target = $region32
    $region31: #{basic_block_forward.4} parent=5 // pred_region
      %s173 = ssub.s32 %s9, 1
      %p174 = scmp.lt.s32.totalorder %s18, 1
      %s175 = scalar_select %p174, %s18, 1
      %s176 = smul.addr %s175, 72
      %s177 = smul.addr %s176, 4
      %s178 = scalar_lea.vmem %s0, %s177
      %p179 = pneg %p47
      %p180 = pneg %p44
      %p181 = scmp.lt.s32.totalorder %s19, 0
      %s182 = scalar_select %p181, %s19, 0
      %s183 = smul.addr %s182, 4
      %s184 = scalar_lea.vmem %s1, %s183
      %p185 = pneg %p73
      %p186 = pneg %p70
      %p187 = scmp.lt.s32.totalorder %s19, 0
      %s188 = scalar_select %p187, %s19, 0
      %s189 = scalar_lea.vmem %s2, %s188
      %p190 = pneg %p99
      %p191 = pneg %p96
      %p192 = pneg %p127
      %p193 = pneg %p124
      %p194 = scmp.lt.s32.totalorder %s18, 1
      %s195 = scalar_select %p194, %s18, 1
      %p196 = scmp.lt.s32.totalorder %s19, 0
      %s197 = scalar_select %p196, %s19, 0
      %s198 = smul.addr %s195, 8
      %s199 = sadd.s32 %s197, %s198
      %s200 = smul.addr %s199, 4
      %s201 = scalar_lea.vmem %s3, %s200
      %p202 = scmp.lt.s32.totalorder %s18, 1
      %s203 = scalar_select %p202, %s18, 1
      %s204 = smul.addr %s203, 72
      %s205 = smul.addr %s204, 4
      %s206 = scalar_lea.vmem %s0, %s205
      %p207 = scmp.lt.s32.totalorder %s19, 0
      %s208 = scalar_select %p207, %s19, 0
      %s209 = smul.addr %s208, 4
      %s210 = scalar_lea.vmem %s1, %s209
      %p211 = scmp.lt.s32.totalorder %s19, 0
      %s212 = scalar_select %p211, %s19, 0
      %s213 = scalar_lea.vmem %s2, %s212
      %p214 = scmp.lt.s32.totalorder %s18, 1
      %s215 = scalar_select %p214, %s18, 1
      %p216 = scmp.lt.s32.totalorder %s19, 0
      %s217 = scalar_select %p216, %s19, 0
      %s218 = smul.addr %s215, 8
      %s219 = sadd.s32 %s217, %s218
      %s220 = smul.addr %s219, 4
      %s221 = scalar_lea.vmem %s3, %s220
      %v223 = vld [vmem:[%s206 + $0xc] sm:$0xf]
      %v224 = vld [vmem:[%s206 + $0x2c] sm:$0xf]
      %v225 = vld [vmem:[%s206 + $0x4c] sm:$0xf]
      %v226 = vld [vmem:[%s206 + $0x6c] sm:$0xf]
      %v227 = vld [vmem:[%s206 + $0x8c] sm:$0xf]
      %v228 = vld [vmem:[%s206 + $0xac] sm:$0xf]
      %v229 = vld [vmem:[%s206 + $0xcc] sm:$0xf]
      %v230 = vld [vmem:[%s206 + $0xec] sm:$0xf]
      %v231 = vld [vmem:[%s210] sm:$0xf]
      %v232 = vld [vmem:[%s210 + $0x4] sm:$0xf]
      %v233 = vld [vmem:[%s210 + $0x8] sm:$0xf]
      %v234 = vld [vmem:[%s210 + $0xc] sm:$0xf]
      %v235 = vld [vmem:[%s210 + $0x10] sm:$0xf]
      %v236 = vld [vmem:[%s210 + $0x14] sm:$0xf]
      %v237 = vld [vmem:[%s210 + $0x18] sm:$0xf]
      %v238 = vld [vmem:[%s210 + $0x1c] sm:$0xf]
      %v239 = vld [vmem:[%s210 + $0x20] sm:$0xf]
      %v240 = vld [vmem:[%s210 + $0x24] sm:$0xf]
      %v241 = vld [vmem:[%s210 + $0x28] sm:$0xf]
      %v242 = vld [vmem:[%s210 + $0x2c] sm:$0xf]
      %v243 = vld [vmem:[%s210 + $0x30] sm:$0xf]
      %v244 = vld [vmem:[%s210 + $0x34] sm:$0xf]
      %v245 = vld [vmem:[%s210 + $0x38] sm:$0xf]
      %v246 = vld [vmem:[%s210 + $0x3c] sm:$0xf]
      %v247 = vld [vmem:[%s213] sm:$0x1]
      %v249 = vlaneseq
      %v250 = vshrl.u32 %v249, 7
      %v251 = vsub.s32 0, %v250
      %v252 = vrot.slane %v247, %v251
      %v262 = vunpack.c.l.b16 %v223
      %v263 = vunpack.c.l.b16 %v224
      %v264 = vunpack.c.l.b16 %v225
      %v265 = vunpack.c.l.b16 %v226
      %v266 = vunpack.c.l.b16 %v227
      %v267 = vunpack.c.l.b16 %v228
      %v268 = vunpack.c.l.b16 %v229
      %v269 = vunpack.c.l.b16 %v230
      %v270 = vpack.c.b16 %v263, %v262
      %v271 = vpack.c.b16 %v265, %v264
      %v272 = vpack.c.b16 %v267, %v266
      %v273 = vpack.c.b16 %v269, %v268
      %v294 = vunpack.c.l.b16 %v231
      %v295 = vunpack.c.l.b16 %v232
      %v296 = vunpack.c.l.b16 %v233
      %v297 = vunpack.c.l.b16 %v234
      %v298 = vunpack.c.l.b16 %v235
      %v299 = vunpack.c.l.b16 %v236
      %v300 = vunpack.c.l.b16 %v237
      %v301 = vunpack.c.l.b16 %v238
      %v302 = vunpack.c.l.b16 %v239
      %v303 = vunpack.c.l.b16 %v240
      %v304 = vunpack.c.l.b16 %v241
      %v305 = vunpack.c.l.b16 %v242
      %v306 = vunpack.c.l.b16 %v243
      %v307 = vunpack.c.l.b16 %v244
      %v308 = vunpack.c.l.b16 %v245
      %v309 = vunpack.c.l.b16 %v246
      %v310 = vpack.c.b16 %v295, %v294
      %v311 = vpack.c.b16 %v297, %v296
      %v312 = vpack.c.b16 %v299, %v298
      %v313 = vpack.c.b16 %v301, %v300
      %v314 = vpack.c.b16 %v303, %v302
      %v315 = vpack.c.b16 %v305, %v304
      %v316 = vpack.c.b16 %v307, %v306
      %v317 = vpack.c.b16 %v309, %v308
      %326 = vmatprep.subr.bf16.mxu0 0
      %327 = vmatpush1.bf16.msra.mxu0 %v310
      %328 = vmatprep.subr.bf16.mxu0 0
      %329 = vmatpush1.bf16.msra.mxu0 %v311
      %330 = vmatprep.subr.bf16.mxu0 0
      %331 = vmatpush1.bf16.msra.mxu0 %v312
      %332 = vmatprep.subr.bf16.mxu0 0
      %333 = vmatpush1.bf16.msra.mxu0 %v313
      %334 = vmatprep.subr.bf16.mxu0 0
      %335 = vmatpush1.bf16.msra.mxu0 %v314
      %336 = vmatprep.subr.bf16.mxu0 0
      %337 = vmatpush1.bf16.msra.mxu0 %v315
      %338 = vmatprep.subr.bf16.mxu0 0
      %339 = vmatpush1.bf16.msra.mxu0 %v316
      %340 = vmatprep.subr.bf16.mxu0 0
      %341 = vmatpush1.bf16.msra.mxu0 %v317
      %342 = vmatprep.subr.bf16.mxu0 0
      %343 = vmatpush1.bf16.msra.mxu0 0
      %344 = vmatprep.subr.bf16.mxu0 0
      %345 = vmatpush1.bf16.msra.mxu0 0
      %346 = vmatprep.subr.bf16.mxu0 0
      %347 = vmatpush1.bf16.msra.mxu0 0
      %348 = vmatprep.subr.bf16.mxu0 0
      %349 = vmatpush1.bf16.msra.mxu0 0
      %350 = vmatprep.subr.bf16.mxu0 0
      %351 = vmatpush1.bf16.msra.mxu0 0
      %352 = vmatprep.subr.bf16.mxu0 0
      %353 = vmatpush1.bf16.msra.mxu0 0
      %354 = vmatprep.subr.bf16.mxu0 0
      %355 = vmatpush1.bf16.msra.mxu0 0
      %356 = vmatprep.subr.bf16.mxu0 0
      %357 = vmatpush1.bf16.msra.mxu0 0
      %358 = vmatprep.mubr.bf16.mxu0 0
      %359 = vmatmul.mubr.bf16.gmra.mrb[0].mxu0 %v270
      %v360 = vpop.f32.mrb[0].mxu0
      %v361 = vadd.f32 %v252, %v360
      %v362 = vpop.f32.mrb[0].mxu0
      %v363 = vpop.f32.mrb[0].mxu0
      %v364 = vadd.f32 %v252, %v363
      %v365 = vpop.f32.mrb[0].mxu0
      %366 = vmatprep.mubr.bf16.mxu0 0
      %367 = vmatmul.mubr.bf16.gmra.mrb[0].mxu0 %v271
      %v368 = vpop.f32.mrb[0].mxu0
      %v369 = vadd.f32 %v252, %v368
      %v370 = vpop.f32.mrb[0].mxu0
      %v371 = vpop.f32.mrb[0].mxu0
      %v372 = vadd.f32 %v252, %v371
      %v373 = vpop.f32.mrb[0].mxu0
      %374 = vmatprep.mubr.bf16.mxu0 0
      %375 = vmatmul.mubr.bf16.gmra.mrb[0].mxu0 %v272
      %v376 = vpop.f32.mrb[0].mxu0
      %v377 = vadd.f32 %v252, %v376
      %v378 = vpop.f32.mrb[0].mxu0
      %v379 = vpop.f32.mrb[0].mxu0
      %v380 = vadd.f32 %v252, %v379
      %v381 = vpop.f32.mrb[0].mxu0
      %382 = vmatprep.mubr.bf16.mxu0 0
      %383 = vmatmul.mubr.bf16.gmra.mrb[0].mxu0 %v273
      %v384 = vpop.f32.mrb[0].mxu0
      %v385 = vadd.f32 %v252, %v384
      %v386 = vpop.f32.mrb[0].mxu0
      %v387 = vpop.f32.mrb[0].mxu0
      %v388 = vadd.f32 %v252, %v387
      %v389 = vpop.f32.mrb[0].mxu0
      %390 = vdwg.mxu0
      %v391 = vpack.c.bf16 %v364, %v361
      %v392 = vpack.c.bf16 %v372, %v369
      %v393 = vpack.c.bf16 %v380, %v377
      %v394 = vpack.c.bf16 %v388, %v385
      %v399 = vunpack.c.l.b16 %v391
      %v400 = vunpack.c.h.b16 %v391
      %v401 = vunpack.c.l.b16 %v392
      %v402 = vunpack.c.h.b16 %v392
      %v403 = vunpack.c.l.b16 %v393
      %v404 = vunpack.c.h.b16 %v393
      %v405 = vunpack.c.l.b16 %v394
      %v406 = vunpack.c.h.b16 %v394
      %v407 = vpack.c.b16 %v399, %v399
      %v408 = vpack.c.b16 %v400, %v400
      %v409 = vpack.c.b16 %v401, %v401
      %v410 = vpack.c.b16 %v402, %v402
      %v411 = vpack.c.b16 %v403, %v403
      %v412 = vpack.c.b16 %v404, %v404
      %v413 = vpack.c.b16 %v405, %v405
      %v414 = vpack.c.b16 %v406, %v406
      %423 = vst [vmem:[%s221] sm:$0xf] %v407
      %424 = vst [vmem:[%s221 + $0x4] sm:$0xf] %v408
      %425 = vst [vmem:[%s221 + $0x8] sm:$0xf] %v409
      %426 = vst [vmem:[%s221 + $0xc] sm:$0xf] %v410
      %427 = vst [vmem:[%s221 + $0x10] sm:$0xf] %v411
      %428 = vst [vmem:[%s221 + $0x14] sm:$0xf] %v412
      %429 = vst [vmem:[%s221 + $0x18] sm:$0xf] %v413
      %430 = vst [vmem:[%s221 + $0x1c] sm:$0xf] %v414
      %p431 = scmp.lt.s32.totalorder %s18, 1
      %s432 = scalar_select %p431, %s18, 1
      %p433 = scmp.lt.s32.totalorder %s19, 0
      %s434 = scalar_select %p433, %s19, 0
      %s435 = smul.addr %s432, 8
      %s436 = sadd.s32 %s434, %s435
      %s437 = smul.addr %s436, 4
      %s438 = scalar_lea.vmem %s3, %s437
      // Predicated region
      $region33: #{basic_block_forward.4} parent=31 // pred_check
        %p439 = pneg %p124
      $region34: #{basic_block_forward.4} parent=31 // pred_check_branch
        %441 = sbr.rel (%p439) target = $region36
      $region35: #{basic_block_forward.4} parent=31 // pred_region
        _
      $region36: #{basic_block_forward.4} parent=31 // pred_fallthru
        _
    $region32: #{basic_block_forward.4} parent=5 // pred_fallthru
      _
    %p442 = scmp.le.s32.totalorder 2, %s9
    // Predicated region
    $region37: #{basic_block_forward.4} parent=5 // pred_check
      %p443 = pneg %p442
    $region38: #{basic_block_forward.4} parent=5 // pred_check_branch
      %445 = sbr.rel (%p443) target = $region40
    $region39: #{basic_block_forward.4} parent=5 // pred_region
      %s446 = ssub.s32 %s9, 2
      // Predicated region
      $region41: #{basic_block_forward.4} parent=39 // pred_check
        %p447 = pneg %p130
      $region42: #{basic_block_forward.4} parent=39 // pred_check_branch
        %449 = sbr.rel (%p447) target = $region44
      $region43: #{basic_block_forward.4} parent=39 // pred_region
        %p450 = scmp.lt.s32.totalorder %s20, 1
        %s451 = scalar_select %p450, %s20, 1
        %p452 = scmp.lt.s32.totalorder %s21, 0
        %s453 = scalar_select %p452, %s21, 0
        %s454 = smul.addr %s451, 8
        %s455 = sadd.s32 %s453, %s454
        %s456 = smul.addr %s455, 4
        %s457 = scalar_lea.vmem %s3, %s456
      $region44: #{basic_block_forward.4} parent=39 // pred_fallthru
        _
    $region40: #{basic_block_forward.4} parent=5 // pred_fallthru
      _
  $region6: #{basic_block_forward.4} parent=0 // loop_footer
    %s13 = sadd.s32 1, %s9
  $region7: #{basic_block_forward.4} parent=0 // loop_footer_branch
    %8 = sbr.rel target = $region3
  $region8: #{basic_block_forward.4} parent=0 // loop_exit
    _

// kernel: basic_block_forward.3
$region0: #{basic_block_forward.3}
  #allocation0 [shape = 'u32[]', space=smem, size = 0x4, offset = 0x4, fixed_abs, tag = 'smem constant byte address 0x4 - core index']
  #allocation1 [shape = 'u32[144,128]{1,0:T(1,128)}', space=vmem, size = 0x12000, scoped, tag = 'internal scratch']
  %s0 = inlined_call_operand.vmem [shape: bf16[2,9,9,512], index: 0, kind: input, shape index: {}]
  %s1 = inlined_call_operand.vmem [shape: bf16[9,128,128], index: 1, kind: input, shape index: {}]
  %s2 = inlined_call_operand.vmem [shape: f32[1,128], index: 2, kind: input, shape index: {}]
  %s3 = inlined_call_operand.vmem [shape: bf16[2,10,10,128], index: 3, kind: output, shape index: {}]
  %s4 = sld [smem:[#allocation0]]
  $region45: #{basic_block_forward.3} parent=0
    _
  %s6 = ssub.s32 1, %s4
  %s7 = scalar_select 0, %s6, %s4
  loop: start=0, step=1, limit=4
  $region2: #{basic_block_forward.3} parent=0 // loop_pre_header
    _
  $region3: #{basic_block_forward.3} parent=0 // loop_header
    %s9 = sphi 0, %s13
    %p10 = scmp.ge.s32.totalorder %s9, 4
    %s16 = sphi 0, %s28
    %s17 = sphi 0, %s24
    %s18 = sphi 0, %s16
    %s19 = sphi 0, %s17
    %s20 = sphi 0, %s18
    %s21 = sphi 0, %s19
    %s31 = sphi 0, %s33
    %s34 = sphi 0, %s31
    %s35 = sphi 0, %s34
    %s51 = sphi 0, %s35
    %s57 = sphi 0, %s59
    %s60 = sphi 0, %s57
    %s61 = sphi 0, %s60
    %s77 = sphi 0, %s61
    %s83 = sphi 0, %s85
    %s86 = sphi 0, %s83
    %s87 = sphi 0, %s86
    %s103 = sphi 0, %s87
    %s111 = sphi 0, %s113
    %s114 = sphi 0, %s111
    %s115 = sphi 0, %s114
    %s131 = sphi 0, %s115
  $region4: #{basic_block_forward.3} parent=0 // loop_header_branch
    %12 = sbr.rel (%p10) target = $region8
  $region5: #{basic_block_forward.3} parent=0 // loop_body
    %s14 = ssub.s32 %s9, 1
    %s15 = ssub.s32 %s9, 2
    %s22 = sadd.s32 1, %s17
    %p23 = scmp.ge.s32.totalorder %s22, 1
    %s24 = scalar_select %p23, 0, %s22
    %s25 = sadd.s32 1, %s16
    %s26 = scalar_select %p23, %s25, %s16
    %p27 = scmp.ge.s32.totalorder %s26, 2
    %s28 = scalar_select %p27, 0, %s26
    %s29 = ssub.s32 %s16, %s28
    %p30 = scmp.eq.s32.totalorder %s29, 0
    %s32 = sadd.s32 %s31, 1
    %s33 = scalar_select %p30, %s31, %s32
    %p36 = pneg %p30
    %p37 = scmp.eq.s32.totalorder %s9, 1
    %p38 = por %p36, %p37
    %p39 = scmp.ne.s32.totalorder %s31, %s34
    %p40 = scmp.eq.s32.totalorder %s9, 0
    %p41 = por %p39, %p40
    %p42 = scmp.ne.s32.totalorder %s31, %s34
    %p43 = scmp.eq.s32.totalorder %s14, 1
    %p44 = por %p42, %p43
    %p45 = scmp.ne.s32.totalorder %s34, %s35
    %p46 = scmp.eq.s32.totalorder %s14, 0
    %p47 = por %p45, %p46
    %p48 = scmp.ne.s32.totalorder %s34, %s35
    %p49 = scmp.eq.s32.totalorder %s15, 1
    %p50 = por %p48, %p49
    %p52 = scmp.ne.s32.totalorder %s35, %s51
    %p53 = scmp.eq.s32.totalorder %s15, 0
    %p54 = por %p52, %p53
    %s55 = ssub.s32 %s17, %s24
    %p56 = scmp.eq.s32.totalorder %s55, 0
    %s58 = sadd.s32 %s57, 1
    %s59 = scalar_select %p56, %s57, %s58
    %p62 = pneg %p56
    %p63 = scmp.eq.s32.totalorder %s9, 1
    %p64 = por %p62, %p63
    %p65 = scmp.ne.s32.totalorder %s57, %s60
    %p66 = scmp.eq.s32.totalorder %s9, 0
    %p67 = por %p65, %p66
    %p68 = scmp.ne.s32.totalorder %s57, %s60
    %p69 = scmp.eq.s32.totalorder %s14, 1
    %p70 = por %p68, %p69
    %p71 = scmp.ne.s32.totalorder %s60, %s61
    %p72 = scmp.eq.s32.totalorder %s14, 0
    %p73 = por %p71, %p72
    %p74 = scmp.ne.s32.totalorder %s60, %s61
    %p75 = scmp.eq.s32.totalorder %s15, 1
    %p76 = por %p74, %p75
    %p78 = scmp.ne.s32.totalorder %s61, %s77
    %p79 = scmp.eq.s32.totalorder %s15, 0
    %p80 = por %p78, %p79
    %s81 = ssub.s32 %s17, %s24
    %p82 = scmp.eq.s32.totalorder %s81, 0
    %s84 = sadd.s32 %s83, 1
    %s85 = scalar_select %p82, %s83, %s84
    %p88 = pneg %p82
    %p89 = scmp.eq.s32.totalorder %s9, 1
    %p90 = por %p88, %p89
    %p91 = scmp.ne.s32.totalorder %s83, %s86
    %p92 = scmp.eq.s32.totalorder %s9, 0
    %p93 = por %p91, %p92
    %p94 = scmp.ne.s32.totalorder %s83, %s86
    %p95 = scmp.eq.s32.totalorder %s14, 1
    %p96 = por %p94, %p95
    %p97 = scmp.ne.s32.totalorder %s86, %s87
    %p98 = scmp.eq.s32.totalorder %s14, 0
    %p99 = por %p97, %p98
    %p100 = scmp.ne.s32.totalorder %s86, %s87
    %p101 = scmp.eq.s32.totalorder %s15, 1
    %p102 = por %p100, %p101
    %p104 = scmp.ne.s32.totalorder %s87, %s103
    %p105 = scmp.eq.s32.totalorder %s15, 0
    %p106 = por %p104, %p105
    %s107 = ssub.s32 %s16, %s28
    %s108 = ssub.s32 %s17, %s24
    %s109 = sor.u32 %s107, %s108
    %p110 = scmp.eq.s32.totalorder %s109, 0
    %s112 = sadd.s32 %s111, 1
    %s113 = scalar_select %p110, %s111, %s112
    %p116 = pneg %p110
    %p117 = scmp.eq.s32.totalorder %s9, 1
    %p118 = por %p116, %p117
    %p119 = scmp.ne.s32.totalorder %s111, %s114
    %p120 = scmp.eq.s32.totalorder %s9, 0
    %p121 = por %p119, %p120
    %p122 = scmp.ne.s32.totalorder %s111, %s114
    %p123 = scmp.eq.s32.totalorder %s14, 1
    %p124 = por %p122, %p123
    %p125 = scmp.ne.s32.totalorder %s114, %s115
    %p126 = scmp.eq.s32.totalorder %s14, 0
    %p127 = por %p125, %p126
    %p128 = scmp.ne.s32.totalorder %s114, %s115
    %p129 = scmp.eq.s32.totalorder %s15, 1
    %p130 = por %p128, %p129
    %p132 = scmp.ne.s32.totalorder %s115, %s131
    %p133 = scmp.eq.s32.totalorder %s15, 0
    %p134 = por %p132, %p133
    %p135 = scmp.le.s32.totalorder 1, %s9
    %p136 = scmp.lt.s32.totalorder %s9, 3
    %p137 = pnand %p135, %p136
    %p138 = pneg %p137
    // Predicated region
    $region9: #{basic_block_forward.3} parent=5 // pred_check
      _
    $region10: #{basic_block_forward.3} parent=5 // pred_check_branch
      %140 = sbr.rel (%p137) target = $region12
    $region11: #{basic_block_forward.3} parent=5 // pred_region
      %s141 = ssub.s32 %s9, 1
      // Predicated region
      $region13: #{basic_block_forward.3} parent=11 // pred_check
        %p142 = pneg %p73
      $region14: #{basic_block_forward.3} parent=11 // pred_check_branch
        %144 = sbr.rel (%p142) target = $region16
      $region15: #{basic_block_forward.3} parent=11 // pred_region
        %p145 = scmp.lt.s32.totalorder %s19, 0
        %s146 = scalar_select %p145, %s19, 0
        %s147 = smul.addr %s146, 4
        %s148 = scalar_lea.vmem %s1, %s147
      $region16: #{basic_block_forward.3} parent=11 // pred_fallthru
        _
      // Predicated region
      $region17: #{basic_block_forward.3} parent=11 // pred_check
        %p149 = pneg %p99
      $region18: #{basic_block_forward.3} parent=11 // pred_check_branch
        %151 = sbr.rel (%p149) target = $region20
      $region19: #{basic_block_forward.3} parent=11 // pred_region
        %p152 = scmp.lt.s32.totalorder %s19, 0
        %s153 = scalar_select %p152, %s19, 0
        %s154 = scalar_lea.vmem %s2, %s153
      $region20: #{basic_block_forward.3} parent=11 // pred_fallthru
        _
    $region12: #{basic_block_forward.3} parent=5 // pred_fallthru
      _
    %p155 = scmp.lt.s32.totalorder %s9, 2
    // Predicated region
    $region21: #{basic_block_forward.3} parent=5 // pred_check
      %p156 = pneg %p155
    $region22: #{basic_block_forward.3} parent=5 // pred_check_branch
      %158 = sbr.rel (%p156) target = $region24
    $region23: #{basic_block_forward.3} parent=5 // pred_region
      // Predicated region
      $region25: #{basic_block_forward.3} parent=23 // pred_check
        %p159 = pneg %p41
      $region26: #{basic_block_forward.3} parent=23 // pred_check_branch
        %161 = sbr.rel (%p159) target = $region28
      $region27: #{basic_block_forward.3} parent=23 // pred_region
        %p162 = scmp.lt.s32.totalorder %s16, 1
        %s163 = scalar_select %p162, %s16, 1
        %s164 = smul.addr %s163, 72
        %s165 = smul.addr %s164, 4
        %s166 = scalar_lea.vmem %s0, %s165
      $region28: #{basic_block_forward.3} parent=23 // pred_fallthru
        _
    $region24: #{basic_block_forward.3} parent=5 // pred_fallthru
      _
    %p167 = scmp.le.s32.totalorder 1, %s9
    %p168 = scmp.lt.s32.totalorder %s9, 3
    %p169 = pnand %p167, %p168
    %p170 = pneg %p169
    // Predicated region
    $region29: #{basic_block_forward.3} parent=5 // pred_check
      _
    $region30: #{basic_block_forward.3} parent=5 // pred_check_branch
      %172 = sbr.rel (%p169) target = $region32
    $region31: #{basic_block_forward.3} parent=5 // pred_region
      %s173 = ssub.s32 %s9, 1
      %p174 = scmp.lt.s32.totalorder %s18, 1
      %s175 = scalar_select %p174, %s18, 1
      %s176 = smul.addr %s175, 72
      %s177 = smul.addr %s176, 4
      %s178 = scalar_lea.vmem %s0, %s177
      %p179 = pneg %p47
      %p180 = pneg %p44
      %p181 = scmp.lt.s32.totalorder %s19, 0
      %s182 = scalar_select %p181, %s19, 0
      %s183 = smul.addr %s182, 4
      %s184 = scalar_lea.vmem %s1, %s183
      %p185 = pneg %p73
      %p186 = pneg %p70
      %p187 = scmp.lt.s32.totalorder %s19, 0
      %s188 = scalar_select %p187, %s19, 0
      %s189 = scalar_lea.vmem %s2, %s188
      %p190 = pneg %p99
      %p191 = pneg %p96
      %p192 = pneg %p127
      %p193 = pneg %p124
      %p194 = scmp.lt.s32.totalorder %s18, 1
      %s195 = scalar_select %p194, %s18, 1
      %p196 = scmp.lt.s32.totalorder %s19, 0
      %s197 = scalar_select %p196, %s19, 0
      %s198 = smul.addr %s195, 20
      %s199 = sadd.s32 %s197, %s198
      %s200 = smul.addr %s199, 4
      %s201 = scalar_lea.vmem %s3, %s200
      %p202 = scmp.lt.s32.totalorder %s18, 1
      %s203 = scalar_select %p202, %s18, 1
      %s204 = smul.addr %s203, 72
      %s205 = smul.addr %s204, 4
      %s206 = scalar_lea.vmem %s0, %s205
      %p207 = scmp.lt.s32.totalorder %s19, 0
      %s208 = scalar_select %p207, %s19, 0
      %s209 = smul.addr %s208, 4
      %s210 = scalar_lea.vmem %s1, %s209
      %p211 = scmp.lt.s32.totalorder %s19, 0
      %s212 = scalar_select %p211, %s19, 0
      %s213 = scalar_lea.vmem %s2, %s212
      %p214 = scmp.lt.s32.totalorder %s18, 1
      %s215 = scalar_select %p214, %s18, 1
      %p216 = scmp.lt.s32.totalorder %s19, 0
      %s217 = scalar_select %p216, %s19, 0
      %s218 = smul.addr %s215, 20
      %s219 = sadd.s32 %s217, %s218
      %s220 = smul.addr %s219, 4
      %s221 = scalar_lea.vmem %s3, %s220
      %v223 = vld [vmem:[%s206] sm:$0xf]
      %v224 = vld [vmem:[%s206 + $0x20] sm:$0xf]
      %v225 = vld [vmem:[%s206 + $0x40] sm:$0xf]
      %v226 = vld [vmem:[%s206 + $0x60] sm:$0xf]
      %v227 = vld [vmem:[%s206 + $0x80] sm:$0xf]
      %v228 = vld [vmem:[%s206 + $0xa0] sm:$0xf]
      %v229 = vld [vmem:[%s206 + $0xc0] sm:$0xf]
      %v230 = vld [vmem:[%s206 + $0xe0] sm:$0xf]
      %v231 = vld [vmem:[%s210] sm:$0xf]
      %v232 = vld [vmem:[%s210 + $0x4] sm:$0xf]
      %v233 = vld [vmem:[%s210 + $0x8] sm:$0xf]
      %v234 = vld [vmem:[%s210 + $0xc] sm:$0xf]
      %v235 = vld [vmem:[%s210 + $0x10] sm:$0xf]
      %v236 = vld [vmem:[%s210 + $0x14] sm:$0xf]
      %v237 = vld [vmem:[%s210 + $0x18] sm:$0xf]
      %v238 = vld [vmem:[%s210 + $0x1c] sm:$0xf]
      %v239 = vld [vmem:[%s210 + $0x20] sm:$0xf]
      %v240 = vld [vmem:[%s210 + $0x24] sm:$0xf]
      %v241 = vld [vmem:[%s210 + $0x28] sm:$0xf]
      %v242 = vld [vmem:[%s210 + $0x2c] sm:$0xf]
      %v243 = vld [vmem:[%s210 + $0x30] sm:$0xf]
      %v244 = vld [vmem:[%s210 + $0x34] sm:$0xf]
      %v245 = vld [vmem:[%s210 + $0x38] sm:$0xf]
      %v246 = vld [vmem:[%s210 + $0x3c] sm:$0xf]
      %v247 = vld [vmem:[%s206 + $0x4] sm:$0xf]
      %v248 = vld [vmem:[%s206 + $0x24] sm:$0xf]
      %v249 = vld [vmem:[%s206 + $0x44] sm:$0xf]
      %v250 = vld [vmem:[%s206 + $0x64] sm:$0xf]
      %v251 = vld [vmem:[%s206 + $0x84] sm:$0xf]
      %v252 = vld [vmem:[%s206 + $0xa4] sm:$0xf]
      %v253 = vld [vmem:[%s206 + $0xc4] sm:$0xf]
      %v254 = vld [vmem:[%s206 + $0xe4] sm:$0xf]
      %s255 = scalar_lea.vmem %s210, 64
      %v256 = vld [vmem:[%s255] sm:$0xf]
      %v257 = vld [vmem:[%s255 + $0x4] sm:$0xf]
      %v258 = vld [vmem:[%s255 + $0x8] sm:$0xf]
      %v259 = vld [vmem:[%s255 + $0xc] sm:$0xf]
      %v260 = vld [vmem:[%s255 + $0x10] sm:$0xf]
      %v261 = vld [vmem:[%s255 + $0x14] sm:$0xf]
      %v262 = vld [vmem:[%s255 + $0x18] sm:$0xf]
      %v263 = vld [vmem:[%s255 + $0x1c] sm:$0xf]
      %v264 = vld [vmem:[%s255 + $0x20] sm:$0xf]
      %v265 = vld [vmem:[%s255 + $0x24] sm:$0xf]
      %v266 = vld [vmem:[%s255 + $0x28] sm:$0xf]
      %v267 = vld [vmem:[%s255 + $0x2c] sm:$0xf]
      %v268 = vld [vmem:[%s255 + $0x30] sm:$0xf]
      %v269 = vld [vmem:[%s255 + $0x34] sm:$0xf]
      %v270 = vld [vmem:[%s255 + $0x38] sm:$0xf]
      %v271 = vld [vmem:[%s255 + $0x3c] sm:$0xf]
      %v280 = vunpack.c.l.b16 %v247
      %v281 = vunpack.c.l.b16 %v248
      %v282 = vunpack.c.l.b16 %v249
      %v283 = vunpack.c.l.b16 %v250
      %v284 = vunpack.c.l.b16 %v251
      %v285 = vunpack.c.l.b16 %v252
      %v286 = vunpack.c.l.b16 %v253
      %v287 = vunpack.c.l.b16 %v254
      %v288 = vpack.c.b16 %v281, %v280
      %v289 = vpack.c.b16 %v283, %v282
      %v290 = vpack.c.b16 %v285, %v284
      %v291 = vpack.c.b16 %v287, %v286
      %v312 = vunpack.c.l.b16 %v256
      %v313 = vunpack.c.l.b16 %v257
      %v314 = vunpack.c.l.b16 %v258
      %v315 = vunpack.c.l.b16 %v259
      %v316 = vunpack.c.l.b16 %v260
      %v317 = vunpack.c.l.b16 %v261
      %v318 = vunpack.c.l.b16 %v262
      %v319 = vunpack.c.l.b16 %v263
      %v320 = vunpack.c.l.b16 %v264
      %v321 = vunpack.c.l.b16 %v265
      %v322 = vunpack.c.l.b16 %v266
      %v323 = vunpack.c.l.b16 %v267
      %v324 = vunpack.c.l.b16 %v268
      %v325 = vunpack.c.l.b16 %v269
      %v326 = vunpack.c.l.b16 %v270
      %v327 = vunpack.c.l.b16 %v271
      %v328 = vpack.c.b16 %v313, %v312
      %v329 = vpack.c.b16 %v315, %v314
      %v330 = vpack.c.b16 %v317, %v316
      %v331 = vpack.c.b16 %v319, %v318
      %v332 = vpack.c.b16 %v321, %v320
      %v333 = vpack.c.b16 %v323, %v322
      %v334 = vpack.c.b16 %v325, %v324
      %v335 = vpack.c.b16 %v327, %v326
      %344 = vmatprep.subr.bf16.mxu0 0
      %345 = vmatpush1.bf16.msra.mxu0 %v328
      %346 = vmatprep.subr.bf16.mxu0 0
      %347 = vmatpush1.bf16.msra.mxu0 %v329
      %348 = vmatprep.subr.bf16.mxu0 0
      %349 = vmatpush1.bf16.msra.mxu0 %v330
      %350 = vmatprep.subr.bf16.mxu0 0
      %351 = vmatpush1.bf16.msra.mxu0 %v331
      %352 = vmatprep.subr.bf16.mxu0 0
      %353 = vmatpush1.bf16.msra.mxu0 %v332
      %354 = vmatprep.subr.bf16.mxu0 0
      %355 = vmatpush1.bf16.msra.mxu0 %v333
      %356 = vmatprep.subr.bf16.mxu0 0
      %357 = vmatpush1.bf16.msra.mxu0 %v334
      %358 = vmatprep.subr.bf16.mxu0 0
      %359 = vmatpush1.bf16.msra.mxu0 %v335
      %360 = vmatprep.subr.bf16.mxu0 0
      %361 = vmatpush1.bf16.msra.mxu0 0
      %362 = vmatprep.subr.bf16.mxu0 0
      %363 = vmatpush1.bf16.msra.mxu0 0
      %364 = vmatprep.subr.bf16.mxu0 0
      %365 = vmatpush1.bf16.msra.mxu0 0
      %366 = vmatprep.subr.bf16.mxu0 0
      %367 = vmatpush1.bf16.msra.mxu0 0
      %368 = vmatprep.subr.bf16.mxu0 0
      %369 = vmatpush1.bf16.msra.mxu0 0
      %370 = vmatprep.subr.bf16.mxu0 0
      %371 = vmatpush1.bf16.msra.mxu0 0
      %372 = vmatprep.subr.bf16.mxu0 0
      %373 = vmatpush1.bf16.msra.mxu0 0
      %374 = vmatprep.subr.bf16.mxu0 0
      %375 = vmatpush1.bf16.msra.mxu0 0
      %376 = vmatprep.mubr.bf16.mxu0 0
      %377 = vmatmul.mubr.bf16.gmra.mrb[0].mxu0 %v288
      %v378 = vpop.f32.mrb[0].mxu0
      %v379 = vadd.f32 0.0, %v378
      %v380 = vpop.f32.mrb[0].mxu0
      %v381 = vpop.f32.mrb[0].mxu0
      %v382 = vadd.f32 0.0, %v381
      %v383 = vpop.f32.mrb[0].mxu0
      %384 = vmatprep.mubr.bf16.mxu0 0
      %385 = vmatmul.mubr.bf16.gmra.mrb[0].mxu0 %v289
      %v386 = vpop.f32.mrb[0].mxu0
      %v387 = vadd.f32 0.0, %v386
      %v388 = vpop.f32.mrb[0].mxu0
      %v389 = vpop.f32.mrb[0].mxu0
      %v390 = vadd.f32 0.0, %v389
      %v391 = vpop.f32.mrb[0].mxu0
      %392 = vmatprep.mubr.bf16.mxu0 0
      %393 = vmatmul.mubr.bf16.gmra.mrb[0].mxu0 %v290
      %v394 = vpop.f32.mrb[0].mxu0
      %v395 = vadd.f32 0.0, %v394
      %v396 = vpop.f32.mrb[0].mxu0
      %v397 = vpop.f32.mrb[0].mxu0
      %v398 = vadd.f32 0.0, %v397
      %v399 = vpop.f32.mrb[0].mxu0
      %400 = vmatprep.mubr.bf16.mxu0 0
      %401 = vmatmul.mubr.bf16.gmra.mrb[0].mxu0 %v291
      %v402 = vpop.f32.mrb[0].mxu0
      %v403 = vadd.f32 0.0, %v402
      %v404 = vpop.f32.mrb[0].mxu0
      %v405 = vpop.f32.mrb[0].mxu0
      %v406 = vadd.f32 0.0, %v405
      %v407 = vpop.f32.mrb[0].mxu0
      %408 = vdwg.mxu0
      %v417 = vunpack.c.l.b16 %v223
      %v418 = vunpack.c.l.b16 %v224
      %v419 = vunpack.c.l.b16 %v225
      %v420 = vunpack.c.l.b16 %v226
      %v421 = vunpack.c.l.b16 %v227
      %v422 = vunpack.c.l.b16 %v228
      %v423 = vunpack.c.l.b16 %v229
      %v424 = vunpack.c.l.b16 %v230
      %v425 = vpack.c.b16 %v418, %v417
      %v426 = vpack.c.b16 %v420, %v419
      %v427 = vpack.c.b16 %v422, %v421
      %v428 = vpack.c.b16 %v424, %v423
      %v449 = vunpack.c.l.b16 %v231
      %v450 = vunpack.c.l.b16 %v232
      %v451 = vunpack.c.l.b16 %v233
      %v452 = vunpack.c.l.b16 %v234
      %v453 = vunpack.c.l.b16 %v235
      %v454 = vunpack.c.l.b16 %v236
      %v455 = vunpack.c.l.b16 %v237
      %v456 = vunpack.c.l.b16 %v238
      %v457 = vunpack.c.l.b16 %v239
      %v458 = vunpack.c.l.b16 %v240
      %v459 = vunpack.c.l.b16 %v241
      %v460 = vunpack.c.l.b16 %v242
      %v461 = vunpack.c.l.b16 %v243
      %v462 = vunpack.c.l.b16 %v244
      %v463 = vunpack.c.l.b16 %v245
      %v464 = vunpack.c.l.b16 %v246
      %v465 = vpack.c.b16 %v450, %v449
      %v466 = vpack.c.b16 %v452, %v451
      %v467 = vpack.c.b16 %v454, %v453
      %v468 = vpack.c.b16 %v456, %v455
      %v469 = vpack.c.b16 %v458, %v457
      %v470 = vpack.c.b16 %v460, %v459
      %v471 = vpack.c.b16 %v462, %v461
      %v472 = vpack.c.b16 %v464, %v463
      %481 = vmatprep.subr.bf16.mxu0 0
      %482 = vmatpush1.bf16.msra.mxu0 %v465
      %483 = vmatprep.subr.bf16.mxu0 0
      %484 = vmatpush1.bf16.msra.mxu0 %v466
      %485 = vmatprep.subr.bf16.mxu0 0
      %486 = vmatpush1.bf16.msra.mxu0 %v467
      %487 = vmatprep.subr.bf16.mxu0 0
      %488 = vmatpush1.bf16.msra.mxu0 %v468
      %489 = vmatprep.subr.bf16.mxu0 0
      %490 = vmatpush1.bf16.msra.mxu0 %v469
      %491 = vmatprep.subr.bf16.mxu0 0
      %492 = vmatpush1.bf16.msra.mxu0 %v470
      %493 = vmatprep.subr.bf16.mxu0 0
      %494 = vmatpush1.bf16.msra.mxu0 %v471
      %495 = vmatprep.subr.bf16.mxu0 0
      %496 = vmatpush1.bf16.msra.mxu0 %v472
      %497 = vmatprep.subr.bf16.mxu0 0
      %498 = vmatpush1.bf16.msra.mxu0 0
      %499 = vmatprep.subr.bf16.mxu0 0
      %500 = vmatpush1.bf16.msra.mxu0 0
      %501 = vmatprep.subr.bf16.mxu0 0
      %502 = vmatpush1.bf16.msra.mxu0 0
      %503 = vmatprep.subr.bf16.mxu0 0
      %504 = vmatpush1.bf16.msra.mxu0 0
      %505 = vmatprep.subr.bf16.mxu0 0
      %506 = vmatpush1.bf16.msra.mxu0 0
      %507 = vmatprep.subr.bf16.mxu0 0
      %508 = vmatpush1.bf16.msra.mxu0 0
      %509 = vmatprep.subr.bf16.mxu0 0
      %510 = vmatpush1.bf16.msra.mxu0 0
      %511 = vmatprep.subr.bf16.mxu0 0
      %512 = vmatpush1.bf16.msra.mxu0 0
      %513 = vmatprep.mubr.bf16.mxu0 0
      %514 = vmatmul.mubr.bf16.gmra.mrb[0].mxu0 %v425
      %v515 = vpop.f32.mrb[0].mxu0
      %v516 = vadd.f32 %v379, %v515
      %v517 = vpop.f32.mrb[0].mxu0
      %v518 = vpop.f32.mrb[0].mxu0
      %v519 = vadd.f32 %v382, %v518
      %v520 = vpop.f32.mrb[0].mxu0
      %521 = vmatprep.mubr.bf16.mxu0 0
      %522 = vmatmul.mubr.bf16.gmra.mrb[0].mxu0 %v426
      %v523 = vpop.f32.mrb[0].mxu0
      %v524 = vadd.f32 %v387, %v523
      %v525 = vpop.f32.mrb[0].mxu0
      %v526 = vpop.f32.mrb[0].mxu0
      %v527 = vadd.f32 %v390, %v526
      %v528 = vpop.f32.mrb[0].mxu0
      %529 = vmatprep.mubr.bf16.mxu0 0
      %530 = vmatmul.mubr.bf16.gmra.mrb[0].mxu0 %v427
      %v531 = vpop.f32.mrb[0].mxu0
      %v532 = vadd.f32 %v395, %v531
      %v533 = vpop.f32.mrb[0].mxu0
      %v534 = vpop.f32.mrb[0].mxu0
      %v535 = vadd.f32 %v398, %v534
      %v536 = vpop.f32.mrb[0].mxu0
      %537 = vmatprep.mubr.bf16.mxu0 0
      %538 = vmatmul.mubr.bf16.gmra.mrb[0].mxu0 %v428
      %v539 = vpop.f32.mrb[0].mxu0
      %v540 = vadd.f32 %v403, %v539
      %v541 = vpop.f32.mrb[0].mxu0
      %v542 = vpop.f32.mrb[0].mxu0
      %v543 = vadd.f32 %v406, %v542
      %v544 = vpop.f32.mrb[0].mxu0
      %545 = vdwg.mxu0
      %v546 = vld [vmem:[%s206] sm:$0xf]
      %v547 = vld [vmem:[%s206 + $0x10] sm:$0x1]
      %v548 = vld [vmem:[%s206 + $0x20] sm:$0xf]
      %v549 = vld [vmem:[%s206 + $0x30] sm:$0x1]
      %v550 = vld [vmem:[%s206 + $0x40] sm:$0xf]
      %v551 = vld [vmem:[%s206 + $0x50] sm:$0x1]
      %v552 = vld [vmem:[%s206 + $0x60] sm:$0xf]
      %v553 = vld [vmem:[%s206 + $0x70] sm:$0x1]
      %v554 = vld [vmem:[%s206 + $0x80] sm:$0xf]
      %v555 = vld [vmem:[%s206 + $0x90] sm:$0x1]
      %v556 = vld [vmem:[%s206 + $0xa0] sm:$0xf]
      %v557 = vld [vmem:[%s206 + $0xb0] sm:$0x1]
      %v558 = vld [vmem:[%s206 + $0xc0] sm:$0xf]
      %v559 = vld [vmem:[%s206 + $0xd0] sm:$0x1]
      %v560 = vld [vmem:[%s206 + $0xe0] sm:$0xf]
      %v561 = vld [vmem:[%s206 + $0xf0] sm:$0x1]
      %vm562 = vsmask.f32 3328
      %vm563 = vsmask.f32 7440
      %vm564 = vmor %vm562, %vm563
      %v566 = vshrl.u32 %v546, 16
      %v568 = vrot.slane %v566, 4
      %v569 = vshll.u32 %v546, 16
      %v571 = vrot.slane %v569, 5
      %v572 = vor.u32 %v568, %v571
      %v573 = vrot.slane %v572, 4
      %v575 = vshll.u32 %v547, 16
      %v577 = vrot.slane %v575, 5
      %v578 = vsel %vm564, %v573, %v577
      %v580 = vshrl.u32 %v548, 16
      %v582 = vrot.slane %v580, 4
      %v583 = vshll.u32 %v548, 16
      %v585 = vrot.slane %v583, 5
      %v586 = vor.u32 %v582, %v585
      %v587 = vrot.slane %v586, 4
      %v589 = vshll.u32 %v549, 16
      %v591 = vrot.slane %v589, 5
      %v592 = vsel %vm564, %v587, %v591
      %v594 = vshrl.u32 %v550, 16
      %v596 = vrot.slane %v594, 4
      %v597 = vshll.u32 %v550, 16
      %v599 = vrot.slane %v597, 5
      %v600 = vor.u32 %v596, %v599
      %v601 = vrot.slane %v600, 4
      %v603 = vshll.u32 %v551, 16
      %v605 = vrot.slane %v603, 5
      %v606 = vsel %vm564, %v601, %v605
      %v608 = vshrl.u32 %v552, 16
      %v610 = vrot.slane %v608, 4
      %v611 = vshll.u32 %v552, 16
      %v613 = vrot.slane %v611, 5
      %v614 = vor.u32 %v610, %v613
      %v615 = vrot.slane %v614, 4
      %v617 = vshll.u32 %v553, 16
      %v619 = vrot.slane %v617, 5
      %v620 = vsel %vm564, %v615, %v619
      %v622 = vshrl.u32 %v554, 16
      %v624 = vrot.slane %v622, 4
      %v625 = vshll.u32 %v554, 16
      %v627 = vrot.slane %v625, 5
      %v628 = vor.u32 %v624, %v627
      %v629 = vrot.slane %v628, 4
      %v631 = vshll.u32 %v555, 16
      %v633 = vrot.slane %v631, 5
      %v634 = vsel %vm564, %v629, %v633
      %v636 = vshrl.u32 %v556, 16
      %v638 = vrot.slane %v636, 4
      %v639 = vshll.u32 %v556, 16
      %v641 = vrot.slane %v639, 5
      %v642 = vor.u32 %v638, %v641
      %v643 = vrot.slane %v642, 4
      %v645 = vshll.u32 %v557, 16
      %v647 = vrot.slane %v645, 5
      %v648 = vsel %vm564, %v643, %v647
      %v650 = vshrl.u32 %v558, 16
      %v652 = vrot.slane %v650, 4
      %v653 = vshll.u32 %v558, 16
      %v655 = vrot.slane %v653, 5
      %v656 = vor.u32 %v652, %v655
      %v657 = vrot.slane %v656, 4
      %v659 = vshll.u32 %v559, 16
      %v661 = vrot.slane %v659, 5
      %v662 = vsel %vm564, %v657, %v661
      %v664 = vshrl.u32 %v560, 16
      %v666 = vrot.slane %v664, 4
      %v667 = vshll.u32 %v560, 16
      %v669 = vrot.slane %v667, 5
      %v670 = vor.u32 %v666, %v669
      %v671 = vrot.slane %v670, 4
      %v673 = vshll.u32 %v561, 16
      %v675 = vrot.slane %v673, 5
      %v676 = vsel %vm564, %v671, %v675
      %s677 = scalar_lea.vmem %s210, 128
      %v678 = vld [vmem:[%s677] sm:$0xf]
      %v679 = vld [vmem:[%s677 + $0x4] sm:$0xf]
      %v680 = vld [vmem:[%s677 + $0x8] sm:$0xf]
      %v681 = vld [vmem:[%s677 + $0xc] sm:$0xf]
      %v682 = vld [vmem:[%s677 + $0x10] sm:$0xf]
      %v683 = vld [vmem:[%s677 + $0x14] sm:$0xf]
      %v684 = vld [vmem:[%s677 + $0x18] sm:$0xf]
      %v685 = vld [vmem:[%s677 + $0x1c] sm:$0xf]
      %v686 = vld [vmem:[%s677 + $0x20] sm:$0xf]
      %v687 = vld [vmem:[%s677 + $0x24] sm:$0xf]
      %v688 = vld [vmem:[%s677 + $0x28] sm:$0xf]
      %v689 = vld [vmem:[%s677 + $0x2c] sm:$0xf]
      %v690 = vld [vmem:[%s677 + $0x30] sm:$0xf]
      %v691 = vld [vmem:[%s677 + $0x34] sm:$0xf]
      %v692 = vld [vmem:[%s677 + $0x38] sm:$0xf]
      %v693 = vld [vmem:[%s677 + $0x3c] sm:$0xf]
      %v694 = vunpack.c.l.b16 %v578
      %v695 = vunpack.c.l.b16 %v592
      %v696 = vunpack.c.l.b16 %v606
      %v697 = vunpack.c.l.b16 %v620
      %v698 = vunpack.c.l.b16 %v634
      %v699 = vunpack.c.l.b16 %v648
      %v700 = vunpack.c.l.b16 %v662
      %v701 = vunpack.c.l.b16 %v676
      %v702 = vpack.c.b16 %v695, %v694
      %v703 = vpack.c.b16 %v697, %v696
      %v704 = vpack.c.b16 %v699, %v698
      %v705 = vpack.c.b16 %v701, %v700
      %v726 = vunpack.c.l.b16 %v678
      %v727 = vunpack.c.l.b16 %v679
      %v728 = vunpack.c.l.b16 %v680
      %v729 = vunpack.c.l.b16 %v681
      %v730 = vunpack.c.l.b16 %v682
      %v731 = vunpack.c.l.b16 %v683
      %v732 = vunpack.c.l.b16 %v684
      %v733 = vunpack.c.l.b16 %v685
      %v734 = vunpack.c.l.b16 %v686
      %v735 = vunpack.c.l.b16 %v687
      %v736 = vunpack.c.l.b16 %v688
      %v737 = vunpack.c.l.b16 %v689
      %v738 = vunpack.c.l.b16 %v690
      %v739 = vunpack.c.l.b16 %v691
      %v740 = vunpack.c.l.b16 %v692
      %v741 = vunpack.c.l.b16 %v693
      %v742 = vpack.c.b16 %v727, %v726
      %v743 = vpack.c.b16 %v729, %v728
      %v744 = vpack.c.b16 %v731, %v730
      %v745 = vpack.c.b16 %v733, %v732
      %v746 = vpack.c.b16 %v735, %v734
      %v747 = vpack.c.b16 %v737, %v736
      %v748 = vpack.c.b16 %v739, %v738
      %v749 = vpack.c.b16 %v741, %v740
      %758 = vmatprep.subr.bf16.mxu0 0
      %759 = vmatpush1.bf16.msra.mxu0 %v742
      %760 = vmatprep.subr.bf16.mxu0 0
      %761 = vmatpush1.bf16.msra.mxu0 %v743
      %762 = vmatprep.subr.bf16.mxu0 0
      %763 = vmatpush1.bf16.msra.mxu0 %v744
      %764 = vmatprep.subr.bf16.mxu0 0
      %765 = vmatpush1.bf16.msra.mxu0 %v745
      %766 = vmatprep.subr.bf16.mxu0 0
      %767 = vmatpush1.bf16.msra.mxu0 %v746
      %768 = vmatprep.subr.bf16.mxu0 0
      %769 = vmatpush1.bf16.msra.mxu0 %v747
      %770 = vmatprep.subr.bf16.mxu0 0
      %771 = vmatpush1.bf16.msra.mxu0 %v748
      %772 = vmatprep.subr.bf16.mxu0 0
      %773 = vmatpush1.bf16.msra.mxu0 %v749
      %774 = vmatprep.subr.bf16.mxu0 0
      %775 = vmatpush1.bf16.msra.mxu0 0
      %776 = vmatprep.subr.bf16.mxu0 0
      %777 = vmatpush1.bf16.msra.mxu0 0
      %778 = vmatprep.subr.bf16.mxu0 0
      %779 = vmatpush1.bf16.msra.mxu0 0
      %780 = vmatprep.subr.bf16.mxu0 0
      %781 = vmatpush1.bf16.msra.mxu0 0
      %782 = vmatprep.subr.bf16.mxu0 0
      %783 = vmatpush1.bf16.msra.mxu0 0
      %784 = vmatprep.subr.bf16.mxu0 0
      %785 = vmatpush1.bf16.msra.mxu0 0
      %786 = vmatprep.subr.bf16.mxu0 0
      %787 = vmatpush1.bf16.msra.mxu0 0
      %788 = vmatprep.subr.bf16.mxu0 0
      %789 = vmatpush1.bf16.msra.mxu0 0
      %790 = vmatprep.mubr.bf16.mxu0 0
      %791 = vmatmul.mubr.bf16.gmra.mrb[0].mxu0 %v702
      %v792 = vpop.f32.mrb[0].mxu0
      %v793 = vadd.f32 0.0, %v792
      %v794 = vpop.f32.mrb[0].mxu0
      %v795 = vpop.f32.mrb[0].mxu0
      %v796 = vadd.f32 0.0, %v795
      %v797 = vpop.f32.mrb[0].mxu0
      %798 = vmatprep.mubr.bf16.mxu0 0
      %799 = vmatmul.mubr.bf16.gmra.mrb[0].mxu0 %v703
      %v800 = vpop.f32.mrb[0].mxu0
      %v801 = vadd.f32 0.0, %v800
      %v802 = vpop.f32.mrb[0].mxu0
      %v803 = vpop.f32.mrb[0].mxu0
      %v804 = vadd.f32 0.0, %v803
      %v805 = vpop.f32.mrb[0].mxu0
      %806 = vmatprep.mubr.bf16.mxu0 0
      %807 = vmatmul.mubr.bf16.gmra.mrb[0].mxu0 %v704
      %v808 = vpop.f32.mrb[0].mxu0
      %v809 = vadd.f32 0.0, %v808
      %v810 = vpop.f32.mrb[0].mxu0
      %v811 = vpop.f32.mrb[0].mxu0
      %v812 = vadd.f32 0.0, %v811
      %v813 = vpop.f32.mrb[0].mxu0
      %814 = vmatprep.mubr.bf16.mxu0 0
      %815 = vmatmul.mubr.bf16.gmra.mrb[0].mxu0 %v705
      %v816 = vpop.f32.mrb[0].mxu0
      %v817 = vadd.f32 0.0, %v816
      %v818 = vpop.f32.mrb[0].mxu0
      %v819 = vpop.f32.mrb[0].mxu0
      %v820 = vadd.f32 0.0, %v819
      %v821 = vpop.f32.mrb[0].mxu0
      %822 = vdwg.mxu0
      %v823 = vadd.f32 %v516, %v793
      %v824 = vadd.f32 %v519, %v796
      %v825 = vadd.f32 %v524, %v801
      %v826 = vadd.f32 %v527, %v804
      %v827 = vadd.f32 %v532, %v809
      %v828 = vadd.f32 %v535, %v812
      %v829 = vadd.f32 %v540, %v817
      %v830 = vadd.f32 %v543, %v820
      %v831 = vld [vmem:[%s206 + $0x8] sm:$0xf]
      %v832 = vld [vmem:[%s206 + $0x28] sm:$0xf]
      %v833 = vld [vmem:[%s206 + $0x48] sm:$0xf]
      %v834 = vld [vmem:[%s206 + $0x68] sm:$0xf]
      %v835 = vld [vmem:[%s206 + $0x88] sm:$0xf]
      %v836 = vld [vmem:[%s206 + $0xa8] sm:$0xf]
      %v837 = vld [vmem:[%s206 + $0xc8] sm:$0xf]
      %v838 = vld [vmem:[%s206 + $0xe8] sm:$0xf]
      %s839 = scalar_lea.vmem %s210, 192
      %v840 = vld [vmem:[%s839] sm:$0xf]
      %v841 = vld [vmem:[%s839 + $0x4] sm:$0xf]
      %v842 = vld [vmem:[%s839 + $0x8] sm:$0xf]
      %v843 = vld [vmem:[%s839 + $0xc] sm:$0xf]
      %v844 = vld [vmem:[%s839 + $0x10] sm:$0xf]
      %v845 = vld [vmem:[%s839 + $0x14] sm:$0xf]
      %v846 = vld [vmem:[%s839 + $0x18] sm:$0xf]
      %v847 = vld [vmem:[%s839 + $0x1c] sm:$0xf]
      %v848 = vld [vmem:[%s839 + $0x20] sm:$0xf]
      %v849 = vld [vmem:[%s839 + $0x24] sm:$0xf]
      %v850 = vld [vmem:[%s839 + $0x28] sm:$0xf]
      %v851 = vld [vmem:[%s839 + $0x2c] sm:$0xf]
      %v852 = vld [vmem:[%s839 + $0x30] sm:$0xf]
      %v853 = vld [vmem:[%s839 + $0x34] sm:$0xf]
      %v854 = vld [vmem:[%s839 + $0x38] sm:$0xf]
      %v855 = vld [vmem:[%s839 + $0x3c] sm:$0xf]
      %v864 = vunpack.c.l.b16 %v831
      %v865 = vunpack.c.l.b16 %v832
      %v866 = vunpack.c.l.b16 %v833
      %v867 = vunpack.c.l.b16 %v834
      %v868 = vunpack.c.l.b16 %v835
      %v869 = vunpack.c.l.b16 %v836
      %v870 = vunpack.c.l.b16 %v837
      %v871 = vunpack.c.l.b16 %v838
      %v872 = vpack.c.b16 %v865, %v864
      %v873 = vpack.c.b16 %v867, %v866
      %v874 = vpack.c.b16 %v869, %v868
      %v875 = vpack.c.b16 %v871, %v870
      %v896 = vunpack.c.l.b16 %v840
      %v897 = vunpack.c.l.b16 %v841
      %v898 = vunpack.c.l.b16 %v842
      %v899 = vunpack.c.l.b16 %v843
      %v900 = vunpack.c.l.b16 %v844
      %v901 = vunpack.c.l.b16 %v845
      %v902 = vunpack.c.l.b16 %v846
      %v903 = vunpack.c.l.b16 %v847
      %v904 = vunpack.c.l.b16 %v848
      %v905 = vunpack.c.l.b16 %v849
      %v906 = vunpack.c.l.b16 %v850
      %v907 = vunpack.c.l.b16 %v851
      %v908 = vunpack.c.l.b16 %v852
      %v909 = vunpack.c.l.b16 %v853
      %v910 = vunpack.c.l.b16 %v854
      %v911 = vunpack.c.l.b16 %v855
      %v912 = vpack.c.b16 %v897, %v896
      %v913 = vpack.c.b16 %v899, %v898
      %v914 = vpack.c.b16 %v901, %v900
      %v915 = vpack.c.b16 %v903, %v902
      %v916 = vpack.c.b16 %v905, %v904
      %v917 = vpack.c.b16 %v907, %v906
      %v918 = vpack.c.b16 %v909, %v908
      %v919 = vpack.c.b16 %v911, %v910
      %928 = vmatprep.subr.bf16.mxu0 0
      %929 = vmatpush1.bf16.msra.mxu0 %v912
      %930 = vmatprep.subr.bf16.mxu0 0
      %931 = vmatpush1.bf16.msra.mxu0 %v913
      %932 = vmatprep.subr.bf16.mxu0 0
      %933 = vmatpush1.bf16.msra.mxu0 %v914
      %934 = vmatprep.subr.bf16.mxu0 0
      %935 = vmatpush1.bf16.msra.mxu0 %v915
      %936 = vmatprep.subr.bf16.mxu0 0
      %937 = vmatpush1.bf16.msra.mxu0 %v916
      %938 = vmatprep.subr.bf16.mxu0 0
      %939 = vmatpush1.bf16.msra.mxu0 %v917
      %940 = vmatprep.subr.bf16.mxu0 0
      %941 = vmatpush1.bf16.msra.mxu0 %v918
      %942 = vmatprep.subr.bf16.mxu0 0
      %943 = vmatpush1.bf16.msra.mxu0 %v919
      %944 = vmatprep.subr.bf16.mxu0 0
      %945 = vmatpush1.bf16.msra.mxu0 0
      %946 = vmatprep.subr.bf16.mxu0 0
      %947 = vmatpush1.bf16.msra.mxu0 0
      %948 = vmatprep.subr.bf16.mxu0 0
      %949 = vmatpush1.bf16.msra.mxu0 0
      %950 = vmatprep.subr.bf16.mxu0 0
      %951 = vmatpush1.bf16.msra.mxu0 0
      %952 = vmatprep.subr.bf16.mxu0 0
      %953 = vmatpush1.bf16.msra.mxu0 0
      %954 = vmatprep.subr.bf16.mxu0 0
      %955 = vmatpush1.bf16.msra.mxu0 0
      %956 = vmatprep.subr.bf16.mxu0 0
      %957 = vmatpush1.bf16.msra.mxu0 0
      %958 = vmatprep.subr.bf16.mxu0 0
      %959 = vmatpush1.bf16.msra.mxu0 0
      %960 = vmatprep.mubr.bf16.mxu0 0
      %961 = vmatmul.mubr.bf16.gmra.mrb[0].mxu0 %v872
      %v962 = vpop.f32.mrb[0].mxu0
      %v963 = vadd.f32 0.0, %v962
      %v964 = vpop.f32.mrb[0].mxu0
      %v965 = vpop.f32.mrb[0].mxu0
      %v966 = vadd.f32 0.0, %v965
      %v967 = vpop.f32.mrb[0].mxu0
      %968 = vmatprep.mubr.bf16.mxu0 0
      %969 = vmatmul.mubr.bf16.gmra.mrb[0].mxu0 %v873
      %v970 = vpop.f32.mrb[0].mxu0
      %v971 = vadd.f32 0.0, %v970
      %v972 = vpop.f32.mrb[0].mxu0
      %v973 = vpop.f32.mrb[0].mxu0
      %v974 = vadd.f32 0.0, %v973
      %v975 = vpop.f32.mrb[0].mxu0
      %976 = vmatprep.mubr.bf16.mxu0 0
      %977 = vmatmul.mubr.bf16.gmra.mrb[0].mxu0 %v874
      %v978 = vpop.f32.mrb[0].mxu0
      %v979 = vadd.f32 0.0, %v978
      %v980 = vpop.f32.mrb[0].mxu0
      %v981 = vpop.f32.mrb[0].mxu0
      %v982 = vadd.f32 0.0, %v981
      %v983 = vpop.f32.mrb[0].mxu0
      %984 = vmatprep.mubr.bf16.mxu0 0
      %985 = vmatmul.mubr.bf16.gmra.mrb[0].mxu0 %v875
      %v986 = vpop.f32.mrb[0].mxu0
      %v987 = vadd.f32 0.0, %v986
      %v988 = vpop.f32.mrb[0].mxu0
      %v989 = vpop.f32.mrb[0].mxu0
      %v990 = vadd.f32 0.0, %v989
      %v991 = vpop.f32.mrb[0].mxu0
      %992 = vdwg.mxu0
      %v993 = vadd.f32 %v823, %v963
      %v994 = vadd.f32 %v824, %v966
      %v995 = vadd.f32 %v825, %v971
      %v996 = vadd.f32 %v826, %v974
      %v997 = vadd.f32 %v827, %v979
      %v998 = vadd.f32 %v828, %v982
      %v999 = vadd.f32 %v829, %v987
      %v1000 = vadd.f32 %v830, %v990
      %v1001 = vld [vmem:[%s206 + $0xc] sm:$0xf]
      %v1002 = vld [vmem:[%s206 + $0x2c] sm:$0xf]
      %v1003 = vld [vmem:[%s206 + $0x4c] sm:$0xf]
      %v1004 = vld [vmem:[%s206 + $0x6c] sm:$0xf]
      %v1005 = vld [vmem:[%s206 + $0x8c] sm:$0xf]
      %v1006 = vld [vmem:[%s206 + $0xac] sm:$0xf]
      %v1007 = vld [vmem:[%s206 + $0xcc] sm:$0xf]
      %v1008 = vld [vmem:[%s206 + $0xec] sm:$0xf]
      %s1009 = scalar_lea.vmem %s210, 256
      %v1010 = vld [vmem:[%s1009] sm:$0xf]
      %v1011 = vld [vmem:[%s1009 + $0x4] sm:$0xf]
      %v1012 = vld [vmem:[%s1009 + $0x8] sm:$0xf]
      %v1013 = vld [vmem:[%s1009 + $0xc] sm:$0xf]
      %v1014 = vld [vmem:[%s1009 + $0x10] sm:$0xf]
      %v1015 = vld [vmem:[%s1009 + $0x14] sm:$0xf]
      %v1016 = vld [vmem:[%s1009 + $0x18] sm:$0xf]
      %v1017 = vld [vmem:[%s1009 + $0x1c] sm:$0xf]
      %v1018 = vld [vmem:[%s1009 + $0x20] sm:$0xf]
      %v1019 = vld [vmem:[%s1009 + $0x24] sm:$0xf]
      %v1020 = vld [vmem:[%s1009 + $0x28] sm:$0xf]
      %v1021 = vld [vmem:[%s1009 + $0x2c] sm:$0xf]
      %v1022 = vld [vmem:[%s1009 + $0x30] sm:$0xf]
      %v1023 = vld [vmem:[%s1009 + $0x34] sm:$0xf]
      %v1024 = vld [vmem:[%s1009 + $0x38] sm:$0xf]
      %v1025 = vld [vmem:[%s1009 + $0x3c] sm:$0xf]
      %v1034 = vunpack.c.l.b16 %v1001
      %v1035 = vunpack.c.l.b16 %v1002
      %v1036 = vunpack.c.l.b16 %v1003
      %v1037 = vunpack.c.l.b16 %v1004
      %v1038 = vunpack.c.l.b16 %v1005
      %v1039 = vunpack.c.l.b16 %v1006
      %v1040 = vunpack.c.l.b16 %v1007
      %v1041 = vunpack.c.l.b16 %v1008
      %v1042 = vpack.c.b16 %v1035, %v1034
      %v1043 = vpack.c.b16 %v1037, %v1036
      %v1044 = vpack.c.b16 %v1039, %v1038
      %v1045 = vpack.c.b16 %v1041, %v1040
      %v1066 = vunpack.c.l.b16 %v1010
      %v1067 = vunpack.c.l.b16 %v1011
      %v1068 = vunpack.c.l.b16 %v1012
      %v1069 = vunpack.c.l.b16 %v1013
      %v1070 = vunpack.c.l.b16 %v1014
      %v1071 = vunpack.c.l.b16 %v1015
      %v1072 = vunpack.c.l.b16 %v1016
      %v1073 = vunpack.c.l.b16 %v1017
      %v1074 = vunpack.c.l.b16 %v1018
      %v1075 = vunpack.c.l.b16 %v1019
      %v1076 = vunpack.c.l.b16 %v1020
      %v1077 = vunpack.c.l.b16 %v1021
      %v1078 = vunpack.c.l.b16 %v1022
      %v1079 = vunpack.c.l.b16 %v1023
      %v1080 = vunpack.c.l.b16 %v1024
      %v1081 = vunpack.c.l.b16 %v1025
      %v1082 = vpack.c.b16 %v1067, %v1066
      %v1083 = vpack.c.b16 %v1069, %v1068
      %v1084 = vpack.c.b16 %v1071, %v1070
      %v1085 = vpack.c.b16 %v1073, %v1072
      %v1086 = vpack.c.b16 %v1075, %v1074
      %v1087 = vpack.c.b16 %v1077, %v1076
      %v1088 = vpack.c.b16 %v1079, %v1078
      %v1089 = vpack.c.b16 %v1081, %v1080
      %1098 = vmatprep.subr.bf16.mxu0 0
      %1099 = vmatpush1.bf16.msra.mxu0 %v1082
      %1100 = vmatprep.subr.bf16.mxu0 0
      %1101 = vmatpush1.bf16.msra.mxu0 %v1083
      %1102 = vmatprep.subr.bf16.mxu0 0
      %1103 = vmatpush1.bf16.msra.mxu0 %v1084
      %1104 = vmatprep.subr.bf16.mxu0 0
      %1105 = vmatpush1.bf16.msra.mxu0 %v1085
      %1106 = vmatprep.subr.bf16.mxu0 0
      %1107 = vmatpush1.bf16.msra.mxu0 %v1086
      %1108 = vmatprep.subr.bf16.mxu0 0
      %1109 = vmatpush1.bf16.msra.mxu0 %v1087
      %1110 = vmatprep.subr.bf16.mxu0 0
      %1111 = vmatpush1.bf16.msra.mxu0 %v1088
      %1112 = vmatprep.subr.bf16.mxu0 0
      %1113 = vmatpush1.bf16.msra.mxu0 %v1089
      %1114 = vmatprep.subr.bf16.mxu0 0
      %1115 = vmatpush1.bf16.msra.mxu0 0
      %1116 = vmatprep.subr.bf16.mxu0 0
      %1117 = vmatpush1.bf16.msra.mxu0 0
      %1118 = vmatprep.subr.bf16.mxu0 0
      %1119 = vmatpush1.bf16.msra.mxu0 0
      %1120 = vmatprep.subr.bf16.mxu0 0
      %1121 = vmatpush1.bf16.msra.mxu0 0
      %1122 = vmatprep.subr.bf16.mxu0 0
      %1123 = vmatpush1.bf16.msra.mxu0 0
      %1124 = vmatprep.subr.bf16.mxu0 0
      %1125 = vmatpush1.bf16.msra.mxu0 0
      %1126 = vmatprep.subr.bf16.mxu0 0
      %1127 = vmatpush1.bf16.msra.mxu0 0
      %1128 = vmatprep.subr.bf16.mxu0 0
      %1129 = vmatpush1.bf16.msra.mxu0 0
      %1130 = vmatprep.mubr.bf16.mxu0 0
      %1131 = vmatmul.mubr.bf16.gmra.mrb[0].mxu0 %v1042
      %v1132 = vpop.f32.mrb[0].mxu0
      %v1133 = vadd.f32 0.0, %v1132
      %v1134 = vpop.f32.mrb[0].mxu0
      %v1135 = vpop.f32.mrb[0].mxu0
      %v1136 = vadd.f32 0.0, %v1135
      %v1137 = vpop.f32.mrb[0].mxu0
      %1138 = vmatprep.mubr.bf16.mxu0 0
      %1139 = vmatmul.mubr.bf16.gmra.mrb[0].mxu0 %v1043
      %v1140 = vpop.f32.mrb[0].mxu0
      %v1141 = vadd.f32 0.0, %v1140
      %v1142 = vpop.f32.mrb[0].mxu0
      %v1143 = vpop.f32.mrb[0].mxu0
      %v1144 = vadd.f32 0.0, %v1143
      %v1145 = vpop.f32.mrb[0].mxu0
      %1146 = vmatprep.mubr.bf16.mxu0 0
      %1147 = vmatmul.mubr.bf16.gmra.mrb[0].mxu0 %v1044
      %v1148 = vpop.f32.mrb[0].mxu0
      %v1149 = vadd.f32 0.0, %v1148
      %v1150 = vpop.f32.mrb[0].mxu0
      %v1151 = vpop.f32.mrb[0].mxu0
      %v1152 = vadd.f32 0.0, %v1151
      %v1153 = vpop.f32.mrb[0].mxu0
      %1154 = vmatprep.mubr.bf16.mxu0 0
      %1155 = vmatmul.mubr.bf16.gmra.mrb[0].mxu0 %v1045
      %v1156 = vpop.f32.mrb[0].mxu0
      %v1157 = vadd.f32 0.0, %v1156
      %v1158 = vpop.f32.mrb[0].mxu0
      %v1159 = vpop.f32.mrb[0].mxu0
      %v1160 = vadd.f32 0.0, %v1159
      %v1161 = vpop.f32.mrb[0].mxu0
      %1162 = vdwg.mxu0
      %v1163 = vadd.f32 %v993, %v1133
      %v1164 = vadd.f32 %v994, %v1136
      %v1165 = vadd.f32 %v995, %v1141
      %v1166 = vadd.f32 %v996, %v1144
      %v1167 = vadd.f32 %v997, %v1149
      %v1168 = vadd.f32 %v998, %v1152
      %v1169 = vadd.f32 %v999, %v1157
      %v1170 = vadd.f32 %v1000, %v1160
      %v1171 = vld [vmem:[%s206 + $0x8] sm:$0xf]
      %v1172 = vld [vmem:[%s206 + $0x18] sm:$0x1]
      %v1173 = vld [vmem:[%s206 + $0x28] sm:$0xf]
      %v1174 = vld [vmem:[%s206 + $0x38] sm:$0x1]
      %v1175 = vld [vmem:[%s206 + $0x48] sm:$0xf]
      %v1176 = vld [vmem:[%s206 + $0x58] sm:$0x1]
      %v1177 = vld [vmem:[%s206 + $0x68] sm:$0xf]
      %v1178 = vld [vmem:[%s206 + $0x78] sm:$0x1]
      %v1179 = vld [vmem:[%s206 + $0x88] sm:$0xf]
      %v1180 = vld [vmem:[%s206 + $0x98] sm:$0x1]
      %v1181 = vld [vmem:[%s206 + $0xa8] sm:$0xf]
      %v1182 = vld [vmem:[%s206 + $0xb8] sm:$0x1]
      %v1183 = vld [vmem:[%s206 + $0xc8] sm:$0xf]
      %v1184 = vld [vmem:[%s206 + $0xd8] sm:$0x1]
      %v1185 = vld [vmem:[%s206 + $0xe8] sm:$0xf]
      %v1186 = vld [vmem:[%s206 + $0xf8] sm:$0x1]
      %v1188 = vshrl.u32 %v1171, 16
      %v1190 = vrot.slane %v1188, 4
      %v1191 = vshll.u32 %v1171, 16
      %v1193 = vrot.slane %v1191, 5
      %v1194 = vor.u32 %v1190, %v1193
      %v1195 = vrot.slane %v1194, 4
      %v1197 = vshll.u32 %v1172, 16
      %v1199 = vrot.slane %v1197, 5
      %v1200 = vsel %vm564, %v1195, %v1199
      %v1202 = vshrl.u32 %v1173, 16
      %v1204 = vrot.slane %v1202, 4
      %v1205 = vshll.u32 %v1173, 16
      %v1207 = vrot.slane %v1205, 5
      %v1208 = vor.u32 %v1204, %v1207
      %v1209 = vrot.slane %v1208, 4
      %v1211 = vshll.u32 %v1174, 16
      %v1213 = vrot.slane %v1211, 5
      %v1214 = vsel %vm564, %v1209, %v1213
      %v1216 = vshrl.u32 %v1175, 16
      %v1218 = vrot.slane %v1216, 4
      %v1219 = vshll.u32 %v1175, 16
      %v1221 = vrot.slane %v1219, 5
      %v1222 = vor.u32 %v1218, %v1221
      %v1223 = vrot.slane %v1222, 4
      %v1225 = vshll.u32 %v1176, 16
      %v1227 = vrot.slane %v1225, 5
      %v1228 = vsel %vm564, %v1223, %v1227
      %v1230 = vshrl.u32 %v1177, 16
      %v1232 = vrot.slane %v1230, 4
      %v1233 = vshll.u32 %v1177, 16
      %v1235 = vrot.slane %v1233, 5
      %v1236 = vor.u32 %v1232, %v1235
      %v1237 = vrot.slane %v1236, 4
      %v1239 = vshll.u32 %v1178, 16
      %v1241 = vrot.slane %v1239, 5
      %v1242 = vsel %vm564, %v1237, %v1241
      %v1244 = vshrl.u32 %v1179, 16
      %v1246 = vrot.slane %v1244, 4
      %v1247 = vshll.u32 %v1179, 16
      %v1249 = vrot.slane %v1247, 5
      %v1250 = vor.u32 %v1246, %v1249
      %v1251 = vrot.slane %v1250, 4
      %v1253 = vshll.u32 %v1180, 16
      %v1255 = vrot.slane %v1253, 5
      %v1256 = vsel %vm564, %v1251, %v1255
      %v1258 = vshrl.u32 %v1181, 16
      %v1260 = vrot.slane %v1258, 4
      %v1261 = vshll.u32 %v1181, 16
      %v1263 = vrot.slane %v1261, 5
      %v1264 = vor.u32 %v1260, %v1263
      %v1265 = vrot.slane %v1264, 4
      %v1267 = vshll.u32 %v1182, 16
      %v1269 = vrot.slane %v1267, 5
      %v1270 = vsel %vm564, %v1265, %v1269
      %v1272 = vshrl.u32 %v1183, 16
      %v1274 = vrot.slane %v1272, 4
      %v1275 = vshll.u32 %v1183, 16
      %v1277 = vrot.slane %v1275, 5
      %v1278 = vor.u32 %v1274, %v1277
      %v1279 = vrot.slane %v1278, 4
      %v1281 = vshll.u32 %v1184, 16
      %v1283 = vrot.slane %v1281, 5
      %v1284 = vsel %vm564, %v1279, %v1283
      %v1286 = vshrl.u32 %v1185, 16
      %v1288 = vrot.slane %v1286, 4
      %v1289 = vshll.u32 %v1185, 16
      %v1291 = vrot.slane %v1289, 5
      %v1292 = vor.u32 %v1288, %v1291
      %v1293 = vrot.slane %v1292, 4
      %v1295 = vshll.u32 %v1186, 16
      %v1297 = vrot.slane %v1295, 5
      %v1298 = vsel %vm564, %v1293, %v1297
      %s1299 = scalar_lea.vmem %s210, 320
      %v1300 = vld [vmem:[%s1299] sm:$0xf]
      %v1301 = vld [vmem:[%s1299 + $0x4] sm:$0xf]
      %v1302 = vld [vmem:[%s1299 + $0x8] sm:$0xf]
      %v1303 = vld [vmem:[%s1299 + $0xc] sm:$0xf]
      %v1304 = vld [vmem:[%s1299 + $0x10] sm:$0xf]
      %v1305 = vld [vmem:[%s1299 + $0x14] sm:$0xf]
      %v1306 = vld [vmem:[%s1299 + $0x18] sm:$0xf]
      %v1307 = vld [vmem:[%s1299 + $0x1c] sm:$0xf]
      %v1308 = vld [vmem:[%s1299 + $0x20] sm:$0xf]
      %v1309 = vld [vmem:[%s1299 + $0x24] sm:$0xf]
      %v1310 = vld [vmem:[%s1299 + $0x28] sm:$0xf]
      %v1311 = vld [vmem:[%s1299 + $0x2c] sm:$0xf]
      %v1312 = vld [vmem:[%s1299 + $0x30] sm:$0xf]
      %v1313 = vld [vmem:[%s1299 + $0x34] sm:$0xf]
      %v1314 = vld [vmem:[%s1299 + $0x38] sm:$0xf]
      %v1315 = vld [vmem:[%s1299 + $0x3c] sm:$0xf]
      %v1316 = vunpack.c.l.b16 %v1200
      %v1317 = vunpack.c.l.b16 %v1214
      %v1318 = vunpack.c.l.b16 %v1228
      %v1319 = vunpack.c.l.b16 %v1242
      %v1320 = vunpack.c.l.b16 %v1256
      %v1321 = vunpack.c.l.b16 %v1270
      %v1322 = vunpack.c.l.b16 %v1284
      %v1323 = vunpack.c.l.b16 %v1298
      %v1324 = vpack.c.b16 %v1317, %v1316
      %v1325 = vpack.c.b16 %v1319, %v1318
      %v1326 = vpack.c.b16 %v1321, %v1320
      %v1327 = vpack.c.b16 %v1323, %v1322
      %v1348 = vunpack.c.l.b16 %v1300
      %v1349 = vunpack.c.l.b16 %v1301
      %v1350 = vunpack.c.l.b16 %v1302
      %v1351 = vunpack.c.l.b16 %v1303
      %v1352 = vunpack.c.l.b16 %v1304
      %v1353 = vunpack.c.l.b16 %v1305
      %v1354 = vunpack.c.l.b16 %v1306
      %v1355 = vunpack.c.l.b16 %v1307
      %v1356 = vunpack.c.l.b16 %v1308
      %v1357 = vunpack.c.l.b16 %v1309
      %v1358 = vunpack.c.l.b16 %v1310
      %v1359 = vunpack.c.l.b16 %v1311
      %v1360 = vunpack.c.l.b16 %v1312
      %v1361 = vunpack.c.l.b16 %v1313
      %v1362 = vunpack.c.l.b16 %v1314
      %v1363 = vunpack.c.l.b16 %v1315
      %v1364 = vpack.c.b16 %v1349, %v1348
      %v1365 = vpack.c.b16 %v1351, %v1350
      %v1366 = vpack.c.b16 %v1353, %v1352
      %v1367 = vpack.c.b16 %v1355, %v1354
      %v1368 = vpack.c.b16 %v1357, %v1356
      %v1369 = vpack.c.b16 %v1359, %v1358
      %v1370 = vpack.c.b16 %v1361, %v1360
      %v1371 = vpack.c.b16 %v1363, %v1362
      %1380 = vmatprep.subr.bf16.mxu0 0
      %1381 = vmatpush1.bf16.msra.mxu0 %v1364
      %1382 = vmatprep.subr.bf16.mxu0 0
      %1383 = vmatpush1.bf16.msra.mxu0 %v1365
      %1384 = vmatprep.subr.bf16.mxu0 0
      %1385 = vmatpush1.bf16.msra.mxu0 %v1366
      %1386 = vmatprep.subr.bf16.mxu0 0
      %1387 = vmatpush1.bf16.msra.mxu0 %v1367
      %1388 = vmatprep.subr.bf16.mxu0 0
      %1389 = vmatpush1.bf16.msra.mxu0 %v1368
      %1390 = vmatprep.subr.bf16.mxu0 0
      %1391 = vmatpush1.bf16.msra.mxu0 %v1369
      %1392 = vmatprep.subr.bf16.mxu0 0
      %1393 = vmatpush1.bf16.msra.mxu0 %v1370
      %1394 = vmatprep.subr.bf16.mxu0 0
      %1395 = vmatpush1.bf16.msra.mxu0 %v1371
      %1396 = vmatprep.subr.bf16.mxu0 0
      %1397 = vmatpush1.bf16.msra.mxu0 0
      %1398 = vmatprep.subr.bf16.mxu0 0
      %1399 = vmatpush1.bf16.msra.mxu0 0
      %1400 = vmatprep.subr.bf16.mxu0 0
      %1401 = vmatpush1.bf16.msra.mxu0 0
      %1402 = vmatprep.subr.bf16.mxu0 0
      %1403 = vmatpush1.bf16.msra.mxu0 0
      %1404 = vmatprep.subr.bf16.mxu0 0
      %1405 = vmatpush1.bf16.msra.mxu0 0
      %1406 = vmatprep.subr.bf16.mxu0 0
      %1407 = vmatpush1.bf16.msra.mxu0 0
      %1408 = vmatprep.subr.bf16.mxu0 0
      %1409 = vmatpush1.bf16.msra.mxu0 0
      %1410 = vmatprep.subr.bf16.mxu0 0
      %1411 = vmatpush1.bf16.msra.mxu0 0
      %1412 = vmatprep.mubr.bf16.mxu0 0
      %1413 = vmatmul.mubr.bf16.gmra.mrb[0].mxu0 %v1324
      %v1414 = vpop.f32.mrb[0].mxu0
      %v1415 = vadd.f32 0.0, %v1414
      %v1416 = vpop.f32.mrb[0].mxu0
      %v1417 = vpop.f32.mrb[0].mxu0
      %v1418 = vadd.f32 0.0, %v1417
      %v1419 = vpop.f32.mrb[0].mxu0
      %1420 = vmatprep.mubr.bf16.mxu0 0
      %1421 = vmatmul.mubr.bf16.gmra.mrb[0].mxu0 %v1325
      %v1422 = vpop.f32.mrb[0].mxu0
      %v1423 = vadd.f32 0.0, %v1422
      %v1424 = vpop.f32.mrb[0].mxu0
      %v1425 = vpop.f32.mrb[0].mxu0
      %v1426 = vadd.f32 0.0, %v1425
      %v1427 = vpop.f32.mrb[0].mxu0
      %1428 = vmatprep.mubr.bf16.mxu0 0
      %1429 = vmatmul.mubr.bf16.gmra.mrb[0].mxu0 %v1326
      %v1430 = vpop.f32.mrb[0].mxu0
      %v1431 = vadd.f32 0.0, %v1430
      %v1432 = vpop.f32.mrb[0].mxu0
      %v1433 = vpop.f32.mrb[0].mxu0
      %v1434 = vadd.f32 0.0, %v1433
      %v1435 = vpop.f32.mrb[0].mxu0
      %1436 = vmatprep.mubr.bf16.mxu0 0
      %1437 = vmatmul.mubr.bf16.gmra.mrb[0].mxu0 %v1327
      %v1438 = vpop.f32.mrb[0].mxu0
      %v1439 = vadd.f32 0.0, %v1438
      %v1440 = vpop.f32.mrb[0].mxu0
      %v1441 = vpop.f32.mrb[0].mxu0
      %v1442 = vadd.f32 0.0, %v1441
      %v1443 = vpop.f32.mrb[0].mxu0
      %1444 = vdwg.mxu0
      %v1445 = vadd.f32 %v1163, %v1415
      %v1446 = vadd.f32 %v1164, %v1418
      %v1447 = vadd.f32 %v1165, %v1423
      %v1448 = vadd.f32 %v1166, %v1426
      %v1449 = vadd.f32 %v1167, %v1431
      %v1450 = vadd.f32 %v1168, %v1434
      %v1451 = vadd.f32 %v1169, %v1439
      %v1452 = vadd.f32 %v1170, %v1442
      %s1453 = scalar_lea.vmem %s206, 32
      %v1454 = vld [vmem:[%s1453] sm:$0xf]
      %v1455 = vld [vmem:[%s1453 + $0x20] sm:$0xf]
      %v1456 = vld [vmem:[%s1453 + $0x40] sm:$0xf]
      %v1457 = vld [vmem:[%s1453 + $0x60] sm:$0xf]
      %v1458 = vld [vmem:[%s1453 + $0x80] sm:$0xf]
      %v1459 = vld [vmem:[%s1453 + $0xa0] sm:$0xf]
      %v1460 = vld [vmem:[%s1453 + $0xc0] sm:$0xf]
      %v1461 = vld [vmem:[%s1453 + $0xe0] sm:$0xf]
      %s1462 = scalar_lea.vmem %s210, 384
      %v1463 = vld [vmem:[%s1462] sm:$0xf]
      %v1464 = vld [vmem:[%s1462 + $0x4] sm:$0xf]
      %v1465 = vld [vmem:[%s1462 + $0x8] sm:$0xf]
      %v1466 = vld [vmem:[%s1462 + $0xc] sm:$0xf]
      %v1467 = vld [vmem:[%s1462 + $0x10] sm:$0xf]
      %v1468 = vld [vmem:[%s1462 + $0x14] sm:$0xf]
      %v1469 = vld [vmem:[%s1462 + $0x18] sm:$0xf]
      %v1470 = vld [vmem:[%s1462 + $0x1c] sm:$0xf]
      %v1471 = vld [vmem:[%s1462 + $0x20] sm:$0xf]
      %v1472 = vld [vmem:[%s1462 + $0x24] sm:$0xf]
      %v1473 = vld [vmem:[%s1462 + $0x28] sm:$0xf]
      %v1474 = vld [vmem:[%s1462 + $0x2c] sm:$0xf]
      %v1475 = vld [vmem:[%s1462 + $0x30] sm:$0xf]
      %v1476 = vld [vmem:[%s1462 + $0x34] sm:$0xf]
      %v1477 = vld [vmem:[%s1462 + $0x38] sm:$0xf]
      %v1478 = vld [vmem:[%s1462 + $0x3c] sm:$0xf]
      %v1487 = vunpack.c.l.b16 %v1454
      %v1488 = vunpack.c.l.b16 %v1455
      %v1489 = vunpack.c.l.b16 %v1456
      %v1490 = vunpack.c.l.b16 %v1457
      %v1491 = vunpack.c.l.b16 %v1458
      %v1492 = vunpack.c.l.b16 %v1459
      %v1493 = vunpack.c.l.b16 %v1460
      %v1494 = vunpack.c.l.b16 %v1461
      %v1495 = vpack.c.b16 %v1488, %v1487
      %v1496 = vpack.c.b16 %v1490, %v1489
      %v1497 = vpack.c.b16 %v1492, %v1491
      %v1498 = vpack.c.b16 %v1494, %v1493
      %v1519 = vunpack.c.l.b16 %v1463
      %v1520 = vunpack.c.l.b16 %v1464
      %v1521 = vunpack.c.l.b16 %v1465
      %v1522 = vunpack.c.l.b16 %v1466
      %v1523 = vunpack.c.l.b16 %v1467
      %v1524 = vunpack.c.l.b16 %v1468
      %v1525 = vunpack.c.l.b16 %v1469
      %v1526 = vunpack.c.l.b16 %v1470
      %v1527 = vunpack.c.l.b16 %v1471
      %v1528 = vunpack.c.l.b16 %v1472
      %v1529 = vunpack.c.l.b16 %v1473
      %v1530 = vunpack.c.l.b16 %v1474
      %v1531 = vunpack.c.l.b16 %v1475
      %v1532 = vunpack.c.l.b16 %v1476
      %v1533 = vunpack.c.l.b16 %v1477
      %v1534 = vunpack.c.l.b16 %v1478
      %v1535 = vpack.c.b16 %v1520, %v1519
      %v1536 = vpack.c.b16 %v1522, %v1521
      %v1537 = vpack.c.b16 %v1524, %v1523
      %v1538 = vpack.c.b16 %v1526, %v1525
      %v1539 = vpack.c.b16 %v1528, %v1527
      %v1540 = vpack.c.b16 %v1530, %v1529
      %v1541 = vpack.c.b16 %v1532, %v1531
      %v1542 = vpack.c.b16 %v1534, %v1533
      %1551 = vmatprep.subr.bf16.mxu0 0
      %1552 = vmatpush1.bf16.msra.mxu0 %v1535
      %1553 = vmatprep.subr.bf16.mxu0 0
      %1554 = vmatpush1.bf16.msra.mxu0 %v1536
      %1555 = vmatprep.subr.bf16.mxu0 0
      %1556 = vmatpush1.bf16.msra.mxu0 %v1537
      %1557 = vmatprep.subr.bf16.mxu0 0
      %1558 = vmatpush1.bf16.msra.mxu0 %v1538
      %1559 = vmatprep.subr.bf16.mxu0 0
      %1560 = vmatpush1.bf16.msra.mxu0 %v1539
      %1561 = vmatprep.subr.bf16.mxu0 0
      %1562 = vmatpush1.bf16.msra.mxu0 %v1540
      %1563 = vmatprep.subr.bf16.mxu0 0
      %1564 = vmatpush1.bf16.msra.mxu0 %v1541
      %1565 = vmatprep.subr.bf16.mxu0 0
      %1566 = vmatpush1.bf16.msra.mxu0 %v1542
      %1567 = vmatprep.subr.bf16.mxu0 0
      %1568 = vmatpush1.bf16.msra.mxu0 0
      %1569 = vmatprep.subr.bf16.mxu0 0
      %1570 = vmatpush1.bf16.msra.mxu0 0
      %1571 = vmatprep.subr.bf16.mxu0 0
      %1572 = vmatpush1.bf16.msra.mxu0 0
      %1573 = vmatprep.subr.bf16.mxu0 0
      %1574 = vmatpush1.bf16.msra.mxu0 0
      %1575 = vmatprep.subr.bf16.mxu0 0
      %1576 = vmatpush1.bf16.msra.mxu0 0
      %1577 = vmatprep.subr.bf16.mxu0 0
      %1578 = vmatpush1.bf16.msra.mxu0 0
      %1579 = vmatprep.subr.bf16.mxu0 0
      %1580 = vmatpush1.bf16.msra.mxu0 0
      %1581 = vmatprep.subr.bf16.mxu0 0
      %1582 = vmatpush1.bf16.msra.mxu0 0
      %1583 = vmatprep.mubr.bf16.mxu0 0
      %1584 = vmatmul.mubr.bf16.gmra.mrb[0].mxu0 %v1495
      %v1585 = vpop.f32.mrb[0].mxu0
      %v1586 = vadd.f32 0.0, %v1585
      %v1587 = vpop.f32.mrb[0].mxu0
      %v1588 = vpop.f32.mrb[0].mxu0
      %v1589 = vadd.f32 0.0, %v1588
      %v1590 = vpop.f32.mrb[0].mxu0
      %1591 = vmatprep.mubr.bf16.mxu0 0
      %1592 = vmatmul.mubr.bf16.gmra.mrb[0].mxu0 %v1496
      %v1593 = vpop.f32.mrb[0].mxu0
      %v1594 = vadd.f32 0.0, %v1593
      %v1595 = vpop.f32.mrb[0].mxu0
      %v1596 = vpop.f32.mrb[0].mxu0
      %v1597 = vadd.f32 0.0, %v1596
      %v1598 = vpop.f32.mrb[0].mxu0
      %1599 = vmatprep.mubr.bf16.mxu0 0
      %1600 = vmatmul.mubr.bf16.gmra.mrb[0].mxu0 %v1497
      %v1601 = vpop.f32.mrb[0].mxu0
      %v1602 = vadd.f32 0.0, %v1601
      %v1603 = vpop.f32.mrb[0].mxu0
      %v1604 = vpop.f32.mrb[0].mxu0
      %v1605 = vadd.f32 0.0, %v1604
      %v1606 = vpop.f32.mrb[0].mxu0
      %1607 = vmatprep.mubr.bf16.mxu0 0
      %1608 = vmatmul.mubr.bf16.gmra.mrb[0].mxu0 %v1498
      %v1609 = vpop.f32.mrb[0].mxu0
      %v1610 = vadd.f32 0.0, %v1609
      %v1611 = vpop.f32.mrb[0].mxu0
      %v1612 = vpop.f32.mrb[0].mxu0
      %v1613 = vadd.f32 0.0, %v1612
      %v1614 = vpop.f32.mrb[0].mxu0
      %1615 = vdwg.mxu0
      %v1616 = vadd.f32 %v1445, %v1586
      %v1617 = vadd.f32 %v1446, %v1589
      %v1618 = vadd.f32 %v1447, %v1594
      %v1619 = vadd.f32 %v1448, %v1597
      %v1620 = vadd.f32 %v1449, %v1602
      %v1621 = vadd.f32 %v1450, %v1605
      %v1622 = vadd.f32 %v1451, %v1610
      %v1623 = vadd.f32 %v1452, %v1613
      %v1624 = vld [vmem:[%s1453 + $0x4] sm:$0xf]
      %v1625 = vld [vmem:[%s1453 + $0x24] sm:$0xf]
      %v1626 = vld [vmem:[%s1453 + $0x44] sm:$0xf]
      %v1627 = vld [vmem:[%s1453 + $0x64] sm:$0xf]
      %v1628 = vld [vmem:[%s1453 + $0x84] sm:$0xf]
      %v1629 = vld [vmem:[%s1453 + $0xa4] sm:$0xf]
      %v1630 = vld [vmem:[%s1453 + $0xc4] sm:$0xf]
      %v1631 = vld [vmem:[%s1453 + $0xe4] sm:$0xf]
      %s1632 = scalar_lea.vmem %s210, 448
      %v1633 = vld [vmem:[%s1632] sm:$0xf]
      %v1634 = vld [vmem:[%s1632 + $0x4] sm:$0xf]
      %v1635 = vld [vmem:[%s1632 + $0x8] sm:$0xf]
      %v1636 = vld [vmem:[%s1632 + $0xc] sm:$0xf]
      %v1637 = vld [vmem:[%s1632 + $0x10] sm:$0xf]
      %v1638 = vld [vmem:[%s1632 + $0x14] sm:$0xf]
      %v1639 = vld [vmem:[%s1632 + $0x18] sm:$0xf]
      %v1640 = vld [vmem:[%s1632 + $0x1c] sm:$0xf]
      %v1641 = vld [vmem:[%s1632 + $0x20] sm:$0xf]
      %v1642 = vld [vmem:[%s1632 + $0x24] sm:$0xf]
      %v1643 = vld [vmem:[%s1632 + $0x28] sm:$0xf]
      %v1644 = vld [vmem:[%s1632 + $0x2c] sm:$0xf]
      %v1645 = vld [vmem:[%s1632 + $0x30] sm:$0xf]
      %v1646 = vld [vmem:[%s1632 + $0x34] sm:$0xf]
      %v1647 = vld [vmem:[%s1632 + $0x38] sm:$0xf]
      %v1648 = vld [vmem:[%s1632 + $0x3c] sm:$0xf]
      %v1657 = vunpack.c.l.b16 %v1624
      %v1658 = vunpack.c.l.b16 %v1625
      %v1659 = vunpack.c.l.b16 %v1626
      %v1660 = vunpack.c.l.b16 %v1627
      %v1661 = vunpack.c.l.b16 %v1628
      %v1662 = vunpack.c.l.b16 %v1629
      %v1663 = vunpack.c.l.b16 %v1630
      %v1664 = vunpack.c.l.b16 %v1631
      %v1665 = vpack.c.b16 %v1658, %v1657
      %v1666 = vpack.c.b16 %v1660, %v1659
      %v1667 = vpack.c.b16 %v1662, %v1661
      %v1668 = vpack.c.b16 %v1664, %v1663
      %v1689 = vunpack.c.l.b16 %v1633
      %v1690 = vunpack.c.l.b16 %v1634
      %v1691 = vunpack.c.l.b16 %v1635
      %v1692 = vunpack.c.l.b16 %v1636
      %v1693 = vunpack.c.l.b16 %v1637
      %v1694 = vunpack.c.l.b16 %v1638
      %v1695 = vunpack.c.l.b16 %v1639
      %v1696 = vunpack.c.l.b16 %v1640
      %v1697 = vunpack.c.l.b16 %v1641
      %v1698 = vunpack.c.l.b16 %v1642
      %v1699 = vunpack.c.l.b16 %v1643
      %v1700 = vunpack.c.l.b16 %v1644
      %v1701 = vunpack.c.l.b16 %v1645
      %v1702 = vunpack.c.l.b16 %v1646
      %v1703 = vunpack.c.l.b16 %v1647
      %v1704 = vunpack.c.l.b16 %v1648
      %v1705 = vpack.c.b16 %v1690, %v1689
      %v1706 = vpack.c.b16 %v1692, %v1691
      %v1707 = vpack.c.b16 %v1694, %v1693
      %v1708 = vpack.c.b16 %v1696, %v1695
      %v1709 = vpack.c.b16 %v1698, %v1697
      %v1710 = vpack.c.b16 %v1700, %v1699
      %v1711 = vpack.c.b16 %v1702, %v1701
      %v1712 = vpack.c.b16 %v1704, %v1703
      %1721 = vmatprep.subr.bf16.mxu0 0
      %1722 = vmatpush1.bf16.msra.mxu0 %v1705
      %1723 = vmatprep.subr.bf16.mxu0 0
      %1724 = vmatpush1.bf16.msra.mxu0 %v1706
      %1725 = vmatprep.subr.bf16.mxu0 0
      %1726 = vmatpush1.bf16.msra.mxu0 %v1707
      %1727 = vmatprep.subr.bf16.mxu0 0
      %1728 = vmatpush1.bf16.msra.mxu0 %v1708
      %1729 = vmatprep.subr.bf16.mxu0 0
      %1730 = vmatpush1.bf16.msra.mxu0 %v1709
      %1731 = vmatprep.subr.bf16.mxu0 0
      %1732 = vmatpush1.bf16.msra.mxu0 %v1710
      %1733 = vmatprep.subr.bf16.mxu0 0
      %1734 = vmatpush1.bf16.msra.mxu0 %v1711
      %1735 = vmatprep.subr.bf16.mxu0 0
      %1736 = vmatpush1.bf16.msra.mxu0 %v1712
      %1737 = vmatprep.subr.bf16.mxu0 0
      %1738 = vmatpush1.bf16.msra.mxu0 0
      %1739 = vmatprep.subr.bf16.mxu0 0
      %1740 = vmatpush1.bf16.msra.mxu0 0
      %1741 = vmatprep.subr.bf16.mxu0 0
      %1742 = vmatpush1.bf16.msra.mxu0 0
      %1743 = vmatprep.subr.bf16.mxu0 0
      %1744 = vmatpush1.bf16.msra.mxu0 0
      %1745 = vmatprep.subr.bf16.mxu0 0
      %1746 = vmatpush1.bf16.msra.mxu0 0
      %1747 = vmatprep.subr.bf16.mxu0 0
      %1748 = vmatpush1.bf16.msra.mxu0 0
      %1749 = vmatprep.subr.bf16.mxu0 0
      %1750 = vmatpush1.bf16.msra.mxu0 0
      %1751 = vmatprep.subr.bf16.mxu0 0
      %1752 = vmatpush1.bf16.msra.mxu0 0
      %1753 = vmatprep.mubr.bf16.mxu0 0
      %1754 = vmatmul.mubr.bf16.gmra.mrb[0].mxu0 %v1665
      %v1755 = vpop.f32.mrb[0].mxu0
      %v1756 = vadd.f32 0.0, %v1755
      %v1757 = vpop.f32.mrb[0].mxu0
      %v1758 = vpop.f32.mrb[0].mxu0
      %v1759 = vadd.f32 0.0, %v1758
      %v1760 = vpop.f32.mrb[0].mxu0
      %1761 = vmatprep.mubr.bf16.mxu0 0
      %1762 = vmatmul.mubr.bf16.gmra.mrb[0].mxu0 %v1666
      %v1763 = vpop.f32.mrb[0].mxu0
      %v1764 = vadd.f32 0.0, %v1763
      %v1765 = vpop.f32.mrb[0].mxu0
      %v1766 = vpop.f32.mrb[0].mxu0
      %v1767 = vadd.f32 0.0, %v1766
      %v1768 = vpop.f32.mrb[0].mxu0
      %1769 = vmatprep.mubr.bf16.mxu0 0
      %1770 = vmatmul.mubr.bf16.gmra.mrb[0].mxu0 %v1667
      %v1771 = vpop.f32.mrb[0].mxu0
      %v1772 = vadd.f32 0.0, %v1771
      %v1773 = vpop.f32.mrb[0].mxu0
      %v1774 = vpop.f32.mrb[0].mxu0
      %v1775 = vadd.f32 0.0, %v1774
      %v1776 = vpop.f32.mrb[0].mxu0
      %1777 = vmatprep.mubr.bf16.mxu0 0
      %1778 = vmatmul.mubr.bf16.gmra.mrb[0].mxu0 %v1668
      %v1779 = vpop.f32.mrb[0].mxu0
      %v1780 = vadd.f32 0.0, %v1779
      %v1781 = vpop.f32.mrb[0].mxu0
      %v1782 = vpop.f32.mrb[0].mxu0
      %v1783 = vadd.f32 0.0, %v1782
      %v1784 = vpop.f32.mrb[0].mxu0
      %1785 = vdwg.mxu0
      %v1786 = vadd.f32 %v1616, %v1756
      %v1787 = vadd.f32 %v1617, %v1759
      %v1788 = vadd.f32 %v1618, %v1764
      %v1789 = vadd.f32 %v1619, %v1767
      %v1790 = vadd.f32 %v1620, %v1772
      %v1791 = vadd.f32 %v1621, %v1775
      %v1792 = vadd.f32 %v1622, %v1780
      %v1793 = vadd.f32 %v1623, %v1783
      %v1794 = vld [vmem:[%s1453] sm:$0xf]
      %v1795 = vld [vmem:[%s1453 + $0x10] sm:$0x1]
      %v1796 = vld [vmem:[%s1453 + $0x20] sm:$0xf]
      %v1797 = vld [vmem:[%s1453 + $0x30] sm:$0x1]
      %v1798 = vld [vmem:[%s1453 + $0x40] sm:$0xf]
      %v1799 = vld [vmem:[%s1453 + $0x50] sm:$0x1]
      %v1800 = vld [vmem:[%s1453 + $0x60] sm:$0xf]
      %v1801 = vld [vmem:[%s1453 + $0x70] sm:$0x1]
      %v1802 = vld [vmem:[%s1453 + $0x80] sm:$0xf]
      %v1803 = vld [vmem:[%s1453 + $0x90] sm:$0x1]
      %v1804 = vld [vmem:[%s1453 + $0xa0] sm:$0xf]
      %v1805 = vld [vmem:[%s1453 + $0xb0] sm:$0x1]
      %v1806 = vld [vmem:[%s1453 + $0xc0] sm:$0xf]
      %v1807 = vld [vmem:[%s1453 + $0xd0] sm:$0x1]
      %v1808 = vld [vmem:[%s1453 + $0xe0] sm:$0xf]
      %v1809 = vld [vmem:[%s1453 + $0xf0] sm:$0x1]
      %v1811 = vshrl.u32 %v1794, 16
      %v1813 = vrot.slane %v1811, 4
      %v1814 = vshll.u32 %v1794, 16
      %v1816 = vrot.slane %v1814, 5
      %v1817 = vor.u32 %v1813, %v1816
      %v1818 = vrot.slane %v1817, 4
      %v1820 = vshll.u32 %v1795, 16
      %v1822 = vrot.slane %v1820, 5
      %v1823 = vsel %vm564, %v1818, %v1822
      %v1825 = vshrl.u32 %v1796, 16
      %v1827 = vrot.slane %v1825, 4
      %v1828 = vshll.u32 %v1796, 16
      %v1830 = vrot.slane %v1828, 5
      %v1831 = vor.u32 %v1827, %v1830
      %v1832 = vrot.slane %v1831, 4
      %v1834 = vshll.u32 %v1797, 16
      %v1836 = vrot.slane %v1834, 5
      %v1837 = vsel %vm564, %v1832, %v1836
      %v1839 = vshrl.u32 %v1798, 16
      %v1841 = vrot.slane %v1839, 4
      %v1842 = vshll.u32 %v1798, 16
      %v1844 = vrot.slane %v1842, 5
      %v1845 = vor.u32 %v1841, %v1844
      %v1846 = vrot.slane %v1845, 4
      %v1848 = vshll.u32 %v1799, 16
      %v1850 = vrot.slane %v1848, 5
      %v1851 = vsel %vm564, %v1846, %v1850
      %v1853 = vshrl.u32 %v1800, 16
      %v1855 = vrot.slane %v1853, 4
      %v1856 = vshll.u32 %v1800, 16
      %v1858 = vrot.slane %v1856, 5
      %v1859 = vor.u32 %v1855, %v1858
      %v1860 = vrot.slane %v1859, 4
      %v1862 = vshll.u32 %v1801, 16
      %v1864 = vrot.slane %v1862, 5
      %v1865 = vsel %vm564, %v1860, %v1864
      %v1867 = vshrl.u32 %v1802, 16
      %v1869 = vrot.slane %v1867, 4
      %v1870 = vshll.u32 %v1802, 16
      %v1872 = vrot.slane %v1870, 5
      %v1873 = vor.u32 %v1869, %v1872
      %v1874 = vrot.slane %v1873, 4
      %v1876 = vshll.u32 %v1803, 16
      %v1878 = vrot.slane %v1876, 5
      %v1879 = vsel %vm564, %v1874, %v1878
      %v1881 = vshrl.u32 %v1804, 16
      %v1883 = vrot.slane %v1881, 4
      %v1884 = vshll.u32 %v1804, 16
      %v1886 = vrot.slane %v1884, 5
      %v1887 = vor.u32 %v1883, %v1886
      %v1888 = vrot.slane %v1887, 4
      %v1890 = vshll.u32 %v1805, 16
      %v1892 = vrot.slane %v1890, 5
      %v1893 = vsel %vm564, %v1888, %v1892
      %v1895 = vshrl.u32 %v1806, 16
      %v1897 = vrot.slane %v1895, 4
      %v1898 = vshll.u32 %v1806, 16
      %v1900 = vrot.slane %v1898, 5
      %v1901 = vor.u32 %v1897, %v1900
      %v1902 = vrot.slane %v1901, 4
      %v1904 = vshll.u32 %v1807, 16
      %v1906 = vrot.slane %v1904, 5
      %v1907 = vsel %vm564, %v1902, %v1906
      %v1909 = vshrl.u32 %v1808, 16
      %v1911 = vrot.slane %v1909, 4
      %v1912 = vshll.u32 %v1808, 16
      %v1914 = vrot.slane %v1912, 5
      %v1915 = vor.u32 %v1911, %v1914
      %v1916 = vrot.slane %v1915, 4
      %v1918 = vshll.u32 %v1809, 16
      %v1920 = vrot.slane %v1918, 5
      %v1921 = vsel %vm564, %v1916, %v1920
      %s1922 = scalar_lea.vmem %s210, 512
      %v1923 = vld [vmem:[%s1922] sm:$0xf]
      %v1924 = vld [vmem:[%s1922 + $0x4] sm:$0xf]
      %v1925 = vld [vmem:[%s1922 + $0x8] sm:$0xf]
      %v1926 = vld [vmem:[%s1922 + $0xc] sm:$0xf]
      %v1927 = vld [vmem:[%s1922 + $0x10] sm:$0xf]
      %v1928 = vld [vmem:[%s1922 + $0x14] sm:$0xf]
      %v1929 = vld [vmem:[%s1922 + $0x18] sm:$0xf]
      %v1930 = vld [vmem:[%s1922 + $0x1c] sm:$0xf]
      %v1931 = vld [vmem:[%s1922 + $0x20] sm:$0xf]
      %v1932 = vld [vmem:[%s1922 + $0x24] sm:$0xf]
      %v1933 = vld [vmem:[%s1922 + $0x28] sm:$0xf]
      %v1934 = vld [vmem:[%s1922 + $0x2c] sm:$0xf]
      %v1935 = vld [vmem:[%s1922 + $0x30] sm:$0xf]
      %v1936 = vld [vmem:[%s1922 + $0x34] sm:$0xf]
      %v1937 = vld [vmem:[%s1922 + $0x38] sm:$0xf]
      %v1938 = vld [vmem:[%s1922 + $0x3c] sm:$0xf]
      %v1939 = vunpack.c.l.b16 %v1823
      %v1940 = vunpack.c.l.b16 %v1837
      %v1941 = vunpack.c.l.b16 %v1851
      %v1942 = vunpack.c.l.b16 %v1865
      %v1943 = vunpack.c.l.b16 %v1879
      %v1944 = vunpack.c.l.b16 %v1893
      %v1945 = vunpack.c.l.b16 %v1907
      %v1946 = vunpack.c.l.b16 %v1921
      %v1947 = vpack.c.b16 %v1940, %v1939
      %v1948 = vpack.c.b16 %v1942, %v1941
      %v1949 = vpack.c.b16 %v1944, %v1943
      %v1950 = vpack.c.b16 %v1946, %v1945
      %v1971 = vunpack.c.l.b16 %v1923
      %v1972 = vunpack.c.l.b16 %v1924
      %v1973 = vunpack.c.l.b16 %v1925
      %v1974 = vunpack.c.l.b16 %v1926
      %v1975 = vunpack.c.l.b16 %v1927
      %v1976 = vunpack.c.l.b16 %v1928
      %v1977 = vunpack.c.l.b16 %v1929
      %v1978 = vunpack.c.l.b16 %v1930
      %v1979 = vunpack.c.l.b16 %v1931
      %v1980 = vunpack.c.l.b16 %v1932
      %v1981 = vunpack.c.l.b16 %v1933
      %v1982 = vunpack.c.l.b16 %v1934
      %v1983 = vunpack.c.l.b16 %v1935
      %v1984 = vunpack.c.l.b16 %v1936
      %v1985 = vunpack.c.l.b16 %v1937
      %v1986 = vunpack.c.l.b16 %v1938
      %v1987 = vpack.c.b16 %v1972, %v1971
      %v1988 = vpack.c.b16 %v1974, %v1973
      %v1989 = vpack.c.b16 %v1976, %v1975
      %v1990 = vpack.c.b16 %v1978, %v1977
      %v1991 = vpack.c.b16 %v1980, %v1979
      %v1992 = vpack.c.b16 %v1982, %v1981
      %v1993 = vpack.c.b16 %v1984, %v1983
      %v1994 = vpack.c.b16 %v1986, %v1985
      %2003 = vmatprep.subr.bf16.mxu0 0
      %2004 = vmatpush1.bf16.msra.mxu0 %v1987
      %2005 = vmatprep.subr.bf16.mxu0 0
      %2006 = vmatpush1.bf16.msra.mxu0 %v1988
      %2007 = vmatprep.subr.bf16.mxu0 0
      %2008 = vmatpush1.bf16.msra.mxu0 %v1989
      %2009 = vmatprep.subr.bf16.mxu0 0
      %2010 = vmatpush1.bf16.msra.mxu0 %v1990
      %2011 = vmatprep.subr.bf16.mxu0 0
      %2012 = vmatpush1.bf16.msra.mxu0 %v1991
      %2013 = vmatprep.subr.bf16.mxu0 0
      %2014 = vmatpush1.bf16.msra.mxu0 %v1992
      %2015 = vmatprep.subr.bf16.mxu0 0
      %2016 = vmatpush1.bf16.msra.mxu0 %v1993
      %2017 = vmatprep.subr.bf16.mxu0 0
      %2018 = vmatpush1.bf16.msra.mxu0 %v1994
      %2019 = vmatprep.subr.bf16.mxu0 0
      %2020 = vmatpush1.bf16.msra.mxu0 0
      %2021 = vmatprep.subr.bf16.mxu0 0
      %2022 = vmatpush1.bf16.msra.mxu0 0
      %2023 = vmatprep.subr.bf16.mxu0 0
      %2024 = vmatpush1.bf16.msra.mxu0 0
      %2025 = vmatprep.subr.bf16.mxu0 0
      %2026 = vmatpush1.bf16.msra.mxu0 0
      %2027 = vmatprep.subr.bf16.mxu0 0
      %2028 = vmatpush1.bf16.msra.mxu0 0
      %2029 = vmatprep.subr.bf16.mxu0 0
      %2030 = vmatpush1.bf16.msra.mxu0 0
      %2031 = vmatprep.subr.bf16.mxu0 0
      %2032 = vmatpush1.bf16.msra.mxu0 0
      %2033 = vmatprep.subr.bf16.mxu0 0
      %2034 = vmatpush1.bf16.msra.mxu0 0
      %2035 = vmatprep.mubr.bf16.mxu0 0
      %2036 = vmatmul.mubr.bf16.gmra.mrb[0].mxu0 %v1947
      %v2037 = vpop.f32.mrb[0].mxu0
      %v2038 = vadd.f32 0.0, %v2037
      %v2039 = vpop.f32.mrb[0].mxu0
      %v2040 = vpop.f32.mrb[0].mxu0
      %v2041 = vadd.f32 0.0, %v2040
      %v2042 = vpop.f32.mrb[0].mxu0
      %2043 = vmatprep.mubr.bf16.mxu0 0
      %2044 = vmatmul.mubr.bf16.gmra.mrb[0].mxu0 %v1948
      %v2045 = vpop.f32.mrb[0].mxu0
      %v2046 = vadd.f32 0.0, %v2045
      %v2047 = vpop.f32.mrb[0].mxu0
      %v2048 = vpop.f32.mrb[0].mxu0
      %v2049 = vadd.f32 0.0, %v2048
      %v2050 = vpop.f32.mrb[0].mxu0
      %2051 = vmatprep.mubr.bf16.mxu0 0
      %2052 = vmatmul.mubr.bf16.gmra.mrb[0].mxu0 %v1949
      %v2053 = vpop.f32.mrb[0].mxu0
      %v2054 = vadd.f32 0.0, %v2053
      %v2055 = vpop.f32.mrb[0].mxu0
      %v2056 = vpop.f32.mrb[0].mxu0
      %v2057 = vadd.f32 0.0, %v2056
      %v2058 = vpop.f32.mrb[0].mxu0
      %2059 = vmatprep.mubr.bf16.mxu0 0
      %2060 = vmatmul.mubr.bf16.gmra.mrb[0].mxu0 %v1950
      %v2061 = vpop.f32.mrb[0].mxu0
      %v2062 = vadd.f32 0.0, %v2061
      %v2063 = vpop.f32.mrb[0].mxu0
      %v2064 = vpop.f32.mrb[0].mxu0
      %v2065 = vadd.f32 0.0, %v2064
      %v2066 = vpop.f32.mrb[0].mxu0
      %2067 = vdwg.mxu0
      %v2068 = vadd.f32 %v1786, %v2038
      %v2069 = vadd.f32 %v1787, %v2041
      %v2070 = vadd.f32 %v1788, %v2046
      %v2071 = vadd.f32 %v1789, %v2049
      %v2072 = vadd.f32 %v1790, %v2054
      %v2073 = vadd.f32 %v1791, %v2057
      %v2074 = vadd.f32 %v1792, %v2062
      %v2075 = vadd.f32 %v1793, %v2065
      %v2076 = vld [vmem:[%s213] sm:$0x1]
      %v2078 = vlaneseq
      %v2079 = vshrl.u32 %v2078, 7
      %v2080 = vsub.s32 0, %v2079
      %v2081 = vrot.slane %v2076, %v2080
      %v2083 = vadd.f32 %v2068, %v2081
      %v2084 = vadd.f32 %v2069, %v2081
      %v2085 = vadd.f32 %v2070, %v2081
      %v2086 = vadd.f32 %v2071, %v2081
      %v2087 = vadd.f32 %v2072, %v2081
      %v2088 = vadd.f32 %v2073, %v2081
      %v2089 = vadd.f32 %v2074, %v2081
      %v2090 = vadd.f32 %v2075, %v2081
      %v2091 = vmax.f32 %v2083, 0.0
      %v2092 = vmax.f32 %v2084, 0.0
      %v2093 = vmax.f32 %v2085, 0.0
      %v2094 = vmax.f32 %v2086, 0.0
      %v2095 = vmax.f32 %v2087, 0.0
      %v2096 = vmax.f32 %v2088, 0.0
      %v2097 = vmax.f32 %v2089, 0.0
      %v2098 = vmax.f32 %v2090, 0.0
      %v2099 = vpack.c.bf16 %v2092, %v2091
      %v2100 = vpack.c.bf16 %v2094, %v2093
      %v2101 = vpack.c.bf16 %v2096, %v2095
      %v2102 = vpack.c.bf16 %v2098, %v2097
      %2103 = vst [vmem:[%s221] sm:$0xf] 0
      %2104 = vst [vmem:[%s221 + $0x4] sm:$0x1] 0
      %2105 = vst [vmem:[%s221 + $0x8] sm:$0xf] 0
      %2106 = vst [vmem:[%s221 + $0xc] sm:$0x1] 0
      %2107 = vst [vmem:[%s221 + $0x10] sm:$0xf] 0
      %2108 = vst [vmem:[%s221 + $0x14] sm:$0x1] 0
      %2109 = vst [vmem:[%s221 + $0x18] sm:$0xf] 0
      %2110 = vst [vmem:[%s221 + $0x1c] sm:$0x1] 0
      %2111 = vst [vmem:[%s221 + $0x20] sm:$0xf] 0
      %2112 = vst [vmem:[%s221 + $0x24] sm:$0x1] 0
      %2113 = vst [vmem:[%s221 + $0x28] sm:$0xf] 0
      %2114 = vst [vmem:[%s221 + $0x2c] sm:$0x1] 0
      %2115 = vst [vmem:[%s221 + $0x30] sm:$0xf] 0
      %2116 = vst [vmem:[%s221 + $0x34] sm:$0x1] 0
      %2117 = vst [vmem:[%s221 + $0x38] sm:$0xf] 0
      %2118 = vst [vmem:[%s221 + $0x3c] sm:$0x1] 0
      %2119 = vst [vmem:[%s221 + $0x40] sm:$0xf] 0
      %2120 = vst [vmem:[%s221 + $0x44] sm:$0x1] 0
      %2121 = vst [vmem:[%s221 + $0x48] sm:$0xf] 0
      %2122 = vst [vmem:[%s221 + $0x4c] sm:$0x1] 0
      %v2127 = vunpack.c.l.b16 %v2099
      %v2128 = vunpack.c.h.b16 %v2099
      %v2129 = vunpack.c.l.b16 %v2100
      %v2130 = vunpack.c.h.b16 %v2100
      %v2131 = vunpack.c.l.b16 %v2101
      %v2132 = vunpack.c.h.b16 %v2101
      %v2133 = vunpack.c.l.b16 %v2102
      %v2134 = vunpack.c.h.b16 %v2102
      %v2135 = vpack.c.b16 %v2127, %v2127
      %v2136 = vpack.c.b16 %v2128, %v2128
      %v2137 = vpack.c.b16 %v2129, %v2129
      %v2138 = vpack.c.b16 %v2130, %v2130
      %v2139 = vpack.c.b16 %v2131, %v2131
      %v2140 = vpack.c.b16 %v2132, %v2132
      %v2141 = vpack.c.b16 %v2133, %v2133
      %v2142 = vpack.c.b16 %v2134, %v2134
      %v2144 = vshrl.u32 %v2135, 16
      %v2146 = vrot.slane %v2144, 7
      %v2147 = vshll.u32 %v2135, 16
      %v2149 = vor.u32 %v2146, %v2147
      %v2150 = vrot.slane %v2146, 4
      %v2152 = vshrl.u32 %v2136, 16
      %v2154 = vrot.slane %v2152, 7
      %v2155 = vshll.u32 %v2136, 16
      %v2157 = vor.u32 %v2154, %v2155
      %v2158 = vrot.slane %v2154, 4
      %v2160 = vshrl.u32 %v2137, 16
      %v2162 = vrot.slane %v2160, 7
      %v2163 = vshll.u32 %v2137, 16
      %v2165 = vor.u32 %v2162, %v2163
      %v2166 = vrot.slane %v2162, 4
      %v2168 = vshrl.u32 %v2138, 16
      %v2170 = vrot.slane %v2168, 7
      %v2171 = vshll.u32 %v2138, 16
      %v2173 = vor.u32 %v2170, %v2171
      %v2174 = vrot.slane %v2170, 4
      %v2176 = vshrl.u32 %v2139, 16
      %v2178 = vrot.slane %v2176, 7
      %v2179 = vshll.u32 %v2139, 16
      %v2181 = vor.u32 %v2178, %v2179
      %v2182 = vrot.slane %v2178, 4
      %v2184 = vshrl.u32 %v2140, 16
      %v2186 = vrot.slane %v2184, 7
      %v2187 = vshll.u32 %v2140, 16
      %v2189 = vor.u32 %v2186, %v2187
      %v2190 = vrot.slane %v2186, 4
      %v2192 = vshrl.u32 %v2141, 16
      %v2194 = vrot.slane %v2192, 7
      %v2195 = vshll.u32 %v2141, 16
      %v2197 = vor.u32 %v2194, %v2195
      %v2198 = vrot.slane %v2194, 4
      %v2200 = vshrl.u32 %v2142, 16
      %v2202 = vrot.slane %v2200, 7
      %v2203 = vshll.u32 %v2142, 16
      %v2205 = vor.u32 %v2202, %v2203
      %v2206 = vrot.slane %v2202, 4
      %s2223 = scalar_lea.vmem %s221, 8
      %vm2224 = vcmask 1043456
      %vm2225 = vsmask.f32 7938
      %vm2226 = vmand %vm2224, %vm2225
      %v2227 = vld [vmem:[%s2223] sm:$0xf]
      %v2228 = vsel %vm2226, %v2149, %v2227
      %2229 = vst [vmem:[%s2223] sm:$0xf] %v2228
      %vm2230 = vcmask 1040384
      %vm2231 = vsmask.f32 256
      %vm2232 = vmand %vm2230, %vm2231
      %v2233 = vld [vmem:[%s2223 + $0x4] sm:$0x1]
      %v2234 = vsel %vm2232, %v2150, %v2233
      %2235 = vst [vmem:[%s2223 + $0x4] sm:$0x1] %v2234
      %v2236 = vld [vmem:[%s2223 + $0x8] sm:$0xf]
      %v2237 = vsel %vm2226, %v2157, %v2236
      %2238 = vst [vmem:[%s2223 + $0x8] sm:$0xf] %v2237
      %v2239 = vld [vmem:[%s2223 + $0xc] sm:$0x1]
      %v2240 = vsel %vm2232, %v2158, %v2239
      %2241 = vst [vmem:[%s2223 + $0xc] sm:$0x1] %v2240
      %v2242 = vld [vmem:[%s2223 + $0x10] sm:$0xf]
      %v2243 = vsel %vm2226, %v2165, %v2242
      %2244 = vst [vmem:[%s2223 + $0x10] sm:$0xf] %v2243
      %v2245 = vld [vmem:[%s2223 + $0x14] sm:$0x1]
      %v2246 = vsel %vm2232, %v2166, %v2245
      %2247 = vst [vmem:[%s2223 + $0x14] sm:$0x1] %v2246
      %v2248 = vld [vmem:[%s2223 + $0x18] sm:$0xf]
      %v2249 = vsel %vm2226, %v2173, %v2248
      %2250 = vst [vmem:[%s2223 + $0x18] sm:$0xf] %v2249
      %v2251 = vld [vmem:[%s2223 + $0x1c] sm:$0x1]
      %v2252 = vsel %vm2232, %v2174, %v2251
      %2253 = vst [vmem:[%s2223 + $0x1c] sm:$0x1] %v2252
      %v2254 = vld [vmem:[%s2223 + $0x20] sm:$0xf]
      %v2255 = vsel %vm2226, %v2181, %v2254
      %2256 = vst [vmem:[%s2223 + $0x20] sm:$0xf] %v2255
      %v2257 = vld [vmem:[%s2223 + $0x24] sm:$0x1]
      %v2258 = vsel %vm2232, %v2182, %v2257
      %2259 = vst [vmem:[%s2223 + $0x24] sm:$0x1] %v2258
      %v2260 = vld [vmem:[%s2223 + $0x28] sm:$0xf]
      %v2261 = vsel %vm2226, %v2189, %v2260
      %2262 = vst [vmem:[%s2223 + $0x28] sm:$0xf] %v2261
      %v2263 = vld [vmem:[%s2223 + $0x2c] sm:$0x1]
      %v2264 = vsel %vm2232, %v2190, %v2263
      %2265 = vst [vmem:[%s2223 + $0x2c] sm:$0x1] %v2264
      %v2266 = vld [vmem:[%s2223 + $0x30] sm:$0xf]
      %v2267 = vsel %vm2226, %v2197, %v2266
      %2268 = vst [vmem:[%s2223 + $0x30] sm:$0xf] %v2267
      %v2269 = vld [vmem:[%s2223 + $0x34] sm:$0x1]
      %v2270 = vsel %vm2232, %v2198, %v2269
      %2271 = vst [vmem:[%s2223 + $0x34] sm:$0x1] %v2270
      %v2272 = vld [vmem:[%s2223 + $0x38] sm:$0xf]
      %v2273 = vsel %vm2226, %v2205, %v2272
      %2274 = vst [vmem:[%s2223 + $0x38] sm:$0xf] %v2273
      %v2275 = vld [vmem:[%s2223 + $0x3c] sm:$0x1]
      %v2276 = vsel %vm2232, %v2206, %v2275
      %2277 = vst [vmem:[%s2223 + $0x3c] sm:$0x1] %v2276
      %p2278 = scmp.lt.s32.totalorder %s18, 1
      %s2279 = scalar_select %p2278, %s18, 1
      %p2280 = scmp.lt.s32.totalorder %s19, 0
      %s2281 = scalar_select %p2280, %s19, 0
      %s2282 = smul.addr %s2279, 20
      %s2283 = sadd.s32 %s2281, %s2282
      %s2284 = smul.addr %s2283, 4
      %s2285 = scalar_lea.vmem %s3, %s2284
      // Predicated region
      $region33: #{basic_block_forward.3} parent=31 // pred_check
        %p2286 = pneg %p124
      $region34: #{basic_block_forward.3} parent=31 // pred_check_branch
        %2288 = sbr.rel (%p2286) target = $region36
      $region35: #{basic_block_forward.3} parent=31 // pred_region
        _
      $region36: #{basic_block_forward.3} parent=31 // pred_fallthru
        _
    $region32: #{basic_block_forward.3} parent=5 // pred_fallthru
      _
    %p2289 = scmp.le.s32.totalorder 2, %s9
    // Predicated region
    $region37: #{basic_block_forward.3} parent=5 // pred_check
      %p2290 = pneg %p2289
    $region38: #{basic_block_forward.3} parent=5 // pred_check_branch
      %2292 = sbr.rel (%p2290) target = $region40
    $region39: #{basic_block_forward.3} parent=5 // pred_region
      %s2293 = ssub.s32 %s9, 2
      // Predicated region
      $region41: #{basic_block_forward.3} parent=39 // pred_check
        %p2294 = pneg %p130
      $region42: #{basic_block_forward.3} parent=39 // pred_check_branch
        %2296 = sbr.rel (%p2294) target = $region44
      $region43: #{basic_block_forward.3} parent=39 // pred_region
        %p2297 = scmp.lt.s32.totalorder %s20, 1
        %s2298 = scalar_select %p2297, %s20, 1
        %p2299 = scmp.lt.s32.totalorder %s21, 0
        %s2300 = scalar_select %p2299, %s21, 0
        %s2301 = smul.addr %s2298, 20
        %s2302 = sadd.s32 %s2300, %s2301
        %s2303 = smul.addr %s2302, 4
        %s2304 = scalar_lea.vmem %s3, %s2303
      $region44: #{basic_block_forward.3} parent=39 // pred_fallthru
        _
    $region40: #{basic_block_forward.3} parent=5 // pred_fallthru
      _
  $region6: #{basic_block_forward.3} parent=0 // loop_footer
    %s13 = sadd.s32 1, %s9
  $region7: #{basic_block_forward.3} parent=0 // loop_footer_branch
    %8 = sbr.rel target = $region3
  $region8: #{basic_block_forward.3} parent=0 // loop_exit
    _

// kernel: basic_block_forward.5
$region0: #{basic_block_forward.5}
  #allocation0 [shape = 'u32[]', space=smem, size = 0x4, offset = 0x4, fixed_abs, tag = 'smem constant byte address 0x4 - core index']
  #allocation1 [shape = 'u32[144,128]{1,0:T(1,128)}', space=vmem, size = 0x12000, scoped, tag = 'internal scratch']
  %s0 = inlined_call_operand.vmem [shape: bf16[2,10,10,128], index: 0, kind: input, shape index: {}]
  %s1 = inlined_call_operand.vmem [shape: bf16[9,128,128], index: 1, kind: input, shape index: {}]
  %s2 = inlined_call_operand.vmem [shape: f32[1,128], index: 2, kind: input, shape index: {}]
  %s3 = inlined_call_operand.vmem [shape: bf16[2,8,8,128], index: 3, kind: input, shape index: {}]
  %s4 = inlined_call_operand.vmem [shape: f32[2,8,8,128], index: 4, kind: output, shape index: {}]
  %s5 = sld [smem:[#allocation0]]
  $region49: #{basic_block_forward.5} parent=0
    _
  %s7 = ssub.s32 1, %s5
  %s8 = scalar_select 0, %s7, %s5
  loop: start=0, step=1, limit=4
  $region2: #{basic_block_forward.5} parent=0 // loop_pre_header
    _
  $region3: #{basic_block_forward.5} parent=0 // loop_header
    %s10 = sphi 0, %s14
    %p11 = scmp.ge.s32.totalorder %s10, 4
    %s17 = sphi 0, %s29
    %s18 = sphi 0, %s25
    %s19 = sphi 0, %s17
    %s20 = sphi 0, %s18
    %s21 = sphi 0, %s19
    %s22 = sphi 0, %s20
    %s32 = sphi 0, %s34
    %s35 = sphi 0, %s32
    %s36 = sphi 0, %s35
    %s52 = sphi 0, %s36
    %s58 = sphi 0, %s60
    %s61 = sphi 0, %s58
    %s62 = sphi 0, %s61
    %s78 = sphi 0, %s62
    %s84 = sphi 0, %s86
    %s87 = sphi 0, %s84
    %s88 = sphi 0, %s87
    %s104 = sphi 0, %s88
    %s112 = sphi 0, %s114
    %s115 = sphi 0, %s112
    %s116 = sphi 0, %s115
    %s132 = sphi 0, %s116
    %s140 = sphi 0, %s142
    %s143 = sphi 0, %s140
    %s144 = sphi 0, %s143
    %s160 = sphi 0, %s144
  $region4: #{basic_block_forward.5} parent=0 // loop_header_branch
    %13 = sbr.rel (%p11) target = $region8
  $region5: #{basic_block_forward.5} parent=0 // loop_body
    %s15 = ssub.s32 %s10, 1
    %s16 = ssub.s32 %s10, 2
    %s23 = sadd.s32 1, %s18
    %p24 = scmp.ge.s32.totalorder %s23, 1
    %s25 = scalar_select %p24, 0, %s23
    %s26 = sadd.s32 1, %s17
    %s27 = scalar_select %p24, %s26, %s17
    %p28 = scmp.ge.s32.totalorder %s27, 2
    %s29 = scalar_select %p28, 0, %s27
    %s30 = ssub.s32 %s17, %s29
    %p31 = scmp.eq.s32.totalorder %s30, 0
    %s33 = sadd.s32 %s32, 1
    %s34 = scalar_select %p31, %s32, %s33
    %p37 = pneg %p31
    %p38 = scmp.eq.s32.totalorder %s10, 1
    %p39 = por %p37, %p38
    %p40 = scmp.ne.s32.totalorder %s32, %s35
    %p41 = scmp.eq.s32.totalorder %s10, 0
    %p42 = por %p40, %p41
    %p43 = scmp.ne.s32.totalorder %s32, %s35
    %p44 = scmp.eq.s32.totalorder %s15, 1
    %p45 = por %p43, %p44
    %p46 = scmp.ne.s32.totalorder %s35, %s36
    %p47 = scmp.eq.s32.totalorder %s15, 0
    %p48 = por %p46, %p47
    %p49 = scmp.ne.s32.totalorder %s35, %s36
    %p50 = scmp.eq.s32.totalorder %s16, 1
    %p51 = por %p49, %p50
    %p53 = scmp.ne.s32.totalorder %s36, %s52
    %p54 = scmp.eq.s32.totalorder %s16, 0
    %p55 = por %p53, %p54
    %s56 = ssub.s32 %s18, %s25
    %p57 = scmp.eq.s32.totalorder %s56, 0
    %s59 = sadd.s32 %s58, 1
    %s60 = scalar_select %p57, %s58, %s59
    %p63 = pneg %p57
    %p64 = scmp.eq.s32.totalorder %s10, 1
    %p65 = por %p63, %p64
    %p66 = scmp.ne.s32.totalorder %s58, %s61
    %p67 = scmp.eq.s32.totalorder %s10, 0
    %p68 = por %p66, %p67
    %p69 = scmp.ne.s32.totalorder %s58, %s61
    %p70 = scmp.eq.s32.totalorder %s15, 1
    %p71 = por %p69, %p70
    %p72 = scmp.ne.s32.totalorder %s61, %s62
    %p73 = scmp.eq.s32.totalorder %s15, 0
    %p74 = por %p72, %p73
    %p75 = scmp.ne.s32.totalorder %s61, %s62
    %p76 = scmp.eq.s32.totalorder %s16, 1
    %p77 = por %p75, %p76
    %p79 = scmp.ne.s32.totalorder %s62, %s78
    %p80 = scmp.eq.s32.totalorder %s16, 0
    %p81 = por %p79, %p80
    %s82 = ssub.s32 %s18, %s25
    %p83 = scmp.eq.s32.totalorder %s82, 0
    %s85 = sadd.s32 %s84, 1
    %s86 = scalar_select %p83, %s84, %s85
    %p89 = pneg %p83
    %p90 = scmp.eq.s32.totalorder %s10, 1
    %p91 = por %p89, %p90
    %p92 = scmp.ne.s32.totalorder %s84, %s87
    %p93 = scmp.eq.s32.totalorder %s10, 0
    %p94 = por %p92, %p93
    %p95 = scmp.ne.s32.totalorder %s84, %s87
    %p96 = scmp.eq.s32.totalorder %s15, 1
    %p97 = por %p95, %p96
    %p98 = scmp.ne.s32.totalorder %s87, %s88
    %p99 = scmp.eq.s32.totalorder %s15, 0
    %p100 = por %p98, %p99
    %p101 = scmp.ne.s32.totalorder %s87, %s88
    %p102 = scmp.eq.s32.totalorder %s16, 1
    %p103 = por %p101, %p102
    %p105 = scmp.ne.s32.totalorder %s88, %s104
    %p106 = scmp.eq.s32.totalorder %s16, 0
    %p107 = por %p105, %p106
    %s108 = ssub.s32 %s17, %s29
    %s109 = ssub.s32 %s18, %s25
    %s110 = sor.u32 %s108, %s109
    %p111 = scmp.eq.s32.totalorder %s110, 0
    %s113 = sadd.s32 %s112, 1
    %s114 = scalar_select %p111, %s112, %s113
    %p117 = pneg %p111
    %p118 = scmp.eq.s32.totalorder %s10, 1
    %p119 = por %p117, %p118
    %p120 = scmp.ne.s32.totalorder %s112, %s115
    %p121 = scmp.eq.s32.totalorder %s10, 0
    %p122 = por %p120, %p121
    %p123 = scmp.ne.s32.totalorder %s112, %s115
    %p124 = scmp.eq.s32.totalorder %s15, 1
    %p125 = por %p123, %p124
    %p126 = scmp.ne.s32.totalorder %s115, %s116
    %p127 = scmp.eq.s32.totalorder %s15, 0
    %p128 = por %p126, %p127
    %p129 = scmp.ne.s32.totalorder %s115, %s116
    %p130 = scmp.eq.s32.totalorder %s16, 1
    %p131 = por %p129, %p130
    %p133 = scmp.ne.s32.totalorder %s116, %s132
    %p134 = scmp.eq.s32.totalorder %s16, 0
    %p135 = por %p133, %p134
    %s136 = ssub.s32 %s17, %s29
    %s137 = ssub.s32 %s18, %s25
    %s138 = sor.u32 %s136, %s137
    %p139 = scmp.eq.s32.totalorder %s138, 0
    %s141 = sadd.s32 %s140, 1
    %s142 = scalar_select %p139, %s140, %s141
    %p145 = pneg %p139
    %p146 = scmp.eq.s32.totalorder %s10, 1
    %p147 = por %p145, %p146
    %p148 = scmp.ne.s32.totalorder %s140, %s143
    %p149 = scmp.eq.s32.totalorder %s10, 0
    %p150 = por %p148, %p149
    %p151 = scmp.ne.s32.totalorder %s140, %s143
    %p152 = scmp.eq.s32.totalorder %s15, 1
    %p153 = por %p151, %p152
    %p154 = scmp.ne.s32.totalorder %s143, %s144
    %p155 = scmp.eq.s32.totalorder %s15, 0
    %p156 = por %p154, %p155
    %p157 = scmp.ne.s32.totalorder %s143, %s144
    %p158 = scmp.eq.s32.totalorder %s16, 1
    %p159 = por %p157, %p158
    %p161 = scmp.ne.s32.totalorder %s144, %s160
    %p162 = scmp.eq.s32.totalorder %s16, 0
    %p163 = por %p161, %p162
    %p164 = scmp.le.s32.totalorder 1, %s10
    %p165 = scmp.lt.s32.totalorder %s10, 3
    %p166 = pnand %p164, %p165
    %p167 = pneg %p166
    // Predicated region
    $region9: #{basic_block_forward.5} parent=5 // pred_check
      _
    $region10: #{basic_block_forward.5} parent=5 // pred_check_branch
      %169 = sbr.rel (%p166) target = $region12
    $region11: #{basic_block_forward.5} parent=5 // pred_region
      %s170 = ssub.s32 %s10, 1
      // Predicated region
      $region13: #{basic_block_forward.5} parent=11 // pred_check
        %p171 = pneg %p74
      $region14: #{basic_block_forward.5} parent=11 // pred_check_branch
        %173 = sbr.rel (%p171) target = $region16
      $region15: #{basic_block_forward.5} parent=11 // pred_region
        %p174 = scmp.lt.s32.totalorder %s20, 0
        %s175 = scalar_select %p174, %s20, 0
        %s176 = smul.addr %s175, 4
        %s177 = scalar_lea.vmem %s1, %s176
      $region16: #{basic_block_forward.5} parent=11 // pred_fallthru
        _
      // Predicated region
      $region17: #{basic_block_forward.5} parent=11 // pred_check
        %p178 = pneg %p100
      $region18: #{basic_block_forward.5} parent=11 // pred_check_branch
        %180 = sbr.rel (%p178) target = $region20
      $region19: #{basic_block_forward.5} parent=11 // pred_region
        %p181 = scmp.lt.s32.totalorder %s20, 0
        %s182 = scalar_select %p181, %s20, 0
        %s183 = scalar_lea.vmem %s2, %s182
      $region20: #{basic_block_forward.5} parent=11 // pred_fallthru
        _
    $region12: #{basic_block_forward.5} parent=5 // pred_fallthru
      _
    %p184 = scmp.lt.s32.totalorder %s10, 2
    // Predicated region
    $region21: #{basic_block_forward.5} parent=5 // pred_check
      %p185 = pneg %p184
    $region22: #{basic_block_forward.5} parent=5 // pred_check_branch
      %187 = sbr.rel (%p185) target = $region24
    $region23: #{basic_block_forward.5} parent=5 // pred_region
      // Predicated region
      $region25: #{basic_block_forward.5} parent=23 // pred_check
        %p188 = pneg %p42
      $region26: #{basic_block_forward.5} parent=23 // pred_check_branch
        %190 = sbr.rel (%p188) target = $region28
      $region27: #{basic_block_forward.5} parent=23 // pred_region
        %p191 = scmp.lt.s32.totalorder %s17, 1
        %s192 = scalar_select %p191, %s17, 1
        %s193 = smul.addr %s192, 20
        %s194 = smul.addr %s193, 4
        %s195 = scalar_lea.vmem %s0, %s194
      $region28: #{basic_block_forward.5} parent=23 // pred_fallthru
        _
      // Predicated region
      $region29: #{basic_block_forward.5} parent=23 // pred_check
        %p196 = pneg %p122
      $region30: #{basic_block_forward.5} parent=23 // pred_check_branch
        %198 = sbr.rel (%p196) target = $region32
      $region31: #{basic_block_forward.5} parent=23 // pred_region
        %p199 = scmp.lt.s32.totalorder %s17, 1
        %s200 = scalar_select %p199, %s17, 1
        %p201 = scmp.lt.s32.totalorder %s18, 0
        %s202 = scalar_select %p201, %s18, 0
        %s203 = smul.addr %s200, 8
        %s204 = sadd.s32 %s202, %s203
        %s205 = smul.addr %s204, 4
        %s206 = scalar_lea.vmem %s3, %s205
      $region32: #{basic_block_forward.5} parent=23 // pred_fallthru
        _
    $region24: #{basic_block_forward.5} parent=5 // pred_fallthru
      _
    %p207 = scmp.le.s32.totalorder 1, %s10
    %p208 = scmp.lt.s32.totalorder %s10, 3
    %p209 = pnand %p207, %p208
    %p210 = pneg %p209
    // Predicated region
    $region33: #{basic_block_forward.5} parent=5 // pred_check
      _
    $region34: #{basic_block_forward.5} parent=5 // pred_check_branch
      %212 = sbr.rel (%p209) target = $region36
    $region35: #{basic_block_forward.5} parent=5 // pred_region
      %s213 = ssub.s32 %s10, 1
      %p214 = scmp.lt.s32.totalorder %s19, 1
      %s215 = scalar_select %p214, %s19, 1
      %s216 = smul.addr %s215, 20
      %s217 = smul.addr %s216, 4
      %s218 = scalar_lea.vmem %s0, %s217
      %p219 = pneg %p48
      %p220 = pneg %p45
      %p221 = scmp.lt.s32.totalorder %s20, 0
      %s222 = scalar_select %p221, %s20, 0
      %s223 = smul.addr %s222, 4
      %s224 = scalar_lea.vmem %s1, %s223
      %p225 = pneg %p74
      %p226 = pneg %p71
      %p227 = scmp.lt.s32.totalorder %s20, 0
      %s228 = scalar_select %p227, %s20, 0
      %s229 = scalar_lea.vmem %s2, %s228
      %p230 = pneg %p100
      %p231 = pneg %p97
      %p232 = scmp.lt.s32.totalorder %s19, 1
      %s233 = scalar_select %p232, %s19, 1
      %p234 = scmp.lt.s32.totalorder %s20, 0
      %s235 = scalar_select %p234, %s20, 0
      %s236 = smul.addr %s233, 8
      %s237 = sadd.s32 %s235, %s236
      %s238 = smul.addr %s237, 4
      %s239 = scalar_lea.vmem %s3, %s238
      %p240 = pneg %p128
      %p241 = pneg %p125
      %p242 = pneg %p156
      %p243 = pneg %p153
      %p244 = scmp.lt.s32.totalorder %s19, 1
      %s245 = scalar_select %p244, %s19, 1
      %p246 = scmp.lt.s32.totalorder %s20, 0
      %s247 = scalar_select %p246, %s20, 0
      %s248 = smul.addr %s245, 8
      %s249 = sadd.s32 %s247, %s248
      %s250 = smul.addr %s249, 8
      %s251 = scalar_lea.vmem %s4, %s250
      %p252 = scmp.lt.s32.totalorder %s19, 1
      %s253 = scalar_select %p252, %s19, 1
      %s254 = smul.addr %s253, 20
      %s255 = smul.addr %s254, 4
      %s256 = scalar_lea.vmem %s0, %s255
      %p257 = scmp.lt.s32.totalorder %s20, 0
      %s258 = scalar_select %p257, %s20, 0
      %s259 = smul.addr %s258, 4
      %s260 = scalar_lea.vmem %s1, %s259
      %p261 = scmp.lt.s32.totalorder %s20, 0
      %s262 = scalar_select %p261, %s20, 0
      %s263 = scalar_lea.vmem %s2, %s262
      %p264 = scmp.lt.s32.totalorder %s19, 1
      %s265 = scalar_select %p264, %s19, 1
      %p266 = scmp.lt.s32.totalorder %s20, 0
      %s267 = scalar_select %p266, %s20, 0
      %s268 = smul.addr %s265, 8
      %s269 = sadd.s32 %s267, %s268
      %s270 = smul.addr %s269, 4
      %s271 = scalar_lea.vmem %s3, %s270
      %p272 = scmp.lt.s32.totalorder %s19, 1
      %s273 = scalar_select %p272, %s19, 1
      %p274 = scmp.lt.s32.totalorder %s20, 0
      %s275 = scalar_select %p274, %s20, 0
      %s276 = smul.addr %s273, 8
      %s277 = sadd.s32 %s275, %s276
      %s278 = smul.addr %s277, 8
      %s279 = scalar_lea.vmem %s4, %s278
      %v281 = vld [vmem:[%s256] sm:$0xf]
      %v282 = vld [vmem:[%s256 + $0x8] sm:$0xf]
      %v283 = vld [vmem:[%s256 + $0x10] sm:$0xf]
      %v284 = vld [vmem:[%s256 + $0x18] sm:$0xf]
      %v285 = vld [vmem:[%s256 + $0x20] sm:$0xf]
      %v286 = vld [vmem:[%s256 + $0x28] sm:$0xf]
      %v287 = vld [vmem:[%s256 + $0x30] sm:$0xf]
      %v288 = vld [vmem:[%s256 + $0x38] sm:$0xf]
      %v289 = vld [vmem:[%s260] sm:$0xf]
      %v290 = vld [vmem:[%s260 + $0x4] sm:$0xf]
      %v291 = vld [vmem:[%s260 + $0x8] sm:$0xf]
      %v292 = vld [vmem:[%s260 + $0xc] sm:$0xf]
      %v293 = vld [vmem:[%s260 + $0x10] sm:$0xf]
      %v294 = vld [vmem:[%s260 + $0x14] sm:$0xf]
      %v295 = vld [vmem:[%s260 + $0x18] sm:$0xf]
      %v296 = vld [vmem:[%s260 + $0x1c] sm:$0xf]
      %v297 = vld [vmem:[%s260 + $0x20] sm:$0xf]
      %v298 = vld [vmem:[%s260 + $0x24] sm:$0xf]
      %v299 = vld [vmem:[%s260 + $0x28] sm:$0xf]
      %v300 = vld [vmem:[%s260 + $0x2c] sm:$0xf]
      %v301 = vld [vmem:[%s260 + $0x30] sm:$0xf]
      %v302 = vld [vmem:[%s260 + $0x34] sm:$0xf]
      %v303 = vld [vmem:[%s260 + $0x38] sm:$0xf]
      %v304 = vld [vmem:[%s260 + $0x3c] sm:$0xf]
      %v305 = vld [vmem:[%s256 + $0x4] sm:$0x1]
      %v306 = vld [vmem:[%s256 + $0xc] sm:$0x1]
      %v307 = vld [vmem:[%s256 + $0x14] sm:$0x1]
      %v308 = vld [vmem:[%s256 + $0x1c] sm:$0x1]
      %v309 = vld [vmem:[%s256 + $0x24] sm:$0x1]
      %v310 = vld [vmem:[%s256 + $0x2c] sm:$0x1]
      %v311 = vld [vmem:[%s256 + $0x34] sm:$0x1]
      %v312 = vld [vmem:[%s256 + $0x3c] sm:$0x1]
      %vm313 = vsmask.f32 3328
      %vm314 = vsmask.f32 7440
      %vm315 = vmor %vm313, %vm314
      %v317 = vshrl.u32 %v281, 16
      %v319 = vrot.slane %v317, 4
      %v320 = vshll.u32 %v281, 16
      %v322 = vrot.slane %v320, 5
      %v323 = vor.u32 %v319, %v322
      %v324 = vrot.slane %v323, 4
      %v326 = vshll.u32 %v305, 16
      %v328 = vrot.slane %v326, 5
      %v329 = vsel %vm315, %v324, %v328
      %v331 = vshrl.u32 %v282, 16
      %v333 = vrot.slane %v331, 4
      %v334 = vshll.u32 %v282, 16
      %v336 = vrot.slane %v334, 5
      %v337 = vor.u32 %v333, %v336
      %v338 = vrot.slane %v337, 4
      %v340 = vshll.u32 %v306, 16
      %v342 = vrot.slane %v340, 5
      %v343 = vsel %vm315, %v338, %v342
      %v345 = vshrl.u32 %v283, 16
      %v347 = vrot.slane %v345, 4
      %v348 = vshll.u32 %v283, 16
      %v350 = vrot.slane %v348, 5
      %v351 = vor.u32 %v347, %v350
      %v352 = vrot.slane %v351, 4
      %v354 = vshll.u32 %v307, 16
      %v356 = vrot.slane %v354, 5
      %v357 = vsel %vm315, %v352, %v356
      %v359 = vshrl.u32 %v284, 16
      %v361 = vrot.slane %v359, 4
      %v362 = vshll.u32 %v284, 16
      %v364 = vrot.slane %v362, 5
      %v365 = vor.u32 %v361, %v364
      %v366 = vrot.slane %v365, 4
      %v368 = vshll.u32 %v308, 16
      %v370 = vrot.slane %v368, 5
      %v371 = vsel %vm315, %v366, %v370
      %v373 = vshrl.u32 %v285, 16
      %v375 = vrot.slane %v373, 4
      %v376 = vshll.u32 %v285, 16
      %v378 = vrot.slane %v376, 5
      %v379 = vor.u32 %v375, %v378
      %v380 = vrot.slane %v379, 4
      %v382 = vshll.u32 %v309, 16
      %v384 = vrot.slane %v382, 5
      %v385 = vsel %vm315, %v380, %v384
      %v387 = vshrl.u32 %v286, 16
      %v389 = vrot.slane %v387, 4
      %v390 = vshll.u32 %v286, 16
      %v392 = vrot.slane %v390, 5
      %v393 = vor.u32 %v389, %v392
      %v394 = vrot.slane %v393, 4
      %v396 = vshll.u32 %v310, 16
      %v398 = vrot.slane %v396, 5
      %v399 = vsel %vm315, %v394, %v398
      %v401 = vshrl.u32 %v287, 16
      %v403 = vrot.slane %v401, 4
      %v404 = vshll.u32 %v287, 16
      %v406 = vrot.slane %v404, 5
      %v407 = vor.u32 %v403, %v406
      %v408 = vrot.slane %v407, 4
      %v410 = vshll.u32 %v311, 16
      %v412 = vrot.slane %v410, 5
      %v413 = vsel %vm315, %v408, %v412
      %v415 = vshrl.u32 %v288, 16
      %v417 = vrot.slane %v415, 4
      %v418 = vshll.u32 %v288, 16
      %v420 = vrot.slane %v418, 5
      %v421 = vor.u32 %v417, %v420
      %v422 = vrot.slane %v421, 4
      %v424 = vshll.u32 %v312, 16
      %v426 = vrot.slane %v424, 5
      %v427 = vsel %vm315, %v422, %v426
      %s428 = scalar_lea.vmem %s260, 64
      %v429 = vld [vmem:[%s428] sm:$0xf]
      %v430 = vld [vmem:[%s428 + $0x4] sm:$0xf]
      %v431 = vld [vmem:[%s428 + $0x8] sm:$0xf]
      %v432 = vld [vmem:[%s428 + $0xc] sm:$0xf]
      %v433 = vld [vmem:[%s428 + $0x10] sm:$0xf]
      %v434 = vld [vmem:[%s428 + $0x14] sm:$0xf]
      %v435 = vld [vmem:[%s428 + $0x18] sm:$0xf]
      %v436 = vld [vmem:[%s428 + $0x1c] sm:$0xf]
      %v437 = vld [vmem:[%s428 + $0x20] sm:$0xf]
      %v438 = vld [vmem:[%s428 + $0x24] sm:$0xf]
      %v439 = vld [vmem:[%s428 + $0x28] sm:$0xf]
      %v440 = vld [vmem:[%s428 + $0x2c] sm:$0xf]
      %v441 = vld [vmem:[%s428 + $0x30] sm:$0xf]
      %v442 = vld [vmem:[%s428 + $0x34] sm:$0xf]
      %v443 = vld [vmem:[%s428 + $0x38] sm:$0xf]
      %v444 = vld [vmem:[%s428 + $0x3c] sm:$0xf]
      %v445 = vunpack.c.l.b16 %v329
      %v446 = vunpack.c.l.b16 %v343
      %v447 = vunpack.c.l.b16 %v357
      %v448 = vunpack.c.l.b16 %v371
      %v449 = vunpack.c.l.b16 %v385
      %v450 = vunpack.c.l.b16 %v399
      %v451 = vunpack.c.l.b16 %v413
      %v452 = vunpack.c.l.b16 %v427
      %v453 = vpack.c.b16 %v446, %v445
      %v454 = vpack.c.b16 %v448, %v447
      %v455 = vpack.c.b16 %v450, %v449
      %v456 = vpack.c.b16 %v452, %v451
      %v477 = vunpack.c.l.b16 %v429
      %v478 = vunpack.c.l.b16 %v430
      %v479 = vunpack.c.l.b16 %v431
      %v480 = vunpack.c.l.b16 %v432
      %v481 = vunpack.c.l.b16 %v433
      %v482 = vunpack.c.l.b16 %v434
      %v483 = vunpack.c.l.b16 %v435
      %v484 = vunpack.c.l.b16 %v436
      %v485 = vunpack.c.l.b16 %v437
      %v486 = vunpack.c.l.b16 %v438
      %v487 = vunpack.c.l.b16 %v439
      %v488 = vunpack.c.l.b16 %v440
      %v489 = vunpack.c.l.b16 %v441
      %v490 = vunpack.c.l.b16 %v442
      %v491 = vunpack.c.l.b16 %v443
      %v492 = vunpack.c.l.b16 %v444
      %v493 = vpack.c.b16 %v478, %v477
      %v494 = vpack.c.b16 %v480, %v479
      %v495 = vpack.c.b16 %v482, %v481
      %v496 = vpack.c.b16 %v484, %v483
      %v497 = vpack.c.b16 %v486, %v485
      %v498 = vpack.c.b16 %v488, %v487
      %v499 = vpack.c.b16 %v490, %v489
      %v500 = vpack.c.b16 %v492, %v491
      %509 = vmatprep.subr.bf16.mxu0 0
      %510 = vmatpush1.bf16.msra.mxu0 %v493
      %511 = vmatprep.subr.bf16.mxu0 0
      %512 = vmatpush1.bf16.msra.mxu0 %v494
      %513 = vmatprep.subr.bf16.mxu0 0
      %514 = vmatpush1.bf16.msra.mxu0 %v495
      %515 = vmatprep.subr.bf16.mxu0 0
      %516 = vmatpush1.bf16.msra.mxu0 %v496
      %517 = vmatprep.subr.bf16.mxu0 0
      %518 = vmatpush1.bf16.msra.mxu0 %v497
      %519 = vmatprep.subr.bf16.mxu0 0
      %520 = vmatpush1.bf16.msra.mxu0 %v498
      %521 = vmatprep.subr.bf16.mxu0 0
      %522 = vmatpush1.bf16.msra.mxu0 %v499
      %523 = vmatprep.subr.bf16.mxu0 0
      %524 = vmatpush1.bf16.msra.mxu0 %v500
      %525 = vmatprep.subr.bf16.mxu0 0
      %526 = vmatpush1.bf16.msra.mxu0 0
      %527 = vmatprep.subr.bf16.mxu0 0
      %528 = vmatpush1.bf16.msra.mxu0 0
      %529 = vmatprep.subr.bf16.mxu0 0
      %530 = vmatpush1.bf16.msra.mxu0 0
      %531 = vmatprep.subr.bf16.mxu0 0
      %532 = vmatpush1.bf16.msra.mxu0 0
      %533 = vmatprep.subr.bf16.mxu0 0
      %534 = vmatpush1.bf16.msra.mxu0 0
      %535 = vmatprep.subr.bf16.mxu0 0
      %536 = vmatpush1.bf16.msra.mxu0 0
      %537 = vmatprep.subr.bf16.mxu0 0
      %538 = vmatpush1.bf16.msra.mxu0 0
      %539 = vmatprep.subr.bf16.mxu0 0
      %540 = vmatpush1.bf16.msra.mxu0 0
      %541 = vmatprep.mubr.bf16.mxu0 0
      %542 = vmatmul.mubr.bf16.gmra.mrb[0].mxu0 %v453
      %v543 = vpop.f32.mrb[0].mxu0
      %v544 = vadd.f32 0.0, %v543
      %v545 = vpop.f32.mrb[0].mxu0
      %v546 = vpop.f32.mrb[0].mxu0
      %v547 = vadd.f32 0.0, %v546
      %v548 = vpop.f32.mrb[0].mxu0
      %549 = vmatprep.mubr.bf16.mxu0 0
      %550 = vmatmul.mubr.bf16.gmra.mrb[0].mxu0 %v454
      %v551 = vpop.f32.mrb[0].mxu0
      %v552 = vadd.f32 0.0, %v551
      %v553 = vpop.f32.mrb[0].mxu0
      %v554 = vpop.f32.mrb[0].mxu0
      %v555 = vadd.f32 0.0, %v554
      %v556 = vpop.f32.mrb[0].mxu0
      %557 = vmatprep.mubr.bf16.mxu0 0
      %558 = vmatmul.mubr.bf16.gmra.mrb[0].mxu0 %v455
      %v559 = vpop.f32.mrb[0].mxu0
      %v560 = vadd.f32 0.0, %v559
      %v561 = vpop.f32.mrb[0].mxu0
      %v562 = vpop.f32.mrb[0].mxu0
      %v563 = vadd.f32 0.0, %v562
      %v564 = vpop.f32.mrb[0].mxu0
      %565 = vmatprep.mubr.bf16.mxu0 0
      %566 = vmatmul.mubr.bf16.gmra.mrb[0].mxu0 %v456
      %v567 = vpop.f32.mrb[0].mxu0
      %v568 = vadd.f32 0.0, %v567
      %v569 = vpop.f32.mrb[0].mxu0
      %v570 = vpop.f32.mrb[0].mxu0
      %v571 = vadd.f32 0.0, %v570
      %v572 = vpop.f32.mrb[0].mxu0
      %573 = vdwg.mxu0
      %v582 = vunpack.c.l.b16 %v281
      %v583 = vunpack.c.l.b16 %v282
      %v584 = vunpack.c.l.b16 %v283
      %v585 = vunpack.c.l.b16 %v284
      %v586 = vunpack.c.l.b16 %v285
      %v587 = vunpack.c.l.b16 %v286
      %v588 = vunpack.c.l.b16 %v287
      %v589 = vunpack.c.l.b16 %v288
      %v590 = vpack.c.b16 %v583, %v582
      %v591 = vpack.c.b16 %v585, %v584
      %v592 = vpack.c.b16 %v587, %v586
      %v593 = vpack.c.b16 %v589, %v588
      %v614 = vunpack.c.l.b16 %v289
      %v615 = vunpack.c.l.b16 %v290
      %v616 = vunpack.c.l.b16 %v291
      %v617 = vunpack.c.l.b16 %v292
      %v618 = vunpack.c.l.b16 %v293
      %v619 = vunpack.c.l.b16 %v294
      %v620 = vunpack.c.l.b16 %v295
      %v621 = vunpack.c.l.b16 %v296
      %v622 = vunpack.c.l.b16 %v297
      %v623 = vunpack.c.l.b16 %v298
      %v624 = vunpack.c.l.b16 %v299
      %v625 = vunpack.c.l.b16 %v300
      %v626 = vunpack.c.l.b16 %v301
      %v627 = vunpack.c.l.b16 %v302
      %v628 = vunpack.c.l.b16 %v303
      %v629 = vunpack.c.l.b16 %v304
      %v630 = vpack.c.b16 %v615, %v614
      %v631 = vpack.c.b16 %v617, %v616
      %v632 = vpack.c.b16 %v619, %v618
      %v633 = vpack.c.b16 %v621, %v620
      %v634 = vpack.c.b16 %v623, %v622
      %v635 = vpack.c.b16 %v625, %v624
      %v636 = vpack.c.b16 %v627, %v626
      %v637 = vpack.c.b16 %v629, %v628
      %646 = vmatprep.subr.bf16.mxu0 0
      %647 = vmatpush1.bf16.msra.mxu0 %v630
      %648 = vmatprep.subr.bf16.mxu0 0
      %649 = vmatpush1.bf16.msra.mxu0 %v631
      %650 = vmatprep.subr.bf16.mxu0 0
      %651 = vmatpush1.bf16.msra.mxu0 %v632
      %652 = vmatprep.subr.bf16.mxu0 0
      %653 = vmatpush1.bf16.msra.mxu0 %v633
      %654 = vmatprep.subr.bf16.mxu0 0
      %655 = vmatpush1.bf16.msra.mxu0 %v634
      %656 = vmatprep.subr.bf16.mxu0 0
      %657 = vmatpush1.bf16.msra.mxu0 %v635
      %658 = vmatprep.subr.bf16.mxu0 0
      %659 = vmatpush1.bf16.msra.mxu0 %v636
      %660 = vmatprep.subr.bf16.mxu0 0
      %661 = vmatpush1.bf16.msra.mxu0 %v637
      %662 = vmatprep.subr.bf16.mxu0 0
      %663 = vmatpush1.bf16.msra.mxu0 0
      %664 = vmatprep.subr.bf16.mxu0 0
      %665 = vmatpush1.bf16.msra.mxu0 0
      %666 = vmatprep.subr.bf16.mxu0 0
      %667 = vmatpush1.bf16.msra.mxu0 0
      %668 = vmatprep.subr.bf16.mxu0 0
      %669 = vmatpush1.bf16.msra.mxu0 0
      %670 = vmatprep.subr.bf16.mxu0 0
      %671 = vmatpush1.bf16.msra.mxu0 0
      %672 = vmatprep.subr.bf16.mxu0 0
      %673 = vmatpush1.bf16.msra.mxu0 0
      %674 = vmatprep.subr.bf16.mxu0 0
      %675 = vmatpush1.bf16.msra.mxu0 0
      %676 = vmatprep.subr.bf16.mxu0 0
      %677 = vmatpush1.bf16.msra.mxu0 0
      %678 = vmatprep.mubr.bf16.mxu0 0
      %679 = vmatmul.mubr.bf16.gmra.mrb[0].mxu0 %v590
      %v680 = vpop.f32.mrb[0].mxu0
      %v681 = vadd.f32 %v544, %v680
      %v682 = vpop.f32.mrb[0].mxu0
      %v683 = vpop.f32.mrb[0].mxu0
      %v684 = vadd.f32 %v547, %v683
      %v685 = vpop.f32.mrb[0].mxu0
      %686 = vmatprep.mubr.bf16.mxu0 0
      %687 = vmatmul.mubr.bf16.gmra.mrb[0].mxu0 %v591
      %v688 = vpop.f32.mrb[0].mxu0
      %v689 = vadd.f32 %v552, %v688
      %v690 = vpop.f32.mrb[0].mxu0
      %v691 = vpop.f32.mrb[0].mxu0
      %v692 = vadd.f32 %v555, %v691
      %v693 = vpop.f32.mrb[0].mxu0
      %694 = vmatprep.mubr.bf16.mxu0 0
      %695 = vmatmul.mubr.bf16.gmra.mrb[0].mxu0 %v592
      %v696 = vpop.f32.mrb[0].mxu0
      %v697 = vadd.f32 %v560, %v696
      %v698 = vpop.f32.mrb[0].mxu0
      %v699 = vpop.f32.mrb[0].mxu0
      %v700 = vadd.f32 %v563, %v699
      %v701 = vpop.f32.mrb[0].mxu0
      %702 = vmatprep.mubr.bf16.mxu0 0
      %703 = vmatmul.mubr.bf16.gmra.mrb[0].mxu0 %v593
      %v704 = vpop.f32.mrb[0].mxu0
      %v705 = vadd.f32 %v568, %v704
      %v706 = vpop.f32.mrb[0].mxu0
      %v707 = vpop.f32.mrb[0].mxu0
      %v708 = vadd.f32 %v571, %v707
      %v709 = vpop.f32.mrb[0].mxu0
      %710 = vdwg.mxu0
      %v711 = vld [vmem:[%s256] sm:$0xe]
      %v712 = vld [vmem:[%s256 + $0x8] sm:$0xe]
      %v713 = vld [vmem:[%s256 + $0x10] sm:$0xe]
      %v714 = vld [vmem:[%s256 + $0x18] sm:$0xe]
      %v715 = vld [vmem:[%s256 + $0x20] sm:$0xe]
      %v716 = vld [vmem:[%s256 + $0x28] sm:$0xe]
      %v717 = vld [vmem:[%s256 + $0x30] sm:$0xe]
      %v718 = vld [vmem:[%s256 + $0x38] sm:$0xe]
      %vm735 = vcmask 1042432
      %vm736 = vcmask 1046532
      %vm737 = vmor %vm735, %vm736
      %v738 = vrot.slane %v711, 5
      %v739 = vrot.slane %v738, 4
      %v740 = vrot.slane %v305, 5
      %v741 = vsel %vm737, %v739, %v740
      %v742 = vrot.slane %v712, 5
      %v743 = vrot.slane %v742, 4
      %v744 = vrot.slane %v306, 5
      %v745 = vsel %vm737, %v743, %v744
      %v746 = vrot.slane %v713, 5
      %v747 = vrot.slane %v746, 4
      %v748 = vrot.slane %v307, 5
      %v749 = vsel %vm737, %v747, %v748
      %v750 = vrot.slane %v714, 5
      %v751 = vrot.slane %v750, 4
      %v752 = vrot.slane %v308, 5
      %v753 = vsel %vm737, %v751, %v752
      %v754 = vrot.slane %v715, 5
      %v755 = vrot.slane %v754, 4
      %v756 = vrot.slane %v309, 5
      %v757 = vsel %vm737, %v755, %v756
      %v758 = vrot.slane %v716, 5
      %v759 = vrot.slane %v758, 4
      %v760 = vrot.slane %v310, 5
      %v761 = vsel %vm737, %v759, %v760
      %v762 = vrot.slane %v717, 5
      %v763 = vrot.slane %v762, 4
      %v764 = vrot.slane %v311, 5
      %v765 = vsel %vm737, %v763, %v764
      %v766 = vrot.slane %v718, 5
      %v767 = vrot.slane %v766, 4
      %v768 = vrot.slane %v312, 5
      %v769 = vsel %vm737, %v767, %v768
      %s770 = scalar_lea.vmem %s260, 128
      %v771 = vld [vmem:[%s770] sm:$0xf]
      %v772 = vld [vmem:[%s770 + $0x4] sm:$0xf]
      %v773 = vld [vmem:[%s770 + $0x8] sm:$0xf]
      %v774 = vld [vmem:[%s770 + $0xc] sm:$0xf]
      %v775 = vld [vmem:[%s770 + $0x10] sm:$0xf]
      %v776 = vld [vmem:[%s770 + $0x14] sm:$0xf]
      %v777 = vld [vmem:[%s770 + $0x18] sm:$0xf]
      %v778 = vld [vmem:[%s770 + $0x1c] sm:$0xf]
      %v779 = vld [vmem:[%s770 + $0x20] sm:$0xf]
      %v780 = vld [vmem:[%s770 + $0x24] sm:$0xf]
      %v781 = vld [vmem:[%s770 + $0x28] sm:$0xf]
      %v782 = vld [vmem:[%s770 + $0x2c] sm:$0xf]
      %v783 = vld [vmem:[%s770 + $0x30] sm:$0xf]
      %v784 = vld [vmem:[%s770 + $0x34] sm:$0xf]
      %v785 = vld [vmem:[%s770 + $0x38] sm:$0xf]
      %v786 = vld [vmem:[%s770 + $0x3c] sm:$0xf]
      %v787 = vunpack.c.l.b16 %v741
      %v788 = vunpack.c.l.b16 %v745
      %v789 = vunpack.c.l.b16 %v749
      %v790 = vunpack.c.l.b16 %v753
      %v791 = vunpack.c.l.b16 %v757
      %v792 = vunpack.c.l.b16 %v761
      %v793 = vunpack.c.l.b16 %v765
      %v794 = vunpack.c.l.b16 %v769
      %v795 = vpack.c.b16 %v788, %v787
      %v796 = vpack.c.b16 %v790, %v789
      %v797 = vpack.c.b16 %v792, %v791
      %v798 = vpack.c.b16 %v794, %v793
      %v819 = vunpack.c.l.b16 %v771
      %v820 = vunpack.c.l.b16 %v772
      %v821 = vunpack.c.l.b16 %v773
      %v822 = vunpack.c.l.b16 %v774
      %v823 = vunpack.c.l.b16 %v775
      %v824 = vunpack.c.l.b16 %v776
      %v825 = vunpack.c.l.b16 %v777
      %v826 = vunpack.c.l.b16 %v778
      %v827 = vunpack.c.l.b16 %v779
      %v828 = vunpack.c.l.b16 %v780
      %v829 = vunpack.c.l.b16 %v781
      %v830 = vunpack.c.l.b16 %v782
      %v831 = vunpack.c.l.b16 %v783
      %v832 = vunpack.c.l.b16 %v784
      %v833 = vunpack.c.l.b16 %v785
      %v834 = vunpack.c.l.b16 %v786
      %v835 = vpack.c.b16 %v820, %v819
      %v836 = vpack.c.b16 %v822, %v821
      %v837 = vpack.c.b16 %v824, %v823
      %v838 = vpack.c.b16 %v826, %v825
      %v839 = vpack.c.b16 %v828, %v827
      %v840 = vpack.c.b16 %v830, %v829
      %v841 = vpack.c.b16 %v832, %v831
      %v842 = vpack.c.b16 %v834, %v833
      %851 = vmatprep.subr.bf16.mxu0 0
      %852 = vmatpush1.bf16.msra.mxu0 %v835
      %853 = vmatprep.subr.bf16.mxu0 0
      %854 = vmatpush1.bf16.msra.mxu0 %v836
      %855 = vmatprep.subr.bf16.mxu0 0
      %856 = vmatpush1.bf16.msra.mxu0 %v837
      %857 = vmatprep.subr.bf16.mxu0 0
      %858 = vmatpush1.bf16.msra.mxu0 %v838
      %859 = vmatprep.subr.bf16.mxu0 0
      %860 = vmatpush1.bf16.msra.mxu0 %v839
      %861 = vmatprep.subr.bf16.mxu0 0
      %862 = vmatpush1.bf16.msra.mxu0 %v840
      %863 = vmatprep.subr.bf16.mxu0 0
      %864 = vmatpush1.bf16.msra.mxu0 %v841
      %865 = vmatprep.subr.bf16.mxu0 0
      %866 = vmatpush1.bf16.msra.mxu0 %v842
      %867 = vmatprep.subr.bf16.mxu0 0
      %868 = vmatpush1.bf16.msra.mxu0 0
      %869 = vmatprep.subr.bf16.mxu0 0
      %870 = vmatpush1.bf16.msra.mxu0 0
      %871 = vmatprep.subr.bf16.mxu0 0
      %872 = vmatpush1.bf16.msra.mxu0 0
      %873 = vmatprep.subr.bf16.mxu0 0
      %874 = vmatpush1.bf16.msra.mxu0 0
      %875 = vmatprep.subr.bf16.mxu0 0
      %876 = vmatpush1.bf16.msra.mxu0 0
      %877 = vmatprep.subr.bf16.mxu0 0
      %878 = vmatpush1.bf16.msra.mxu0 0
      %879 = vmatprep.subr.bf16.mxu0 0
      %880 = vmatpush1.bf16.msra.mxu0 0
      %881 = vmatprep.subr.bf16.mxu0 0
      %882 = vmatpush1.bf16.msra.mxu0 0
      %883 = vmatprep.mubr.bf16.mxu0 0
      %884 = vmatmul.mubr.bf16.gmra.mrb[0].mxu0 %v795
      %v885 = vpop.f32.mrb[0].mxu0
      %v886 = vadd.f32 0.0, %v885
      %v887 = vpop.f32.mrb[0].mxu0
      %v888 = vpop.f32.mrb[0].mxu0
      %v889 = vadd.f32 0.0, %v888
      %v890 = vpop.f32.mrb[0].mxu0
      %891 = vmatprep.mubr.bf16.mxu0 0
      %892 = vmatmul.mubr.bf16.gmra.mrb[0].mxu0 %v796
      %v893 = vpop.f32.mrb[0].mxu0
      %v894 = vadd.f32 0.0, %v893
      %v895 = vpop.f32.mrb[0].mxu0
      %v896 = vpop.f32.mrb[0].mxu0
      %v897 = vadd.f32 0.0, %v896
      %v898 = vpop.f32.mrb[0].mxu0
      %899 = vmatprep.mubr.bf16.mxu0 0
      %900 = vmatmul.mubr.bf16.gmra.mrb[0].mxu0 %v797
      %v901 = vpop.f32.mrb[0].mxu0
      %v902 = vadd.f32 0.0, %v901
      %v903 = vpop.f32.mrb[0].mxu0
      %v904 = vpop.f32.mrb[0].mxu0
      %v905 = vadd.f32 0.0, %v904
      %v906 = vpop.f32.mrb[0].mxu0
      %907 = vmatprep.mubr.bf16.mxu0 0
      %908 = vmatmul.mubr.bf16.gmra.mrb[0].mxu0 %v798
      %v909 = vpop.f32.mrb[0].mxu0
      %v910 = vadd.f32 0.0, %v909
      %v911 = vpop.f32.mrb[0].mxu0
      %v912 = vpop.f32.mrb[0].mxu0
      %v913 = vadd.f32 0.0, %v912
      %v914 = vpop.f32.mrb[0].mxu0
      %915 = vdwg.mxu0
      %v916 = vadd.f32 %v681, %v886
      %v917 = vadd.f32 %v684, %v889
      %v918 = vadd.f32 %v689, %v894
      %v919 = vadd.f32 %v692, %v897
      %v920 = vadd.f32 %v697, %v902
      %v921 = vadd.f32 %v700, %v905
      %v922 = vadd.f32 %v705, %v910
      %v923 = vadd.f32 %v708, %v913
      %s924 = scalar_lea.vmem %s256, 8
      %v925 = vld [vmem:[%s924] sm:$0xf]
      %v926 = vld [vmem:[%s924 + $0x8] sm:$0xf]
      %v927 = vld [vmem:[%s924 + $0x10] sm:$0xf]
      %v928 = vld [vmem:[%s924 + $0x18] sm:$0xf]
      %v929 = vld [vmem:[%s924 + $0x20] sm:$0xf]
      %v930 = vld [vmem:[%s924 + $0x28] sm:$0xf]
      %v931 = vld [vmem:[%s924 + $0x30] sm:$0xf]
      %v932 = vld [vmem:[%s924 + $0x38] sm:$0xf]
      %s933 = scalar_lea.vmem %s260, 192
      %v934 = vld [vmem:[%s933] sm:$0xf]
      %v935 = vld [vmem:[%s933 + $0x4] sm:$0xf]
      %v936 = vld [vmem:[%s933 + $0x8] sm:$0xf]
      %v937 = vld [vmem:[%s933 + $0xc] sm:$0xf]
      %v938 = vld [vmem:[%s933 + $0x10] sm:$0xf]
      %v939 = vld [vmem:[%s933 + $0x14] sm:$0xf]
      %v940 = vld [vmem:[%s933 + $0x18] sm:$0xf]
      %v941 = vld [vmem:[%s933 + $0x1c] sm:$0xf]
      %v942 = vld [vmem:[%s933 + $0x20] sm:$0xf]
      %v943 = vld [vmem:[%s933 + $0x24] sm:$0xf]
      %v944 = vld [vmem:[%s933 + $0x28] sm:$0xf]
      %v945 = vld [vmem:[%s933 + $0x2c] sm:$0xf]
      %v946 = vld [vmem:[%s933 + $0x30] sm:$0xf]
      %v947 = vld [vmem:[%s933 + $0x34] sm:$0xf]
      %v948 = vld [vmem:[%s933 + $0x38] sm:$0xf]
      %v949 = vld [vmem:[%s933 + $0x3c] sm:$0xf]
      %v958 = vunpack.c.l.b16 %v925
      %v959 = vunpack.c.l.b16 %v926
      %v960 = vunpack.c.l.b16 %v927
      %v961 = vunpack.c.l.b16 %v928
      %v962 = vunpack.c.l.b16 %v929
      %v963 = vunpack.c.l.b16 %v930
      %v964 = vunpack.c.l.b16 %v931
      %v965 = vunpack.c.l.b16 %v932
      %v966 = vpack.c.b16 %v959, %v958
      %v967 = vpack.c.b16 %v961, %v960
      %v968 = vpack.c.b16 %v963, %v962
      %v969 = vpack.c.b16 %v965, %v964
      %v990 = vunpack.c.l.b16 %v934
      %v991 = vunpack.c.l.b16 %v935
      %v992 = vunpack.c.l.b16 %v936
      %v993 = vunpack.c.l.b16 %v937
      %v994 = vunpack.c.l.b16 %v938
      %v995 = vunpack.c.l.b16 %v939
      %v996 = vunpack.c.l.b16 %v940
      %v997 = vunpack.c.l.b16 %v941
      %v998 = vunpack.c.l.b16 %v942
      %v999 = vunpack.c.l.b16 %v943
      %v1000 = vunpack.c.l.b16 %v944
      %v1001 = vunpack.c.l.b16 %v945
      %v1002 = vunpack.c.l.b16 %v946
      %v1003 = vunpack.c.l.b16 %v947
      %v1004 = vunpack.c.l.b16 %v948
      %v1005 = vunpack.c.l.b16 %v949
      %v1006 = vpack.c.b16 %v991, %v990
      %v1007 = vpack.c.b16 %v993, %v992
      %v1008 = vpack.c.b16 %v995, %v994
      %v1009 = vpack.c.b16 %v997, %v996
      %v1010 = vpack.c.b16 %v999, %v998
      %v1011 = vpack.c.b16 %v1001, %v1000
      %v1012 = vpack.c.b16 %v1003, %v1002
      %v1013 = vpack.c.b16 %v1005, %v1004
      %1022 = vmatprep.subr.bf16.mxu0 0
      %1023 = vmatpush1.bf16.msra.mxu0 %v1006
      %1024 = vmatprep.subr.bf16.mxu0 0
      %1025 = vmatpush1.bf16.msra.mxu0 %v1007
      %1026 = vmatprep.subr.bf16.mxu0 0
      %1027 = vmatpush1.bf16.msra.mxu0 %v1008
      %1028 = vmatprep.subr.bf16.mxu0 0
      %1029 = vmatpush1.bf16.msra.mxu0 %v1009
      %1030 = vmatprep.subr.bf16.mxu0 0
      %1031 = vmatpush1.bf16.msra.mxu0 %v1010
      %1032 = vmatprep.subr.bf16.mxu0 0
      %1033 = vmatpush1.bf16.msra.mxu0 %v1011
      %1034 = vmatprep.subr.bf16.mxu0 0
      %1035 = vmatpush1.bf16.msra.mxu0 %v1012
      %1036 = vmatprep.subr.bf16.mxu0 0
      %1037 = vmatpush1.bf16.msra.mxu0 %v1013
      %1038 = vmatprep.subr.bf16.mxu0 0
      %1039 = vmatpush1.bf16.msra.mxu0 0
      %1040 = vmatprep.subr.bf16.mxu0 0
      %1041 = vmatpush1.bf16.msra.mxu0 0
      %1042 = vmatprep.subr.bf16.mxu0 0
      %1043 = vmatpush1.bf16.msra.mxu0 0
      %1044 = vmatprep.subr.bf16.mxu0 0
      %1045 = vmatpush1.bf16.msra.mxu0 0
      %1046 = vmatprep.subr.bf16.mxu0 0
      %1047 = vmatpush1.bf16.msra.mxu0 0
      %1048 = vmatprep.subr.bf16.mxu0 0
      %1049 = vmatpush1.bf16.msra.mxu0 0
      %1050 = vmatprep.subr.bf16.mxu0 0
      %1051 = vmatpush1.bf16.msra.mxu0 0
      %1052 = vmatprep.subr.bf16.mxu0 0
      %1053 = vmatpush1.bf16.msra.mxu0 0
      %1054 = vmatprep.mubr.bf16.mxu0 0
      %1055 = vmatmul.mubr.bf16.gmra.mrb[0].mxu0 %v966
      %v1056 = vpop.f32.mrb[0].mxu0
      %v1057 = vadd.f32 0.0, %v1056
      %v1058 = vpop.f32.mrb[0].mxu0
      %v1059 = vpop.f32.mrb[0].mxu0
      %v1060 = vadd.f32 0.0, %v1059
      %v1061 = vpop.f32.mrb[0].mxu0
      %1062 = vmatprep.mubr.bf16.mxu0 0
      %1063 = vmatmul.mubr.bf16.gmra.mrb[0].mxu0 %v967
      %v1064 = vpop.f32.mrb[0].mxu0
      %v1065 = vadd.f32 0.0, %v1064
      %v1066 = vpop.f32.mrb[0].mxu0
      %v1067 = vpop.f32.mrb[0].mxu0
      %v1068 = vadd.f32 0.0, %v1067
      %v1069 = vpop.f32.mrb[0].mxu0
      %1070 = vmatprep.mubr.bf16.mxu0 0
      %1071 = vmatmul.mubr.bf16.gmra.mrb[0].mxu0 %v968
      %v1072 = vpop.f32.mrb[0].mxu0
      %v1073 = vadd.f32 0.0, %v1072
      %v1074 = vpop.f32.mrb[0].mxu0
      %v1075 = vpop.f32.mrb[0].mxu0
      %v1076 = vadd.f32 0.0, %v1075
      %v1077 = vpop.f32.mrb[0].mxu0
      %1078 = vmatprep.mubr.bf16.mxu0 0
      %1079 = vmatmul.mubr.bf16.gmra.mrb[0].mxu0 %v969
      %v1080 = vpop.f32.mrb[0].mxu0
      %v1081 = vadd.f32 0.0, %v1080
      %v1082 = vpop.f32.mrb[0].mxu0
      %v1083 = vpop.f32.mrb[0].mxu0
      %v1084 = vadd.f32 0.0, %v1083
      %v1085 = vpop.f32.mrb[0].mxu0
      %1086 = vdwg.mxu0
      %v1087 = vadd.f32 %v916, %v1057
      %v1088 = vadd.f32 %v917, %v1060
      %v1089 = vadd.f32 %v918, %v1065
      %v1090 = vadd.f32 %v919, %v1068
      %v1091 = vadd.f32 %v920, %v1073
      %v1092 = vadd.f32 %v921, %v1076
      %v1093 = vadd.f32 %v922, %v1081
      %v1094 = vadd.f32 %v923, %v1084
      %v1095 = vld [vmem:[%s924] sm:$0xf]
      %v1096 = vld [vmem:[%s924 + $0x4] sm:$0x1]
      %v1097 = vld [vmem:[%s924 + $0x8] sm:$0xf]
      %v1098 = vld [vmem:[%s924 + $0xc] sm:$0x1]
      %v1099 = vld [vmem:[%s924 + $0x10] sm:$0xf]
      %v1100 = vld [vmem:[%s924 + $0x14] sm:$0x1]
      %v1101 = vld [vmem:[%s924 + $0x18] sm:$0xf]
      %v1102 = vld [vmem:[%s924 + $0x1c] sm:$0x1]
      %v1103 = vld [vmem:[%s924 + $0x20] sm:$0xf]
      %v1104 = vld [vmem:[%s924 + $0x24] sm:$0x1]
      %v1105 = vld [vmem:[%s924 + $0x28] sm:$0xf]
      %v1106 = vld [vmem:[%s924 + $0x2c] sm:$0x1]
      %v1107 = vld [vmem:[%s924 + $0x30] sm:$0xf]
      %v1108 = vld [vmem:[%s924 + $0x34] sm:$0x1]
      %v1109 = vld [vmem:[%s924 + $0x38] sm:$0xf]
      %v1110 = vld [vmem:[%s924 + $0x3c] sm:$0x1]
      %v1112 = vshrl.u32 %v1095, 16
      %v1114 = vrot.slane %v1112, 4
      %v1115 = vshll.u32 %v1095, 16
      %v1117 = vrot.slane %v1115, 5
      %v1118 = vor.u32 %v1114, %v1117
      %v1119 = vrot.slane %v1118, 4
      %v1121 = vshll.u32 %v1096, 16
      %v1123 = vrot.slane %v1121, 5
      %v1124 = vsel %vm315, %v1119, %v1123
      %v1126 = vshrl.u32 %v1097, 16
      %v1128 = vrot.slane %v1126, 4
      %v1129 = vshll.u32 %v1097, 16
      %v1131 = vrot.slane %v1129, 5
      %v1132 = vor.u32 %v1128, %v1131
      %v1133 = vrot.slane %v1132, 4
      %v1135 = vshll.u32 %v1098, 16
      %v1137 = vrot.slane %v1135, 5
      %v1138 = vsel %vm315, %v1133, %v1137
      %v1140 = vshrl.u32 %v1099, 16
      %v1142 = vrot.slane %v1140, 4
      %v1143 = vshll.u32 %v1099, 16
      %v1145 = vrot.slane %v1143, 5
      %v1146 = vor.u32 %v1142, %v1145
      %v1147 = vrot.slane %v1146, 4
      %v1149 = vshll.u32 %v1100, 16
      %v1151 = vrot.slane %v1149, 5
      %v1152 = vsel %vm315, %v1147, %v1151
      %v1154 = vshrl.u32 %v1101, 16
      %v1156 = vrot.slane %v1154, 4
      %v1157 = vshll.u32 %v1101, 16
      %v1159 = vrot.slane %v1157, 5
      %v1160 = vor.u32 %v1156, %v1159
      %v1161 = vrot.slane %v1160, 4
      %v1163 = vshll.u32 %v1102, 16
      %v1165 = vrot.slane %v1163, 5
      %v1166 = vsel %vm315, %v1161, %v1165
      %v1168 = vshrl.u32 %v1103, 16
      %v1170 = vrot.slane %v1168, 4
      %v1171 = vshll.u32 %v1103, 16
      %v1173 = vrot.slane %v1171, 5
      %v1174 = vor.u32 %v1170, %v1173
      %v1175 = vrot.slane %v1174, 4
      %v1177 = vshll.u32 %v1104, 16
      %v1179 = vrot.slane %v1177, 5
      %v1180 = vsel %vm315, %v1175, %v1179
      %v1182 = vshrl.u32 %v1105, 16
      %v1184 = vrot.slane %v1182, 4
      %v1185 = vshll.u32 %v1105, 16
      %v1187 = vrot.slane %v1185, 5
      %v1188 = vor.u32 %v1184, %v1187
      %v1189 = vrot.slane %v1188, 4
      %v1191 = vshll.u32 %v1106, 16
      %v1193 = vrot.slane %v1191, 5
      %v1194 = vsel %vm315, %v1189, %v1193
      %v1196 = vshrl.u32 %v1107, 16
      %v1198 = vrot.slane %v1196, 4
      %v1199 = vshll.u32 %v1107, 16
      %v1201 = vrot.slane %v1199, 5
      %v1202 = vor.u32 %v1198, %v1201
      %v1203 = vrot.slane %v1202, 4
      %v1205 = vshll.u32 %v1108, 16
      %v1207 = vrot.slane %v1205, 5
      %v1208 = vsel %vm315, %v1203, %v1207
      %v1210 = vshrl.u32 %v1109, 16
      %v1212 = vrot.slane %v1210, 4
      %v1213 = vshll.u32 %v1109, 16
      %v1215 = vrot.slane %v1213, 5
      %v1216 = vor.u32 %v1212, %v1215
      %v1217 = vrot.slane %v1216, 4
      %v1219 = vshll.u32 %v1110, 16
      %v1221 = vrot.slane %v1219, 5
      %v1222 = vsel %vm315, %v1217, %v1221
      %s1223 = scalar_lea.vmem %s260, 256
      %v1224 = vld [vmem:[%s1223] sm:$0xf]
      %v1225 = vld [vmem:[%s1223 + $0x4] sm:$0xf]
      %v1226 = vld [vmem:[%s1223 + $0x8] sm:$0xf]
      %v1227 = vld [vmem:[%s1223 + $0xc] sm:$0xf]
      %v1228 = vld [vmem:[%s1223 + $0x10] sm:$0xf]
      %v1229 = vld [vmem:[%s1223 + $0x14] sm:$0xf]
      %v1230 = vld [vmem:[%s1223 + $0x18] sm:$0xf]
      %v1231 = vld [vmem:[%s1223 + $0x1c] sm:$0xf]
      %v1232 = vld [vmem:[%s1223 + $0x20] sm:$0xf]
      %v1233 = vld [vmem:[%s1223 + $0x24] sm:$0xf]
      %v1234 = vld [vmem:[%s1223 + $0x28] sm:$0xf]
      %v1235 = vld [vmem:[%s1223 + $0x2c] sm:$0xf]
      %v1236 = vld [vmem:[%s1223 + $0x30] sm:$0xf]
      %v1237 = vld [vmem:[%s1223 + $0x34] sm:$0xf]
      %v1238 = vld [vmem:[%s1223 + $0x38] sm:$0xf]
      %v1239 = vld [vmem:[%s1223 + $0x3c] sm:$0xf]
      %v1240 = vunpack.c.l.b16 %v1124
      %v1241 = vunpack.c.l.b16 %v1138
      %v1242 = vunpack.c.l.b16 %v1152
      %v1243 = vunpack.c.l.b16 %v1166
      %v1244 = vunpack.c.l.b16 %v1180
      %v1245 = vunpack.c.l.b16 %v1194
      %v1246 = vunpack.c.l.b16 %v1208
      %v1247 = vunpack.c.l.b16 %v1222
      %v1248 = vpack.c.b16 %v1241, %v1240
      %v1249 = vpack.c.b16 %v1243, %v1242
      %v1250 = vpack.c.b16 %v1245, %v1244
      %v1251 = vpack.c.b16 %v1247, %v1246
      %v1272 = vunpack.c.l.b16 %v1224
      %v1273 = vunpack.c.l.b16 %v1225
      %v1274 = vunpack.c.l.b16 %v1226
      %v1275 = vunpack.c.l.b16 %v1227
      %v1276 = vunpack.c.l.b16 %v1228
      %v1277 = vunpack.c.l.b16 %v1229
      %v1278 = vunpack.c.l.b16 %v1230
      %v1279 = vunpack.c.l.b16 %v1231
      %v1280 = vunpack.c.l.b16 %v1232
      %v1281 = vunpack.c.l.b16 %v1233
      %v1282 = vunpack.c.l.b16 %v1234
      %v1283 = vunpack.c.l.b16 %v1235
      %v1284 = vunpack.c.l.b16 %v1236
      %v1285 = vunpack.c.l.b16 %v1237
      %v1286 = vunpack.c.l.b16 %v1238
      %v1287 = vunpack.c.l.b16 %v1239
      %v1288 = vpack.c.b16 %v1273, %v1272
      %v1289 = vpack.c.b16 %v1275, %v1274
      %v1290 = vpack.c.b16 %v1277, %v1276
      %v1291 = vpack.c.b16 %v1279, %v1278
      %v1292 = vpack.c.b16 %v1281, %v1280
      %v1293 = vpack.c.b16 %v1283, %v1282
      %v1294 = vpack.c.b16 %v1285, %v1284
      %v1295 = vpack.c.b16 %v1287, %v1286
      %1304 = vmatprep.subr.bf16.mxu0 0
      %1305 = vmatpush1.bf16.msra.mxu0 %v1288
      %1306 = vmatprep.subr.bf16.mxu0 0
      %1307 = vmatpush1.bf16.msra.mxu0 %v1289
      %1308 = vmatprep.subr.bf16.mxu0 0
      %1309 = vmatpush1.bf16.msra.mxu0 %v1290
      %1310 = vmatprep.subr.bf16.mxu0 0
      %1311 = vmatpush1.bf16.msra.mxu0 %v1291
      %1312 = vmatprep.subr.bf16.mxu0 0
      %1313 = vmatpush1.bf16.msra.mxu0 %v1292
      %1314 = vmatprep.subr.bf16.mxu0 0
      %1315 = vmatpush1.bf16.msra.mxu0 %v1293
      %1316 = vmatprep.subr.bf16.mxu0 0
      %1317 = vmatpush1.bf16.msra.mxu0 %v1294
      %1318 = vmatprep.subr.bf16.mxu0 0
      %1319 = vmatpush1.bf16.msra.mxu0 %v1295
      %1320 = vmatprep.subr.bf16.mxu0 0
      %1321 = vmatpush1.bf16.msra.mxu0 0
      %1322 = vmatprep.subr.bf16.mxu0 0
      %1323 = vmatpush1.bf16.msra.mxu0 0
      %1324 = vmatprep.subr.bf16.mxu0 0
      %1325 = vmatpush1.bf16.msra.mxu0 0
      %1326 = vmatprep.subr.bf16.mxu0 0
      %1327 = vmatpush1.bf16.msra.mxu0 0
      %1328 = vmatprep.subr.bf16.mxu0 0
      %1329 = vmatpush1.bf16.msra.mxu0 0
      %1330 = vmatprep.subr.bf16.mxu0 0
      %1331 = vmatpush1.bf16.msra.mxu0 0
      %1332 = vmatprep.subr.bf16.mxu0 0
      %1333 = vmatpush1.bf16.msra.mxu0 0
      %1334 = vmatprep.subr.bf16.mxu0 0
      %1335 = vmatpush1.bf16.msra.mxu0 0
      %1336 = vmatprep.mubr.bf16.mxu0 0
      %1337 = vmatmul.mubr.bf16.gmra.mrb[0].mxu0 %v1248
      %v1338 = vpop.f32.mrb[0].mxu0
      %v1339 = vadd.f32 0.0, %v1338
      %v1340 = vpop.f32.mrb[0].mxu0
      %v1341 = vpop.f32.mrb[0].mxu0
      %v1342 = vadd.f32 0.0, %v1341
      %v1343 = vpop.f32.mrb[0].mxu0
      %1344 = vmatprep.mubr.bf16.mxu0 0
      %1345 = vmatmul.mubr.bf16.gmra.mrb[0].mxu0 %v1249
      %v1346 = vpop.f32.mrb[0].mxu0
      %v1347 = vadd.f32 0.0, %v1346
      %v1348 = vpop.f32.mrb[0].mxu0
      %v1349 = vpop.f32.mrb[0].mxu0
      %v1350 = vadd.f32 0.0, %v1349
      %v1351 = vpop.f32.mrb[0].mxu0
      %1352 = vmatprep.mubr.bf16.mxu0 0
      %1353 = vmatmul.mubr.bf16.gmra.mrb[0].mxu0 %v1250
      %v1354 = vpop.f32.mrb[0].mxu0
      %v1355 = vadd.f32 0.0, %v1354
      %v1356 = vpop.f32.mrb[0].mxu0
      %v1357 = vpop.f32.mrb[0].mxu0
      %v1358 = vadd.f32 0.0, %v1357
      %v1359 = vpop.f32.mrb[0].mxu0
      %1360 = vmatprep.mubr.bf16.mxu0 0
      %1361 = vmatmul.mubr.bf16.gmra.mrb[0].mxu0 %v1251
      %v1362 = vpop.f32.mrb[0].mxu0
      %v1363 = vadd.f32 0.0, %v1362
      %v1364 = vpop.f32.mrb[0].mxu0
      %v1365 = vpop.f32.mrb[0].mxu0
      %v1366 = vadd.f32 0.0, %v1365
      %v1367 = vpop.f32.mrb[0].mxu0
      %1368 = vdwg.mxu0
      %v1369 = vadd.f32 %v1087, %v1339
      %v1370 = vadd.f32 %v1088, %v1342
      %v1371 = vadd.f32 %v1089, %v1347
      %v1372 = vadd.f32 %v1090, %v1350
      %v1373 = vadd.f32 %v1091, %v1355
      %v1374 = vadd.f32 %v1092, %v1358
      %v1375 = vadd.f32 %v1093, %v1363
      %v1376 = vadd.f32 %v1094, %v1366
      %v1377 = vld [vmem:[%s924] sm:$0xe]
      %v1378 = vld [vmem:[%s924 + $0x8] sm:$0xe]
      %v1379 = vld [vmem:[%s924 + $0x10] sm:$0xe]
      %v1380 = vld [vmem:[%s924 + $0x18] sm:$0xe]
      %v1381 = vld [vmem:[%s924 + $0x20] sm:$0xe]
      %v1382 = vld [vmem:[%s924 + $0x28] sm:$0xe]
      %v1383 = vld [vmem:[%s924 + $0x30] sm:$0xe]
      %v1384 = vld [vmem:[%s924 + $0x38] sm:$0xe]
      %v1401 = vrot.slane %v1377, 5
      %v1402 = vrot.slane %v1401, 4
      %v1403 = vrot.slane %v1096, 5
      %v1404 = vsel %vm737, %v1402, %v1403
      %v1405 = vrot.slane %v1378, 5
      %v1406 = vrot.slane %v1405, 4
      %v1407 = vrot.slane %v1098, 5
      %v1408 = vsel %vm737, %v1406, %v1407
      %v1409 = vrot.slane %v1379, 5
      %v1410 = vrot.slane %v1409, 4
      %v1411 = vrot.slane %v1100, 5
      %v1412 = vsel %vm737, %v1410, %v1411
      %v1413 = vrot.slane %v1380, 5
      %v1414 = vrot.slane %v1413, 4
      %v1415 = vrot.slane %v1102, 5
      %v1416 = vsel %vm737, %v1414, %v1415
      %v1417 = vrot.slane %v1381, 5
      %v1418 = vrot.slane %v1417, 4
      %v1419 = vrot.slane %v1104, 5
      %v1420 = vsel %vm737, %v1418, %v1419
      %v1421 = vrot.slane %v1382, 5
      %v1422 = vrot.slane %v1421, 4
      %v1423 = vrot.slane %v1106, 5
      %v1424 = vsel %vm737, %v1422, %v1423
      %v1425 = vrot.slane %v1383, 5
      %v1426 = vrot.slane %v1425, 4
      %v1427 = vrot.slane %v1108, 5
      %v1428 = vsel %vm737, %v1426, %v1427
      %v1429 = vrot.slane %v1384, 5
      %v1430 = vrot.slane %v1429, 4
      %v1431 = vrot.slane %v1110, 5
      %v1432 = vsel %vm737, %v1430, %v1431
      %s1433 = scalar_lea.vmem %s260, 320
      %v1434 = vld [vmem:[%s1433] sm:$0xf]
      %v1435 = vld [vmem:[%s1433 + $0x4] sm:$0xf]
      %v1436 = vld [vmem:[%s1433 + $0x8] sm:$0xf]
      %v1437 = vld [vmem:[%s1433 + $0xc] sm:$0xf]
      %v1438 = vld [vmem:[%s1433 + $0x10] sm:$0xf]
      %v1439 = vld [vmem:[%s1433 + $0x14] sm:$0xf]
      %v1440 = vld [vmem:[%s1433 + $0x18] sm:$0xf]
      %v1441 = vld [vmem:[%s1433 + $0x1c] sm:$0xf]
      %v1442 = vld [vmem:[%s1433 + $0x20] sm:$0xf]
      %v1443 = vld [vmem:[%s1433 + $0x24] sm:$0xf]
      %v1444 = vld [vmem:[%s1433 + $0x28] sm:$0xf]
      %v1445 = vld [vmem:[%s1433 + $0x2c] sm:$0xf]
      %v1446 = vld [vmem:[%s1433 + $0x30] sm:$0xf]
      %v1447 = vld [vmem:[%s1433 + $0x34] sm:$0xf]
      %v1448 = vld [vmem:[%s1433 + $0x38] sm:$0xf]
      %v1449 = vld [vmem:[%s1433 + $0x3c] sm:$0xf]
      %v1450 = vunpack.c.l.b16 %v1404
      %v1451 = vunpack.c.l.b16 %v1408
      %v1452 = vunpack.c.l.b16 %v1412
      %v1453 = vunpack.c.l.b16 %v1416
      %v1454 = vunpack.c.l.b16 %v1420
      %v1455 = vunpack.c.l.b16 %v1424
      %v1456 = vunpack.c.l.b16 %v1428
      %v1457 = vunpack.c.l.b16 %v1432
      %v1458 = vpack.c.b16 %v1451, %v1450
      %v1459 = vpack.c.b16 %v1453, %v1452
      %v1460 = vpack.c.b16 %v1455, %v1454
      %v1461 = vpack.c.b16 %v1457, %v1456
      %v1482 = vunpack.c.l.b16 %v1434
      %v1483 = vunpack.c.l.b16 %v1435
      %v1484 = vunpack.c.l.b16 %v1436
      %v1485 = vunpack.c.l.b16 %v1437
      %v1486 = vunpack.c.l.b16 %v1438
      %v1487 = vunpack.c.l.b16 %v1439
      %v1488 = vunpack.c.l.b16 %v1440
      %v1489 = vunpack.c.l.b16 %v1441
      %v1490 = vunpack.c.l.b16 %v1442
      %v1491 = vunpack.c.l.b16 %v1443
      %v1492 = vunpack.c.l.b16 %v1444
      %v1493 = vunpack.c.l.b16 %v1445
      %v1494 = vunpack.c.l.b16 %v1446
      %v1495 = vunpack.c.l.b16 %v1447
      %v1496 = vunpack.c.l.b16 %v1448
      %v1497 = vunpack.c.l.b16 %v1449
      %v1498 = vpack.c.b16 %v1483, %v1482
      %v1499 = vpack.c.b16 %v1485, %v1484
      %v1500 = vpack.c.b16 %v1487, %v1486
      %v1501 = vpack.c.b16 %v1489, %v1488
      %v1502 = vpack.c.b16 %v1491, %v1490
      %v1503 = vpack.c.b16 %v1493, %v1492
      %v1504 = vpack.c.b16 %v1495, %v1494
      %v1505 = vpack.c.b16 %v1497, %v1496
      %1514 = vmatprep.subr.bf16.mxu0 0
      %1515 = vmatpush1.bf16.msra.mxu0 %v1498
      %1516 = vmatprep.subr.bf16.mxu0 0
      %1517 = vmatpush1.bf16.msra.mxu0 %v1499
      %1518 = vmatprep.subr.bf16.mxu0 0
      %1519 = vmatpush1.bf16.msra.mxu0 %v1500
      %1520 = vmatprep.subr.bf16.mxu0 0
      %1521 = vmatpush1.bf16.msra.mxu0 %v1501
      %1522 = vmatprep.subr.bf16.mxu0 0
      %1523 = vmatpush1.bf16.msra.mxu0 %v1502
      %1524 = vmatprep.subr.bf16.mxu0 0
      %1525 = vmatpush1.bf16.msra.mxu0 %v1503
      %1526 = vmatprep.subr.bf16.mxu0 0
      %1527 = vmatpush1.bf16.msra.mxu0 %v1504
      %1528 = vmatprep.subr.bf16.mxu0 0
      %1529 = vmatpush1.bf16.msra.mxu0 %v1505
      %1530 = vmatprep.subr.bf16.mxu0 0
      %1531 = vmatpush1.bf16.msra.mxu0 0
      %1532 = vmatprep.subr.bf16.mxu0 0
      %1533 = vmatpush1.bf16.msra.mxu0 0
      %1534 = vmatprep.subr.bf16.mxu0 0
      %1535 = vmatpush1.bf16.msra.mxu0 0
      %1536 = vmatprep.subr.bf16.mxu0 0
      %1537 = vmatpush1.bf16.msra.mxu0 0
      %1538 = vmatprep.subr.bf16.mxu0 0
      %1539 = vmatpush1.bf16.msra.mxu0 0
      %1540 = vmatprep.subr.bf16.mxu0 0
      %1541 = vmatpush1.bf16.msra.mxu0 0
      %1542 = vmatprep.subr.bf16.mxu0 0
      %1543 = vmatpush1.bf16.msra.mxu0 0
      %1544 = vmatprep.subr.bf16.mxu0 0
      %1545 = vmatpush1.bf16.msra.mxu0 0
      %1546 = vmatprep.mubr.bf16.mxu0 0
      %1547 = vmatmul.mubr.bf16.gmra.mrb[0].mxu0 %v1458
      %v1548 = vpop.f32.mrb[0].mxu0
      %v1549 = vadd.f32 0.0, %v1548
      %v1550 = vpop.f32.mrb[0].mxu0
      %v1551 = vpop.f32.mrb[0].mxu0
      %v1552 = vadd.f32 0.0, %v1551
      %v1553 = vpop.f32.mrb[0].mxu0
      %1554 = vmatprep.mubr.bf16.mxu0 0
      %1555 = vmatmul.mubr.bf16.gmra.mrb[0].mxu0 %v1459
      %v1556 = vpop.f32.mrb[0].mxu0
      %v1557 = vadd.f32 0.0, %v1556
      %v1558 = vpop.f32.mrb[0].mxu0
      %v1559 = vpop.f32.mrb[0].mxu0
      %v1560 = vadd.f32 0.0, %v1559
      %v1561 = vpop.f32.mrb[0].mxu0
      %1562 = vmatprep.mubr.bf16.mxu0 0
      %1563 = vmatmul.mubr.bf16.gmra.mrb[0].mxu0 %v1460
      %v1564 = vpop.f32.mrb[0].mxu0
      %v1565 = vadd.f32 0.0, %v1564
      %v1566 = vpop.f32.mrb[0].mxu0
      %v1567 = vpop.f32.mrb[0].mxu0
      %v1568 = vadd.f32 0.0, %v1567
      %v1569 = vpop.f32.mrb[0].mxu0
      %1570 = vmatprep.mubr.bf16.mxu0 0
      %1571 = vmatmul.mubr.bf16.gmra.mrb[0].mxu0 %v1461
      %v1572 = vpop.f32.mrb[0].mxu0
      %v1573 = vadd.f32 0.0, %v1572
      %v1574 = vpop.f32.mrb[0].mxu0
      %v1575 = vpop.f32.mrb[0].mxu0
      %v1576 = vadd.f32 0.0, %v1575
      %v1577 = vpop.f32.mrb[0].mxu0
      %1578 = vdwg.mxu0
      %v1579 = vadd.f32 %v1369, %v1549
      %v1580 = vadd.f32 %v1370, %v1552
      %v1581 = vadd.f32 %v1371, %v1557
      %v1582 = vadd.f32 %v1372, %v1560
      %v1583 = vadd.f32 %v1373, %v1565
      %v1584 = vadd.f32 %v1374, %v1568
      %v1585 = vadd.f32 %v1375, %v1573
      %v1586 = vadd.f32 %v1376, %v1576
      %s1587 = scalar_lea.vmem %s256, 16
      %v1588 = vld [vmem:[%s1587] sm:$0xf]
      %v1589 = vld [vmem:[%s1587 + $0x8] sm:$0xf]
      %v1590 = vld [vmem:[%s1587 + $0x10] sm:$0xf]
      %v1591 = vld [vmem:[%s1587 + $0x18] sm:$0xf]
      %v1592 = vld [vmem:[%s1587 + $0x20] sm:$0xf]
      %v1593 = vld [vmem:[%s1587 + $0x28] sm:$0xf]
      %v1594 = vld [vmem:[%s1587 + $0x30] sm:$0xf]
      %v1595 = vld [vmem:[%s1587 + $0x38] sm:$0xf]
      %s1596 = scalar_lea.vmem %s260, 384
      %v1597 = vld [vmem:[%s1596] sm:$0xf]
      %v1598 = vld [vmem:[%s1596 + $0x4] sm:$0xf]
      %v1599 = vld [vmem:[%s1596 + $0x8] sm:$0xf]
      %v1600 = vld [vmem:[%s1596 + $0xc] sm:$0xf]
      %v1601 = vld [vmem:[%s1596 + $0x10] sm:$0xf]
      %v1602 = vld [vmem:[%s1596 + $0x14] sm:$0xf]
      %v1603 = vld [vmem:[%s1596 + $0x18] sm:$0xf]
      %v1604 = vld [vmem:[%s1596 + $0x1c] sm:$0xf]
      %v1605 = vld [vmem:[%s1596 + $0x20] sm:$0xf]
      %v1606 = vld [vmem:[%s1596 + $0x24] sm:$0xf]
      %v1607 = vld [vmem:[%s1596 + $0x28] sm:$0xf]
      %v1608 = vld [vmem:[%s1596 + $0x2c] sm:$0xf]
      %v1609 = vld [vmem:[%s1596 + $0x30] sm:$0xf]
      %v1610 = vld [vmem:[%s1596 + $0x34] sm:$0xf]
      %v1611 = vld [vmem:[%s1596 + $0x38] sm:$0xf]
      %v1612 = vld [vmem:[%s1596 + $0x3c] sm:$0xf]
      %v1621 = vunpack.c.l.b16 %v1588
      %v1622 = vunpack.c.l.b16 %v1589
      %v1623 = vunpack.c.l.b16 %v1590
      %v1624 = vunpack.c.l.b16 %v1591
      %v1625 = vunpack.c.l.b16 %v1592
      %v1626 = vunpack.c.l.b16 %v1593
      %v1627 = vunpack.c.l.b16 %v1594
      %v1628 = vunpack.c.l.b16 %v1595
      %v1629 = vpack.c.b16 %v1622, %v1621
      %v1630 = vpack.c.b16 %v1624, %v1623
      %v1631 = vpack.c.b16 %v1626, %v1625
      %v1632 = vpack.c.b16 %v1628, %v1627
      %v1653 = vunpack.c.l.b16 %v1597
      %v1654 = vunpack.c.l.b16 %v1598
      %v1655 = vunpack.c.l.b16 %v1599
      %v1656 = vunpack.c.l.b16 %v1600
      %v1657 = vunpack.c.l.b16 %v1601
      %v1658 = vunpack.c.l.b16 %v1602
      %v1659 = vunpack.c.l.b16 %v1603
      %v1660 = vunpack.c.l.b16 %v1604
      %v1661 = vunpack.c.l.b16 %v1605
      %v1662 = vunpack.c.l.b16 %v1606
      %v1663 = vunpack.c.l.b16 %v1607
      %v1664 = vunpack.c.l.b16 %v1608
      %v1665 = vunpack.c.l.b16 %v1609
      %v1666 = vunpack.c.l.b16 %v1610
      %v1667 = vunpack.c.l.b16 %v1611
      %v1668 = vunpack.c.l.b16 %v1612
      %v1669 = vpack.c.b16 %v1654, %v1653
      %v1670 = vpack.c.b16 %v1656, %v1655
      %v1671 = vpack.c.b16 %v1658, %v1657
      %v1672 = vpack.c.b16 %v1660, %v1659
      %v1673 = vpack.c.b16 %v1662, %v1661
      %v1674 = vpack.c.b16 %v1664, %v1663
      %v1675 = vpack.c.b16 %v1666, %v1665
      %v1676 = vpack.c.b16 %v1668, %v1667
      %1685 = vmatprep.subr.bf16.mxu0 0
      %1686 = vmatpush1.bf16.msra.mxu0 %v1669
      %1687 = vmatprep.subr.bf16.mxu0 0
      %1688 = vmatpush1.bf16.msra.mxu0 %v1670
      %1689 = vmatprep.subr.bf16.mxu0 0
      %1690 = vmatpush1.bf16.msra.mxu0 %v1671
      %1691 = vmatprep.subr.bf16.mxu0 0
      %1692 = vmatpush1.bf16.msra.mxu0 %v1672
      %1693 = vmatprep.subr.bf16.mxu0 0
      %1694 = vmatpush1.bf16.msra.mxu0 %v1673
      %1695 = vmatprep.subr.bf16.mxu0 0
      %1696 = vmatpush1.bf16.msra.mxu0 %v1674
      %1697 = vmatprep.subr.bf16.mxu0 0
      %1698 = vmatpush1.bf16.msra.mxu0 %v1675
      %1699 = vmatprep.subr.bf16.mxu0 0
      %1700 = vmatpush1.bf16.msra.mxu0 %v1676
      %1701 = vmatprep.subr.bf16.mxu0 0
      %1702 = vmatpush1.bf16.msra.mxu0 0
      %1703 = vmatprep.subr.bf16.mxu0 0
      %1704 = vmatpush1.bf16.msra.mxu0 0
      %1705 = vmatprep.subr.bf16.mxu0 0
      %1706 = vmatpush1.bf16.msra.mxu0 0
      %1707 = vmatprep.subr.bf16.mxu0 0
      %1708 = vmatpush1.bf16.msra.mxu0 0
      %1709 = vmatprep.subr.bf16.mxu0 0
      %1710 = vmatpush1.bf16.msra.mxu0 0
      %1711 = vmatprep.subr.bf16.mxu0 0
      %1712 = vmatpush1.bf16.msra.mxu0 0
      %1713 = vmatprep.subr.bf16.mxu0 0
      %1714 = vmatpush1.bf16.msra.mxu0 0
      %1715 = vmatprep.subr.bf16.mxu0 0
      %1716 = vmatpush1.bf16.msra.mxu0 0
      %1717 = vmatprep.mubr.bf16.mxu0 0
      %1718 = vmatmul.mubr.bf16.gmra.mrb[0].mxu0 %v1629
      %v1719 = vpop.f32.mrb[0].mxu0
      %v1720 = vadd.f32 0.0, %v1719
      %v1721 = vpop.f32.mrb[0].mxu0
      %v1722 = vpop.f32.mrb[0].mxu0
      %v1723 = vadd.f32 0.0, %v1722
      %v1724 = vpop.f32.mrb[0].mxu0
      %1725 = vmatprep.mubr.bf16.mxu0 0
      %1726 = vmatmul.mubr.bf16.gmra.mrb[0].mxu0 %v1630
      %v1727 = vpop.f32.mrb[0].mxu0
      %v1728 = vadd.f32 0.0, %v1727
      %v1729 = vpop.f32.mrb[0].mxu0
      %v1730 = vpop.f32.mrb[0].mxu0
      %v1731 = vadd.f32 0.0, %v1730
      %v1732 = vpop.f32.mrb[0].mxu0
      %1733 = vmatprep.mubr.bf16.mxu0 0
      %1734 = vmatmul.mubr.bf16.gmra.mrb[0].mxu0 %v1631
      %v1735 = vpop.f32.mrb[0].mxu0
      %v1736 = vadd.f32 0.0, %v1735
      %v1737 = vpop.f32.mrb[0].mxu0
      %v1738 = vpop.f32.mrb[0].mxu0
      %v1739 = vadd.f32 0.0, %v1738
      %v1740 = vpop.f32.mrb[0].mxu0
      %1741 = vmatprep.mubr.bf16.mxu0 0
      %1742 = vmatmul.mubr.bf16.gmra.mrb[0].mxu0 %v1632
      %v1743 = vpop.f32.mrb[0].mxu0
      %v1744 = vadd.f32 0.0, %v1743
      %v1745 = vpop.f32.mrb[0].mxu0
      %v1746 = vpop.f32.mrb[0].mxu0
      %v1747 = vadd.f32 0.0, %v1746
      %v1748 = vpop.f32.mrb[0].mxu0
      %1749 = vdwg.mxu0
      %v1750 = vadd.f32 %v1579, %v1720
      %v1751 = vadd.f32 %v1580, %v1723
      %v1752 = vadd.f32 %v1581, %v1728
      %v1753 = vadd.f32 %v1582, %v1731
      %v1754 = vadd.f32 %v1583, %v1736
      %v1755 = vadd.f32 %v1584, %v1739
      %v1756 = vadd.f32 %v1585, %v1744
      %v1757 = vadd.f32 %v1586, %v1747
      %v1758 = vld [vmem:[%s1587] sm:$0xf]
      %v1759 = vld [vmem:[%s1587 + $0x4] sm:$0x1]
      %v1760 = vld [vmem:[%s1587 + $0x8] sm:$0xf]
      %v1761 = vld [vmem:[%s1587 + $0xc] sm:$0x1]
      %v1762 = vld [vmem:[%s1587 + $0x10] sm:$0xf]
      %v1763 = vld [vmem:[%s1587 + $0x14] sm:$0x1]
      %v1764 = vld [vmem:[%s1587 + $0x18] sm:$0xf]
      %v1765 = vld [vmem:[%s1587 + $0x1c] sm:$0x1]
      %v1766 = vld [vmem:[%s1587 + $0x20] sm:$0xf]
      %v1767 = vld [vmem:[%s1587 + $0x24] sm:$0x1]
      %v1768 = vld [vmem:[%s1587 + $0x28] sm:$0xf]
      %v1769 = vld [vmem:[%s1587 + $0x2c] sm:$0x1]
      %v1770 = vld [vmem:[%s1587 + $0x30] sm:$0xf]
      %v1771 = vld [vmem:[%s1587 + $0x34] sm:$0x1]
      %v1772 = vld [vmem:[%s1587 + $0x38] sm:$0xf]
      %v1773 = vld [vmem:[%s1587 + $0x3c] sm:$0x1]
      %v1775 = vshrl.u32 %v1758, 16
      %v1777 = vrot.slane %v1775, 4
      %v1778 = vshll.u32 %v1758, 16
      %v1780 = vrot.slane %v1778, 5
      %v1781 = vor.u32 %v1777, %v1780
      %v1782 = vrot.slane %v1781, 4
      %v1784 = vshll.u32 %v1759, 16
      %v1786 = vrot.slane %v1784, 5
      %v1787 = vsel %vm315, %v1782, %v1786
      %v1789 = vshrl.u32 %v1760, 16
      %v1791 = vrot.slane %v1789, 4
      %v1792 = vshll.u32 %v1760, 16
      %v1794 = vrot.slane %v1792, 5
      %v1795 = vor.u32 %v1791, %v1794
      %v1796 = vrot.slane %v1795, 4
      %v1798 = vshll.u32 %v1761, 16
      %v1800 = vrot.slane %v1798, 5
      %v1801 = vsel %vm315, %v1796, %v1800
      %v1803 = vshrl.u32 %v1762, 16
      %v1805 = vrot.slane %v1803, 4
      %v1806 = vshll.u32 %v1762, 16
      %v1808 = vrot.slane %v1806, 5
      %v1809 = vor.u32 %v1805, %v1808
      %v1810 = vrot.slane %v1809, 4
      %v1812 = vshll.u32 %v1763, 16
      %v1814 = vrot.slane %v1812, 5
      %v1815 = vsel %vm315, %v1810, %v1814
      %v1817 = vshrl.u32 %v1764, 16
      %v1819 = vrot.slane %v1817, 4
      %v1820 = vshll.u32 %v1764, 16
      %v1822 = vrot.slane %v1820, 5
      %v1823 = vor.u32 %v1819, %v1822
      %v1824 = vrot.slane %v1823, 4
      %v1826 = vshll.u32 %v1765, 16
      %v1828 = vrot.slane %v1826, 5
      %v1829 = vsel %vm315, %v1824, %v1828
      %v1831 = vshrl.u32 %v1766, 16
      %v1833 = vrot.slane %v1831, 4
      %v1834 = vshll.u32 %v1766, 16
      %v1836 = vrot.slane %v1834, 5
      %v1837 = vor.u32 %v1833, %v1836
      %v1838 = vrot.slane %v1837, 4
      %v1840 = vshll.u32 %v1767, 16
      %v1842 = vrot.slane %v1840, 5
      %v1843 = vsel %vm315, %v1838, %v1842
      %v1845 = vshrl.u32 %v1768, 16
      %v1847 = vrot.slane %v1845, 4
      %v1848 = vshll.u32 %v1768, 16
      %v1850 = vrot.slane %v1848, 5
      %v1851 = vor.u32 %v1847, %v1850
      %v1852 = vrot.slane %v1851, 4
      %v1854 = vshll.u32 %v1769, 16
      %v1856 = vrot.slane %v1854, 5
      %v1857 = vsel %vm315, %v1852, %v1856
      %v1859 = vshrl.u32 %v1770, 16
      %v1861 = vrot.slane %v1859, 4
      %v1862 = vshll.u32 %v1770, 16
      %v1864 = vrot.slane %v1862, 5
      %v1865 = vor.u32 %v1861, %v1864
      %v1866 = vrot.slane %v1865, 4
      %v1868 = vshll.u32 %v1771, 16
      %v1870 = vrot.slane %v1868, 5
      %v1871 = vsel %vm315, %v1866, %v1870
      %v1873 = vshrl.u32 %v1772, 16
      %v1875 = vrot.slane %v1873, 4
      %v1876 = vshll.u32 %v1772, 16
      %v1878 = vrot.slane %v1876, 5
      %v1879 = vor.u32 %v1875, %v1878
      %v1880 = vrot.slane %v1879, 4
      %v1882 = vshll.u32 %v1773, 16
      %v1884 = vrot.slane %v1882, 5
      %v1885 = vsel %vm315, %v1880, %v1884
      %s1886 = scalar_lea.vmem %s260, 448
      %v1887 = vld [vmem:[%s1886] sm:$0xf]
      %v1888 = vld [vmem:[%s1886 + $0x4] sm:$0xf]
      %v1889 = vld [vmem:[%s1886 + $0x8] sm:$0xf]
      %v1890 = vld [vmem:[%s1886 + $0xc] sm:$0xf]
      %v1891 = vld [vmem:[%s1886 + $0x10] sm:$0xf]
      %v1892 = vld [vmem:[%s1886 + $0x14] sm:$0xf]
      %v1893 = vld [vmem:[%s1886 + $0x18] sm:$0xf]
      %v1894 = vld [vmem:[%s1886 + $0x1c] sm:$0xf]
      %v1895 = vld [vmem:[%s1886 + $0x20] sm:$0xf]
      %v1896 = vld [vmem:[%s1886 + $0x24] sm:$0xf]
      %v1897 = vld [vmem:[%s1886 + $0x28] sm:$0xf]
      %v1898 = vld [vmem:[%s1886 + $0x2c] sm:$0xf]
      %v1899 = vld [vmem:[%s1886 + $0x30] sm:$0xf]
      %v1900 = vld [vmem:[%s1886 + $0x34] sm:$0xf]
      %v1901 = vld [vmem:[%s1886 + $0x38] sm:$0xf]
      %v1902 = vld [vmem:[%s1886 + $0x3c] sm:$0xf]
      %v1903 = vunpack.c.l.b16 %v1787
      %v1904 = vunpack.c.l.b16 %v1801
      %v1905 = vunpack.c.l.b16 %v1815
      %v1906 = vunpack.c.l.b16 %v1829
      %v1907 = vunpack.c.l.b16 %v1843
      %v1908 = vunpack.c.l.b16 %v1857
      %v1909 = vunpack.c.l.b16 %v1871
      %v1910 = vunpack.c.l.b16 %v1885
      %v1911 = vpack.c.b16 %v1904, %v1903
      %v1912 = vpack.c.b16 %v1906, %v1905
      %v1913 = vpack.c.b16 %v1908, %v1907
      %v1914 = vpack.c.b16 %v1910, %v1909
      %v1935 = vunpack.c.l.b16 %v1887
      %v1936 = vunpack.c.l.b16 %v1888
      %v1937 = vunpack.c.l.b16 %v1889
      %v1938 = vunpack.c.l.b16 %v1890
      %v1939 = vunpack.c.l.b16 %v1891
      %v1940 = vunpack.c.l.b16 %v1892
      %v1941 = vunpack.c.l.b16 %v1893
      %v1942 = vunpack.c.l.b16 %v1894
      %v1943 = vunpack.c.l.b16 %v1895
      %v1944 = vunpack.c.l.b16 %v1896
      %v1945 = vunpack.c.l.b16 %v1897
      %v1946 = vunpack.c.l.b16 %v1898
      %v1947 = vunpack.c.l.b16 %v1899
      %v1948 = vunpack.c.l.b16 %v1900
      %v1949 = vunpack.c.l.b16 %v1901
      %v1950 = vunpack.c.l.b16 %v1902
      %v1951 = vpack.c.b16 %v1936, %v1935
      %v1952 = vpack.c.b16 %v1938, %v1937
      %v1953 = vpack.c.b16 %v1940, %v1939
      %v1954 = vpack.c.b16 %v1942, %v1941
      %v1955 = vpack.c.b16 %v1944, %v1943
      %v1956 = vpack.c.b16 %v1946, %v1945
      %v1957 = vpack.c.b16 %v1948, %v1947
      %v1958 = vpack.c.b16 %v1950, %v1949
      %1967 = vmatprep.subr.bf16.mxu0 0
      %1968 = vmatpush1.bf16.msra.mxu0 %v1951
      %1969 = vmatprep.subr.bf16.mxu0 0
      %1970 = vmatpush1.bf16.msra.mxu0 %v1952
      %1971 = vmatprep.subr.bf16.mxu0 0
      %1972 = vmatpush1.bf16.msra.mxu0 %v1953
      %1973 = vmatprep.subr.bf16.mxu0 0
      %1974 = vmatpush1.bf16.msra.mxu0 %v1954
      %1975 = vmatprep.subr.bf16.mxu0 0
      %1976 = vmatpush1.bf16.msra.mxu0 %v1955
      %1977 = vmatprep.subr.bf16.mxu0 0
      %1978 = vmatpush1.bf16.msra.mxu0 %v1956
      %1979 = vmatprep.subr.bf16.mxu0 0
      %1980 = vmatpush1.bf16.msra.mxu0 %v1957
      %1981 = vmatprep.subr.bf16.mxu0 0
      %1982 = vmatpush1.bf16.msra.mxu0 %v1958
      %1983 = vmatprep.subr.bf16.mxu0 0
      %1984 = vmatpush1.bf16.msra.mxu0 0
      %1985 = vmatprep.subr.bf16.mxu0 0
      %1986 = vmatpush1.bf16.msra.mxu0 0
      %1987 = vmatprep.subr.bf16.mxu0 0
      %1988 = vmatpush1.bf16.msra.mxu0 0
      %1989 = vmatprep.subr.bf16.mxu0 0
      %1990 = vmatpush1.bf16.msra.mxu0 0
      %1991 = vmatprep.subr.bf16.mxu0 0
      %1992 = vmatpush1.bf16.msra.mxu0 0
      %1993 = vmatprep.subr.bf16.mxu0 0
      %1994 = vmatpush1.bf16.msra.mxu0 0
      %1995 = vmatprep.subr.bf16.mxu0 0
      %1996 = vmatpush1.bf16.msra.mxu0 0
      %1997 = vmatprep.subr.bf16.mxu0 0
      %1998 = vmatpush1.bf16.msra.mxu0 0
      %1999 = vmatprep.mubr.bf16.mxu0 0
      %2000 = vmatmul.mubr.bf16.gmra.mrb[0].mxu0 %v1911
      %v2001 = vpop.f32.mrb[0].mxu0
      %v2002 = vadd.f32 0.0, %v2001
      %v2003 = vpop.f32.mrb[0].mxu0
      %v2004 = vpop.f32.mrb[0].mxu0
      %v2005 = vadd.f32 0.0, %v2004
      %v2006 = vpop.f32.mrb[0].mxu0
      %2007 = vmatprep.mubr.bf16.mxu0 0
      %2008 = vmatmul.mubr.bf16.gmra.mrb[0].mxu0 %v1912
      %v2009 = vpop.f32.mrb[0].mxu0
      %v2010 = vadd.f32 0.0, %v2009
      %v2011 = vpop.f32.mrb[0].mxu0
      %v2012 = vpop.f32.mrb[0].mxu0
      %v2013 = vadd.f32 0.0, %v2012
      %v2014 = vpop.f32.mrb[0].mxu0
      %2015 = vmatprep.mubr.bf16.mxu0 0
      %2016 = vmatmul.mubr.bf16.gmra.mrb[0].mxu0 %v1913
      %v2017 = vpop.f32.mrb[0].mxu0
      %v2018 = vadd.f32 0.0, %v2017
      %v2019 = vpop.f32.mrb[0].mxu0
      %v2020 = vpop.f32.mrb[0].mxu0
      %v2021 = vadd.f32 0.0, %v2020
      %v2022 = vpop.f32.mrb[0].mxu0
      %2023 = vmatprep.mubr.bf16.mxu0 0
      %2024 = vmatmul.mubr.bf16.gmra.mrb[0].mxu0 %v1914
      %v2025 = vpop.f32.mrb[0].mxu0
      %v2026 = vadd.f32 0.0, %v2025
      %v2027 = vpop.f32.mrb[0].mxu0
      %v2028 = vpop.f32.mrb[0].mxu0
      %v2029 = vadd.f32 0.0, %v2028
      %v2030 = vpop.f32.mrb[0].mxu0
      %2031 = vdwg.mxu0
      %v2032 = vadd.f32 %v1750, %v2002
      %v2033 = vadd.f32 %v1751, %v2005
      %v2034 = vadd.f32 %v1752, %v2010
      %v2035 = vadd.f32 %v1753, %v2013
      %v2036 = vadd.f32 %v1754, %v2018
      %v2037 = vadd.f32 %v1755, %v2021
      %v2038 = vadd.f32 %v1756, %v2026
      %v2039 = vadd.f32 %v1757, %v2029
      %v2040 = vld [vmem:[%s1587] sm:$0xe]
      %v2041 = vld [vmem:[%s1587 + $0x8] sm:$0xe]
      %v2042 = vld [vmem:[%s1587 + $0x10] sm:$0xe]
      %v2043 = vld [vmem:[%s1587 + $0x18] sm:$0xe]
      %v2044 = vld [vmem:[%s1587 + $0x20] sm:$0xe]
      %v2045 = vld [vmem:[%s1587 + $0x28] sm:$0xe]
      %v2046 = vld [vmem:[%s1587 + $0x30] sm:$0xe]
      %v2047 = vld [vmem:[%s1587 + $0x38] sm:$0xe]
      %v2064 = vrot.slane %v2040, 5
      %v2065 = vrot.slane %v2064, 4
      %v2066 = vrot.slane %v1759, 5
      %v2067 = vsel %vm737, %v2065, %v2066
      %v2068 = vrot.slane %v2041, 5
      %v2069 = vrot.slane %v2068, 4
      %v2070 = vrot.slane %v1761, 5
      %v2071 = vsel %vm737, %v2069, %v2070
      %v2072 = vrot.slane %v2042, 5
      %v2073 = vrot.slane %v2072, 4
      %v2074 = vrot.slane %v1763, 5
      %v2075 = vsel %vm737, %v2073, %v2074
      %v2076 = vrot.slane %v2043, 5
      %v2077 = vrot.slane %v2076, 4
      %v2078 = vrot.slane %v1765, 5
      %v2079 = vsel %vm737, %v2077, %v2078
      %v2080 = vrot.slane %v2044, 5
      %v2081 = vrot.slane %v2080, 4
      %v2082 = vrot.slane %v1767, 5
      %v2083 = vsel %vm737, %v2081, %v2082
      %v2084 = vrot.slane %v2045, 5
      %v2085 = vrot.slane %v2084, 4
      %v2086 = vrot.slane %v1769, 5
      %v2087 = vsel %vm737, %v2085, %v2086
      %v2088 = vrot.slane %v2046, 5
      %v2089 = vrot.slane %v2088, 4
      %v2090 = vrot.slane %v1771, 5
      %v2091 = vsel %vm737, %v2089, %v2090
      %v2092 = vrot.slane %v2047, 5
      %v2093 = vrot.slane %v2092, 4
      %v2094 = vrot.slane %v1773, 5
      %v2095 = vsel %vm737, %v2093, %v2094
      %s2096 = scalar_lea.vmem %s260, 512
      %v2097 = vld [vmem:[%s2096] sm:$0xf]
      %v2098 = vld [vmem:[%s2096 + $0x4] sm:$0xf]
      %v2099 = vld [vmem:[%s2096 + $0x8] sm:$0xf]
      %v2100 = vld [vmem:[%s2096 + $0xc] sm:$0xf]
      %v2101 = vld [vmem:[%s2096 + $0x10] sm:$0xf]
      %v2102 = vld [vmem:[%s2096 + $0x14] sm:$0xf]
      %v2103 = vld [vmem:[%s2096 + $0x18] sm:$0xf]
      %v2104 = vld [vmem:[%s2096 + $0x1c] sm:$0xf]
      %v2105 = vld [vmem:[%s2096 + $0x20] sm:$0xf]
      %v2106 = vld [vmem:[%s2096 + $0x24] sm:$0xf]
      %v2107 = vld [vmem:[%s2096 + $0x28] sm:$0xf]
      %v2108 = vld [vmem:[%s2096 + $0x2c] sm:$0xf]
      %v2109 = vld [vmem:[%s2096 + $0x30] sm:$0xf]
      %v2110 = vld [vmem:[%s2096 + $0x34] sm:$0xf]
      %v2111 = vld [vmem:[%s2096 + $0x38] sm:$0xf]
      %v2112 = vld [vmem:[%s2096 + $0x3c] sm:$0xf]
      %v2113 = vunpack.c.l.b16 %v2067
      %v2114 = vunpack.c.l.b16 %v2071
      %v2115 = vunpack.c.l.b16 %v2075
      %v2116 = vunpack.c.l.b16 %v2079
      %v2117 = vunpack.c.l.b16 %v2083
      %v2118 = vunpack.c.l.b16 %v2087
      %v2119 = vunpack.c.l.b16 %v2091
      %v2120 = vunpack.c.l.b16 %v2095
      %v2121 = vpack.c.b16 %v2114, %v2113
      %v2122 = vpack.c.b16 %v2116, %v2115
      %v2123 = vpack.c.b16 %v2118, %v2117
      %v2124 = vpack.c.b16 %v2120, %v2119
      %v2145 = vunpack.c.l.b16 %v2097
      %v2146 = vunpack.c.l.b16 %v2098
      %v2147 = vunpack.c.l.b16 %v2099
      %v2148 = vunpack.c.l.b16 %v2100
      %v2149 = vunpack.c.l.b16 %v2101
      %v2150 = vunpack.c.l.b16 %v2102
      %v2151 = vunpack.c.l.b16 %v2103
      %v2152 = vunpack.c.l.b16 %v2104
      %v2153 = vunpack.c.l.b16 %v2105
      %v2154 = vunpack.c.l.b16 %v2106
      %v2155 = vunpack.c.l.b16 %v2107
      %v2156 = vunpack.c.l.b16 %v2108
      %v2157 = vunpack.c.l.b16 %v2109
      %v2158 = vunpack.c.l.b16 %v2110
      %v2159 = vunpack.c.l.b16 %v2111
      %v2160 = vunpack.c.l.b16 %v2112
      %v2161 = vpack.c.b16 %v2146, %v2145
      %v2162 = vpack.c.b16 %v2148, %v2147
      %v2163 = vpack.c.b16 %v2150, %v2149
      %v2164 = vpack.c.b16 %v2152, %v2151
      %v2165 = vpack.c.b16 %v2154, %v2153
      %v2166 = vpack.c.b16 %v2156, %v2155
      %v2167 = vpack.c.b16 %v2158, %v2157
      %v2168 = vpack.c.b16 %v2160, %v2159
      %2177 = vmatprep.subr.bf16.mxu0 0
      %2178 = vmatpush1.bf16.msra.mxu0 %v2161
      %2179 = vmatprep.subr.bf16.mxu0 0
      %2180 = vmatpush1.bf16.msra.mxu0 %v2162
      %2181 = vmatprep.subr.bf16.mxu0 0
      %2182 = vmatpush1.bf16.msra.mxu0 %v2163
      %2183 = vmatprep.subr.bf16.mxu0 0
      %2184 = vmatpush1.bf16.msra.mxu0 %v2164
      %2185 = vmatprep.subr.bf16.mxu0 0
      %2186 = vmatpush1.bf16.msra.mxu0 %v2165
      %2187 = vmatprep.subr.bf16.mxu0 0
      %2188 = vmatpush1.bf16.msra.mxu0 %v2166
      %2189 = vmatprep.subr.bf16.mxu0 0
      %2190 = vmatpush1.bf16.msra.mxu0 %v2167
      %2191 = vmatprep.subr.bf16.mxu0 0
      %2192 = vmatpush1.bf16.msra.mxu0 %v2168
      %2193 = vmatprep.subr.bf16.mxu0 0
      %2194 = vmatpush1.bf16.msra.mxu0 0
      %2195 = vmatprep.subr.bf16.mxu0 0
      %2196 = vmatpush1.bf16.msra.mxu0 0
      %2197 = vmatprep.subr.bf16.mxu0 0
      %2198 = vmatpush1.bf16.msra.mxu0 0
      %2199 = vmatprep.subr.bf16.mxu0 0
      %2200 = vmatpush1.bf16.msra.mxu0 0
      %2201 = vmatprep.subr.bf16.mxu0 0
      %2202 = vmatpush1.bf16.msra.mxu0 0
      %2203 = vmatprep.subr.bf16.mxu0 0
      %2204 = vmatpush1.bf16.msra.mxu0 0
      %2205 = vmatprep.subr.bf16.mxu0 0
      %2206 = vmatpush1.bf16.msra.mxu0 0
      %2207 = vmatprep.subr.bf16.mxu0 0
      %2208 = vmatpush1.bf16.msra.mxu0 0
      %2209 = vmatprep.mubr.bf16.mxu0 0
      %2210 = vmatmul.mubr.bf16.gmra.mrb[0].mxu0 %v2121
      %v2211 = vpop.f32.mrb[0].mxu0
      %v2212 = vadd.f32 0.0, %v2211
      %v2213 = vpop.f32.mrb[0].mxu0
      %v2214 = vpop.f32.mrb[0].mxu0
      %v2215 = vadd.f32 0.0, %v2214
      %v2216 = vpop.f32.mrb[0].mxu0
      %2217 = vmatprep.mubr.bf16.mxu0 0
      %2218 = vmatmul.mubr.bf16.gmra.mrb[0].mxu0 %v2122
      %v2219 = vpop.f32.mrb[0].mxu0
      %v2220 = vadd.f32 0.0, %v2219
      %v2221 = vpop.f32.mrb[0].mxu0
      %v2222 = vpop.f32.mrb[0].mxu0
      %v2223 = vadd.f32 0.0, %v2222
      %v2224 = vpop.f32.mrb[0].mxu0
      %2225 = vmatprep.mubr.bf16.mxu0 0
      %2226 = vmatmul.mubr.bf16.gmra.mrb[0].mxu0 %v2123
      %v2227 = vpop.f32.mrb[0].mxu0
      %v2228 = vadd.f32 0.0, %v2227
      %v2229 = vpop.f32.mrb[0].mxu0
      %v2230 = vpop.f32.mrb[0].mxu0
      %v2231 = vadd.f32 0.0, %v2230
      %v2232 = vpop.f32.mrb[0].mxu0
      %2233 = vmatprep.mubr.bf16.mxu0 0
      %2234 = vmatmul.mubr.bf16.gmra.mrb[0].mxu0 %v2124
      %v2235 = vpop.f32.mrb[0].mxu0
      %v2236 = vadd.f32 0.0, %v2235
      %v2237 = vpop.f32.mrb[0].mxu0
      %v2238 = vpop.f32.mrb[0].mxu0
      %v2239 = vadd.f32 0.0, %v2238
      %v2240 = vpop.f32.mrb[0].mxu0
      %2241 = vdwg.mxu0
      %v2242 = vadd.f32 %v2032, %v2212
      %v2243 = vadd.f32 %v2033, %v2215
      %v2244 = vadd.f32 %v2034, %v2220
      %v2245 = vadd.f32 %v2035, %v2223
      %v2246 = vadd.f32 %v2036, %v2228
      %v2247 = vadd.f32 %v2037, %v2231
      %v2248 = vadd.f32 %v2038, %v2236
      %v2249 = vadd.f32 %v2039, %v2239
      %v2250 = vld [vmem:[%s263] sm:$0x1]
      %v2252 = vlaneseq
      %v2253 = vshrl.u32 %v2252, 7
      %v2254 = vsub.s32 0, %v2253
      %v2255 = vrot.slane %v2250, %v2254
      %v2257 = vadd.f32 %v2242, %v2255
      %v2258 = vadd.f32 %v2243, %v2255
      %v2259 = vadd.f32 %v2244, %v2255
      %v2260 = vadd.f32 %v2245, %v2255
      %v2261 = vadd.f32 %v2246, %v2255
      %v2262 = vadd.f32 %v2247, %v2255
      %v2263 = vadd.f32 %v2248, %v2255
      %v2264 = vadd.f32 %v2249, %v2255
      %v2265 = vld [vmem:[%s271] sm:$0xf]
      %v2266 = vld [vmem:[%s271 + $0x4] sm:$0xf]
      %v2267 = vld [vmem:[%s271 + $0x8] sm:$0xf]
      %v2268 = vld [vmem:[%s271 + $0xc] sm:$0xf]
      %v2269 = vld [vmem:[%s271 + $0x10] sm:$0xf]
      %v2270 = vld [vmem:[%s271 + $0x14] sm:$0xf]
      %v2271 = vld [vmem:[%s271 + $0x18] sm:$0xf]
      %v2272 = vld [vmem:[%s271 + $0x1c] sm:$0xf]
      %v2273 = vunpack.c.l.bf16 %v2265
      %v2274 = vunpack.c.l.bf16 %v2266
      %v2275 = vunpack.c.l.bf16 %v2267
      %v2276 = vunpack.c.l.bf16 %v2268
      %v2277 = vunpack.c.l.bf16 %v2269
      %v2278 = vunpack.c.l.bf16 %v2270
      %v2279 = vunpack.c.l.bf16 %v2271
      %v2280 = vunpack.c.l.bf16 %v2272
      %v2281 = vadd.f32 %v2257, %v2273
      %v2282 = vadd.f32 %v2258, %v2274
      %v2283 = vadd.f32 %v2259, %v2275
      %v2284 = vadd.f32 %v2260, %v2276
      %v2285 = vadd.f32 %v2261, %v2277
      %v2286 = vadd.f32 %v2262, %v2278
      %v2287 = vadd.f32 %v2263, %v2279
      %v2288 = vadd.f32 %v2264, %v2280
      %v2289 = vmax.f32 %v2281, 0.0
      %v2290 = vmax.f32 %v2282, 0.0
      %v2291 = vmax.f32 %v2283, 0.0
      %v2292 = vmax.f32 %v2284, 0.0
      %v2293 = vmax.f32 %v2285, 0.0
      %v2294 = vmax.f32 %v2286, 0.0
      %v2295 = vmax.f32 %v2287, 0.0
      %v2296 = vmax.f32 %v2288, 0.0
      %2297 = vst [vmem:[%s279] sm:$0xff] %v2289
      %2298 = vst [vmem:[%s279 + $0x8] sm:$0xff] %v2290
      %2299 = vst [vmem:[%s279 + $0x10] sm:$0xff] %v2291
      %2300 = vst [vmem:[%s279 + $0x18] sm:$0xff] %v2292
      %2301 = vst [vmem:[%s279 + $0x20] sm:$0xff] %v2293
      %2302 = vst [vmem:[%s279 + $0x28] sm:$0xff] %v2294
      %2303 = vst [vmem:[%s279 + $0x30] sm:$0xff] %v2295
      %2304 = vst [vmem:[%s279 + $0x38] sm:$0xff] %v2296
      %p2305 = scmp.lt.s32.totalorder %s19, 1
      %s2306 = scalar_select %p2305, %s19, 1
      %p2307 = scmp.lt.s32.totalorder %s20, 0
      %s2308 = scalar_select %p2307, %s20, 0
      %s2309 = smul.addr %s2306, 8
      %s2310 = sadd.s32 %s2308, %s2309
      %s2311 = smul.addr %s2310, 8
      %s2312 = scalar_lea.vmem %s4, %s2311
      // Predicated region
      $region37: #{basic_block_forward.5} parent=35 // pred_check
        %p2313 = pneg %p153
      $region38: #{basic_block_forward.5} parent=35 // pred_check_branch
        %2315 = sbr.rel (%p2313) target = $region40
      $region39: #{basic_block_forward.5} parent=35 // pred_region
        _
      $region40: #{basic_block_forward.5} parent=35 // pred_fallthru
        _
    $region36: #{basic_block_forward.5} parent=5 // pred_fallthru
      _
    %p2316 = scmp.le.s32.totalorder 2, %s10
    // Predicated region
    $region41: #{basic_block_forward.5} parent=5 // pred_check
      %p2317 = pneg %p2316
    $region42: #{basic_block_forward.5} parent=5 // pred_check_branch
      %2319 = sbr.rel (%p2317) target = $region44
    $region43: #{basic_block_forward.5} parent=5 // pred_region
      %s2320 = ssub.s32 %s10, 2
      // Predicated region
      $region45: #{basic_block_forward.5} parent=43 // pred_check
        %p2321 = pneg %p159
      $region46: #{basic_block_forward.5} parent=43 // pred_check_branch
        %2323 = sbr.rel (%p2321) target = $region48
      $region47: #{basic_block_forward.5} parent=43 // pred_region
        %p2324 = scmp.lt.s32.totalorder %s21, 1
        %s2325 = scalar_select %p2324, %s21, 1
        %p2326 = scmp.lt.s32.totalorder %s22, 0
        %s2327 = scalar_select %p2326, %s22, 0
        %s2328 = smul.addr %s2325, 8
        %s2329 = sadd.s32 %s2327, %s2328
        %s2330 = smul.addr %s2329, 8
        %s2331 = scalar_lea.vmem %s4, %s2330
      $region48: #{basic_block_forward.5} parent=43 // pred_fallthru
        _
    $region44: #{basic_block_forward.5} parent=5 // pred_fallthru
      _
  $region6: #{basic_block_forward.5} parent=0 // loop_footer
    %s14 = sadd.s32 1, %s10
  $region7: #{basic_block_forward.5} parent=0 // loop_footer_branch
    %9 = sbr.rel target = $region3
  $region8: #{basic_block_forward.5} parent=0 // loop_exit
    _

</llo_original>
